<compile_context>
chip_gen: v7x
topology: tpu7x:2x2x1
jax: 0.10.0
libtpu: 0.0.40
codegen_flags: <defaults>
</compile_context>

<pallas_src>
import functools

import jax
import jax.numpy as jnp
import numpy as np
from jax import lax
from jax.experimental import pallas as pl
from jax.experimental.pallas import tpu as pltpu

LANE = 128


def _round_up(x, m):
    return (x + m - 1) // m * m


def _bottleneck_kernel(x_ref, w1_ref, w2_ref, w3_ref,
                       s1_ref, b1_ref, s2_ref, b2_ref, s3_ref, b3_ref,
                       o_ref, *, H, W):
    M = H * W

    x = x_ref[0]                                        # (M, Cp) f32, lane-dense

    # ---- conv1 (1x1) + bn1 + relu : one bf16 MXU matmul, f32 accumulate ----
    y1 = jnp.dot(x.astype(jnp.bfloat16), w1_ref[...],
                 preferred_element_type=jnp.float32)    # (M, Pp)
    y1 = jnp.maximum(y1 * s1_ref[...] + b1_ref[...], 0.0)

    # ---- conv2 (3x3, stride 1, pad 1) + bn2 + relu ----
    # im2col in registers: 8 XLU rolls of the flattened activation + border
    # masks, concatenated along the lane axis -> one (M, 9*Pp)x(9*Pp, Pp)
    # bf16 matmul.  tap (dy, dx) holds y1[i+dy, j+dx] (zero outside the image).
    Pp = y1.shape[1]
    ri = lax.broadcasted_iota(jnp.int32, (H, W, Pp), 0).reshape(M, Pp)
    ci = lax.broadcasted_iota(jnp.int32, (H, W, Pp), 1).reshape(M, Pp)
    taps = []
    for dy in (-1, 0, 1):
        row_ok = jnp.logical_and(ri + dy >= 0, ri + dy <= H - 1)
        for dx in (-1, 0, 1):
            col_ok = jnp.logical_and(ci + dx >= 0, ci + dx <= W - 1)
            shift = (-(dy * W + dx)) % M
            t = pltpu.roll(y1, shift, axis=0) if shift else y1
            taps.append(jnp.where(jnp.logical_and(row_ok, col_ok), t, 0.0))
    patches = jnp.concatenate(taps, axis=-1).astype(jnp.bfloat16)   # (M, 9*Pp)
    y2 = jnp.dot(patches, w2_ref[...], preferred_element_type=jnp.float32)
    y2 = jnp.maximum(y2 * s2_ref[...] + b2_ref[...], 0.0)

    # ---- conv3 (1x1) + bn3, residual add (downsample=None), relu ----
    y3 = jnp.dot(y2.astype(jnp.bfloat16), w3_ref[...],
                 preferred_element_type=jnp.float32)    # (M, Cp)
    y3 = y3 * s3_ref[...] + b3_ref[...]
    o_ref[0] = jnp.maximum(y3 + x, 0.0).astype(o_ref.dtype)


def bottleneck_pallas(x_nhwc, kp):
    N, H, W, Cin = x_nhwc.shape
    Cp, Pp = kp["w1"].shape            # padded channel dims (multiples of 128)
    Cop = kp["w3"].shape[1]
    assert Cop == Cp, "downsample=None requires inplanes == planes * 4"
    M = H * W

    # Wrapper-side layout plumbing: pad channels to lane multiples and flatten
    # spatial dims so the kernel sees clean lane-dense (M, C) slabs.
    x_pad = jnp.pad(x_nhwc, ((0, 0), (0, 0), (0, 0), (0, Cp - Cin)))
    x2d = x_pad.reshape(N, M, Cp)

    params = [kp["w1"], kp["w2"], kp["w3"],
              kp["s1"], kp["b1"], kp["s2"], kp["b2"], kp["s3"], kp["b3"]]

    in_specs = [pl.BlockSpec((1, M, Cp), lambda n: (n, 0, 0))]
    in_specs += [pl.BlockSpec(a.shape, lambda n, nd=a.ndim: (0,) * nd)
                 for a in params]

    flops = 2 * N * M * (Cp * Pp + 9 * Pp * Pp + Pp * Cop)
    bytes_accessed = (2 * N * M * Cp * 4
                      + sum(int(a.size) * a.dtype.itemsize for a in params))

    kernel = functools.partial(_bottleneck_kernel, H=H, W=W)
    out2d = pl.pallas_call(
        kernel,
        out_shape=jax.ShapeDtypeStruct((N, M, Cp), x_nhwc.dtype),
        grid_spec=pltpu.PrefetchScalarGridSpec(
            num_scalar_prefetch=0,
            grid=(N,),
            in_specs=in_specs,
            out_specs=pl.BlockSpec((1, M, Cp), lambda n: (n, 0, 0)),
        ),
        compiler_params=pltpu.CompilerParams(
            dimension_semantics=("parallel",)),
        cost_estimate=pl.CostEstimate(flops=flops, transcendentals=0,
                                      bytes_accessed=bytes_accessed),
    )(x2d, *params)

    return out2d.reshape(N, H, W, Cp)[..., :Cin]


def init_params(key, inplanes, planes):
    """Deterministic synthetic parameters matching the PyTorch module shapes."""
    exp = 4
    keys = jax.random.split(key, 6)

    def conv_w(k, shape):            # torch conv weight layout: (O, I, kh, kw)
        fan_in = shape[1] * shape[2] * shape[3]
        return jax.random.normal(k, shape, jnp.float32) / np.sqrt(fan_in)

    def bn(k, c):
        k1, k2, k3, k4 = jax.random.split(k, 4)
        gamma = 1.0 + 0.1 * jax.random.normal(k1, (c,), jnp.float32)
        beta = 0.1 * jax.random.normal(k2, (c,), jnp.float32)
        mean = 0.1 * jax.random.normal(k3, (c,), jnp.float32)
        var = 1.0 + 0.1 * jax.random.uniform(k4, (c,), jnp.float32)
        return gamma, beta, mean, var

    return dict(
        w1=conv_w(keys[0], (planes, inplanes, 1, 1)),
        w2=conv_w(keys[1], (planes, planes, 3, 3)),
        w3=conv_w(keys[2], (planes * exp, planes, 1, 1)),
        bn1=bn(keys[3], planes),
        bn2=bn(keys[4], planes),
        bn3=bn(keys[5], planes * exp),
    )


def fold_and_pad_params(raw, eps=1e-5):
    """Fold eval-mode BN into scale/bias; reshape + lane-pad conv weights.

    Weights become bf16 matmul operands; padding channels carry zero weights
    and zero scale/bias so results are bit-identical to the unpadded math.
    """
    def fold(bn):
        g, b, m, v = bn
        s = g / jnp.sqrt(v + eps)
        return s, b - m * s

    P = raw["w2"].shape[0]
    Cin = raw["w1"].shape[1]
    Cout = raw["w3"].shape[0]
    Cp, Pp, Cop = _round_up(Cin, LANE), _round_up(P, LANE), _round_up(Cout, LANE)

    def pad2(a, r, c):
        return jnp.pad(a, ((0, r - a.shape[0]), (0, c - a.shape[1])))

    s1, b1 = fold(raw["bn1"])
    s2, b2 = fold(raw["bn2"])
    s3, b3 = fold(raw["bn3"])

    w1 = pad2(raw["w1"][:, :, 0, 0].T, Cp, Pp).astype(jnp.bfloat16)      # (Cp, Pp)
    w2_hwio = jnp.transpose(raw["w2"], (2, 3, 1, 0))                     # (3,3,Pi,Po)
    w2 = jnp.pad(w2_hwio, ((0, 0), (0, 0), (0, Pp - P), (0, Pp - P)))
    w2 = w2.reshape(9 * Pp, Pp).astype(jnp.bfloat16)                     # (9*Pp, Pp)
    w3 = pad2(raw["w3"][:, :, 0, 0].T, Pp, Cop).astype(jnp.bfloat16)     # (Pp, Cop)

    def padv(v, n):
        return jnp.pad(v, (0, n - v.shape[0]))[None, :].astype(jnp.float32)

    return dict(w1=w1, w2=w2, w3=w3,
                s1=padv(s1, Pp), b1=padv(b1, Pp),
                s2=padv(s2, Pp), b2=padv(b2, Pp),
                s3=padv(s3, Cop), b3=padv(b3, Cop))


def bottleneck_ref_nhwc(x, raw, eps=1e-5):
    """Pure-JAX f32 reference (same eval-mode BN semantics)."""
    def conv(x, w_oihw, pad):
        w = jnp.transpose(w_oihw, (2, 3, 1, 0))  # HWIO
        return lax.conv_general_dilated(
            x, w, window_strides=(1, 1),
            padding=[(pad, pad), (pad, pad)],
            dimension_numbers=("NHWC", "HWIO", "NHWC"))

    def bn(x, p):
        g, b, m, v = p
        return (x - m) * g / jnp.sqrt(v + eps) + b

    out = jax.nn.relu(bn(conv(x, raw["w1"], 0), raw["bn1"]))
    out = jax.nn.relu(bn(conv(out, raw["w2"], 1), raw["bn2"]))
    out = bn(conv(out, raw["w3"], 0), raw["bn3"])
    return jax.nn.relu(out + x)


if __name__ == "__main__":
    inplanes, planes = 16, 4        # expansion=4 -> output channels == inplanes
    N, H, W = 2, 16, 16

    key = jax.random.PRNGKey(0)
    kx, kp = jax.random.split(key)
    x_nchw = jax.random.normal(kx, (N, inplanes, H, W), jnp.float32)  # torch NCHW
    raw = init_params(kp, inplanes, planes)
    kparams = fold_and_pad_params(raw)

    x_nhwc = jnp.transpose(x_nchw, (0, 2, 3, 1))
    out_nhwc = bottleneck_pallas(x_nhwc, kparams)
    out_nchw = jnp.transpose(out_nhwc, (0, 3, 1, 2))
    jax.block_until_ready(out_nchw)

    ref_nchw = jnp.transpose(bottleneck_ref_nhwc(x_nhwc, raw), (0, 3, 1, 2))
    np.testing.assert_allclose(np.asarray(out_nchw), np.asarray(ref_nchw),
                               rtol=3e-2, atol=3e-2)
    print("KERNEL_OK")
</pallas_src>

<mosaic_0001>
module attributes {stable_mosaic.version = 11 : i64} {
  func.func @_bottleneck_kernel(%arg0: i32, %arg1: memref<1x256x128xf32, #tpu.memory_space<vmem>>, %arg2: memref<128x128xbf16, #tpu.memory_space<vmem>>, %arg3: memref<1152x128xbf16, #tpu.memory_space<vmem>>, %arg4: memref<128x128xbf16, #tpu.memory_space<vmem>>, %arg5: memref<1x128xf32, #tpu.memory_space<vmem>>, %arg6: memref<1x128xf32, #tpu.memory_space<vmem>>, %arg7: memref<1x128xf32, #tpu.memory_space<vmem>>, %arg8: memref<1x128xf32, #tpu.memory_space<vmem>>, %arg9: memref<1x128xf32, #tpu.memory_space<vmem>>, %arg10: memref<1x128xf32, #tpu.memory_space<vmem>>, %arg11: memref<1x256x128xf32, #tpu.memory_space<vmem>>) attributes {dimension_semantics = [#tpu.dimension_semantics<parallel>], iteration_bounds = array<i64: 2>, scalar_prefetch = 0 : i64, scratch_operands = 0 : i64, tpu.core_type = #tpu.core_type<tc>, window_params = [{transform_indices = @transform_0, window_bounds = array<i64: 1, 256, 128>}, {pipeline_mode = #tpu.pipeline_mode<synchronous>, transform_indices = @transform_1, window_bounds = array<i64: 128, 128>}, {pipeline_mode = #tpu.pipeline_mode<synchronous>, transform_indices = @transform_2, window_bounds = array<i64: 1152, 128>}, {pipeline_mode = #tpu.pipeline_mode<synchronous>, transform_indices = @transform_3, window_bounds = array<i64: 128, 128>}, {pipeline_mode = #tpu.pipeline_mode<synchronous>, transform_indices = @transform_4, window_bounds = array<i64: 1, 128>}, {pipeline_mode = #tpu.pipeline_mode<synchronous>, transform_indices = @transform_5, window_bounds = array<i64: 1, 128>}, {pipeline_mode = #tpu.pipeline_mode<synchronous>, transform_indices = @transform_6, window_bounds = array<i64: 1, 128>}, {pipeline_mode = #tpu.pipeline_mode<synchronous>, transform_indices = @transform_7, window_bounds = array<i64: 1, 128>}, {pipeline_mode = #tpu.pipeline_mode<synchronous>, transform_indices = @transform_8, window_bounds = array<i64: 1, 128>}, {pipeline_mode = #tpu.pipeline_mode<synchronous>, transform_indices = @transform_9, window_bounds = array<i64: 1, 128>}, {transform_indices = @transform_10, window_bounds = array<i64: 1, 256, 128>}]} {
    %c0 = arith.constant 0 : index
    %c0_0 = arith.constant 0 : index
    %c0_1 = arith.constant 0 : index
    %0 = vector.load %arg1[%c0, %c0_0, %c0_1] : memref<1x256x128xf32, #tpu.memory_space<vmem>>, vector<1x256x128xf32>
    %1 = vector.shape_cast %0 : vector<1x256x128xf32> to vector<256x128xf32>
    %2 = arith.truncf %1 : vector<256x128xf32> to vector<256x128xbf16>
    %c0_2 = arith.constant 0 : index
    %c0_3 = arith.constant 0 : index
    %3 = vector.load %arg2[%c0_2, %c0_3] : memref<128x128xbf16, #tpu.memory_space<vmem>>, vector<128x128xbf16>
    %cst = arith.constant dense<0.000000e+00> : vector<256x128xf32>
    %4 = tpu.matmul %2, %3, %cst {dimension_numbers = #tpu.dot_dimension_numbers<[1], [0], [0], [1], [0, 0, 1, 1], [], []>} : vector<256x128xbf16>, vector<128x128xbf16>, vector<256x128xf32> -> vector<256x128xf32>
    %c0_4 = arith.constant 0 : index
    %c0_5 = arith.constant 0 : index
    %5 = vector.load %arg5[%c0_4, %c0_5] : memref<1x128xf32, #tpu.memory_space<vmem>>, vector<1x128xf32>
    %6 = vector.broadcast %5 : vector<1x128xf32> to vector<256x128xf32>
    %7 = arith.mulf %4, %6 : vector<256x128xf32>
    %c0_6 = arith.constant 0 : index
    %c0_7 = arith.constant 0 : index
    %8 = vector.load %arg6[%c0_6, %c0_7] : memref<1x128xf32, #tpu.memory_space<vmem>>, vector<1x128xf32>
    %9 = vector.broadcast %8 : vector<1x128xf32> to vector<256x128xf32>
    %10 = arith.addf %7, %9 : vector<256x128xf32>
    %cst_8 = arith.constant 0.000000e+00 : f32
    %11 = vector.broadcast %cst_8 : f32 to vector<256x128xf32>
    %12 = arith.maximumf %10, %11 : vector<256x128xf32>
    %13 = tpu.iota {dimensions = array<i32: 0>} : vector<16x16x128xi32>
    %14 = vector.shape_cast %13 : vector<16x16x128xi32> to vector<256x128xi32>
    %15 = tpu.iota {dimensions = array<i32: 1>} : vector<16x16x128xi32>
    %16 = vector.shape_cast %15 : vector<16x16x128xi32> to vector<256x128xi32>
    %c-1_i32 = arith.constant -1 : i32
    %17 = vector.broadcast %c-1_i32 : i32 to vector<256x128xi32>
    %18 = arith.addi %14, %17 : vector<256x128xi32>
    %c0_i32 = arith.constant 0 : i32
    %19 = vector.broadcast %c0_i32 : i32 to vector<256x128xi32>
    %20 = arith.cmpi sge, %18, %19 : vector<256x128xi32>
    %c-1_i32_9 = arith.constant -1 : i32
    %21 = vector.broadcast %c-1_i32_9 : i32 to vector<256x128xi32>
    %22 = arith.addi %14, %21 : vector<256x128xi32>
    %c15_i32 = arith.constant 15 : i32
    %23 = vector.broadcast %c15_i32 : i32 to vector<256x128xi32>
    %24 = arith.cmpi sle, %22, %23 : vector<256x128xi32>
    %25 = arith.andi %20, %24 : vector<256x128xi1>
    %c-1_i32_10 = arith.constant -1 : i32
    %26 = vector.broadcast %c-1_i32_10 : i32 to vector<256x128xi32>
    %27 = arith.addi %16, %26 : vector<256x128xi32>
    %c0_i32_11 = arith.constant 0 : i32
    %28 = vector.broadcast %c0_i32_11 : i32 to vector<256x128xi32>
    %29 = arith.cmpi sge, %27, %28 : vector<256x128xi32>
    %c-1_i32_12 = arith.constant -1 : i32
    %30 = vector.broadcast %c-1_i32_12 : i32 to vector<256x128xi32>
    %31 = arith.addi %16, %30 : vector<256x128xi32>
    %c15_i32_13 = arith.constant 15 : i32
    %32 = vector.broadcast %c15_i32_13 : i32 to vector<256x128xi32>
    %33 = arith.cmpi sle, %31, %32 : vector<256x128xi32>
    %34 = arith.andi %29, %33 : vector<256x128xi1>
    %c17_i32 = arith.constant 17 : i32
    %35 = tpu.dynamic_rotate %12 by %c17_i32 dim 0 : vector<256x128xf32>, i32 -> vector<256x128xf32>
    %36 = arith.andi %25, %34 : vector<256x128xi1>
    %cst_14 = arith.constant 0.000000e+00 : f32
    %37 = vector.broadcast %cst_14 : f32 to vector<256x128xf32>
    %38 = arith.select %36, %35, %37 : vector<256x128xi1>, vector<256x128xf32>
    %c0_i32_15 = arith.constant 0 : i32
    %39 = vector.broadcast %c0_i32_15 : i32 to vector<256x128xi32>
    %40 = arith.addi %16, %39 : vector<256x128xi32>
    %c0_i32_16 = arith.constant 0 : i32
    %41 = vector.broadcast %c0_i32_16 : i32 to vector<256x128xi32>
    %42 = arith.cmpi sge, %40, %41 : vector<256x128xi32>
    %c0_i32_17 = arith.constant 0 : i32
    %43 = vector.broadcast %c0_i32_17 : i32 to vector<256x128xi32>
    %44 = arith.addi %16, %43 : vector<256x128xi32>
    %c15_i32_18 = arith.constant 15 : i32
    %45 = vector.broadcast %c15_i32_18 : i32 to vector<256x128xi32>
    %46 = arith.cmpi sle, %44, %45 : vector<256x128xi32>
    %47 = arith.andi %42, %46 : vector<256x128xi1>
    %c16_i32 = arith.constant 16 : i32
    %48 = tpu.dynamic_rotate %12 by %c16_i32 dim 0 : vector<256x128xf32>, i32 -> vector<256x128xf32>
    %49 = arith.andi %25, %47 : vector<256x128xi1>
    %cst_19 = arith.constant 0.000000e+00 : f32
    %50 = vector.broadcast %cst_19 : f32 to vector<256x128xf32>
    %51 = arith.select %49, %48, %50 : vector<256x128xi1>, vector<256x128xf32>
    %c1_i32 = arith.constant 1 : i32
    %52 = vector.broadcast %c1_i32 : i32 to vector<256x128xi32>
    %53 = arith.addi %16, %52 : vector<256x128xi32>
    %c0_i32_20 = arith.constant 0 : i32
    %54 = vector.broadcast %c0_i32_20 : i32 to vector<256x128xi32>
    %55 = arith.cmpi sge, %53, %54 : vector<256x128xi32>
    %c1_i32_21 = arith.constant 1 : i32
    %56 = vector.broadcast %c1_i32_21 : i32 to vector<256x128xi32>
    %57 = arith.addi %16, %56 : vector<256x128xi32>
    %c15_i32_22 = arith.constant 15 : i32
    %58 = vector.broadcast %c15_i32_22 : i32 to vector<256x128xi32>
    %59 = arith.cmpi sle, %57, %58 : vector<256x128xi32>
    %60 = arith.andi %55, %59 : vector<256x128xi1>
    %c15_i32_23 = arith.constant 15 : i32
    %61 = tpu.dynamic_rotate %12 by %c15_i32_23 dim 0 : vector<256x128xf32>, i32 -> vector<256x128xf32>
    %62 = arith.andi %25, %60 : vector<256x128xi1>
    %cst_24 = arith.constant 0.000000e+00 : f32
    %63 = vector.broadcast %cst_24 : f32 to vector<256x128xf32>
    %64 = arith.select %62, %61, %63 : vector<256x128xi1>, vector<256x128xf32>
    %c0_i32_25 = arith.constant 0 : i32
    %65 = vector.broadcast %c0_i32_25 : i32 to vector<256x128xi32>
    %66 = arith.addi %14, %65 : vector<256x128xi32>
    %c0_i32_26 = arith.constant 0 : i32
    %67 = vector.broadcast %c0_i32_26 : i32 to vector<256x128xi32>
    %68 = arith.cmpi sge, %66, %67 : vector<256x128xi32>
    %c0_i32_27 = arith.constant 0 : i32
    %69 = vector.broadcast %c0_i32_27 : i32 to vector<256x128xi32>
    %70 = arith.addi %14, %69 : vector<256x128xi32>
    %c15_i32_28 = arith.constant 15 : i32
    %71 = vector.broadcast %c15_i32_28 : i32 to vector<256x128xi32>
    %72 = arith.cmpi sle, %70, %71 : vector<256x128xi32>
    %73 = arith.andi %68, %72 : vector<256x128xi1>
    %c-1_i32_29 = arith.constant -1 : i32
    %74 = vector.broadcast %c-1_i32_29 : i32 to vector<256x128xi32>
    %75 = arith.addi %16, %74 : vector<256x128xi32>
    %c0_i32_30 = arith.constant 0 : i32
    %76 = vector.broadcast %c0_i32_30 : i32 to vector<256x128xi32>
    %77 = arith.cmpi sge, %75, %76 : vector<256x128xi32>
    %c-1_i32_31 = arith.constant -1 : i32
    %78 = vector.broadcast %c-1_i32_31 : i32 to vector<256x128xi32>
    %79 = arith.addi %16, %78 : vector<256x128xi32>
    %c15_i32_32 = arith.constant 15 : i32
    %80 = vector.broadcast %c15_i32_32 : i32 to vector<256x128xi32>
    %81 = arith.cmpi sle, %79, %80 : vector<256x128xi32>
    %82 = arith.andi %77, %81 : vector<256x128xi1>
    %c1_i32_33 = arith.constant 1 : i32
    %83 = tpu.dynamic_rotate %12 by %c1_i32_33 dim 0 : vector<256x128xf32>, i32 -> vector<256x128xf32>
    %84 = arith.andi %73, %82 : vector<256x128xi1>
    %cst_34 = arith.constant 0.000000e+00 : f32
    %85 = vector.broadcast %cst_34 : f32 to vector<256x128xf32>
    %86 = arith.select %84, %83, %85 : vector<256x128xi1>, vector<256x128xf32>
    %c0_i32_35 = arith.constant 0 : i32
    %87 = vector.broadcast %c0_i32_35 : i32 to vector<256x128xi32>
    %88 = arith.addi %16, %87 : vector<256x128xi32>
    %c0_i32_36 = arith.constant 0 : i32
    %89 = vector.broadcast %c0_i32_36 : i32 to vector<256x128xi32>
    %90 = arith.cmpi sge, %88, %89 : vector<256x128xi32>
    %c0_i32_37 = arith.constant 0 : i32
    %91 = vector.broadcast %c0_i32_37 : i32 to vector<256x128xi32>
    %92 = arith.addi %16, %91 : vector<256x128xi32>
    %c15_i32_38 = arith.constant 15 : i32
    %93 = vector.broadcast %c15_i32_38 : i32 to vector<256x128xi32>
    %94 = arith.cmpi sle, %92, %93 : vector<256x128xi32>
    %95 = arith.andi %90, %94 : vector<256x128xi1>
    %96 = arith.andi %73, %95 : vector<256x128xi1>
    %cst_39 = arith.constant 0.000000e+00 : f32
    %97 = vector.broadcast %cst_39 : f32 to vector<256x128xf32>
    %98 = arith.select %96, %12, %97 : vector<256x128xi1>, vector<256x128xf32>
    %c1_i32_40 = arith.constant 1 : i32
    %99 = vector.broadcast %c1_i32_40 : i32 to vector<256x128xi32>
    %100 = arith.addi %16, %99 : vector<256x128xi32>
    %c0_i32_41 = arith.constant 0 : i32
    %101 = vector.broadcast %c0_i32_41 : i32 to vector<256x128xi32>
    %102 = arith.cmpi sge, %100, %101 : vector<256x128xi32>
    %c1_i32_42 = arith.constant 1 : i32
    %103 = vector.broadcast %c1_i32_42 : i32 to vector<256x128xi32>
    %104 = arith.addi %16, %103 : vector<256x128xi32>
    %c15_i32_43 = arith.constant 15 : i32
    %105 = vector.broadcast %c15_i32_43 : i32 to vector<256x128xi32>
    %106 = arith.cmpi sle, %104, %105 : vector<256x128xi32>
    %107 = arith.andi %102, %106 : vector<256x128xi1>
    %c255_i32 = arith.constant 255 : i32
    %108 = tpu.dynamic_rotate %12 by %c255_i32 dim 0 : vector<256x128xf32>, i32 -> vector<256x128xf32>
    %109 = arith.andi %73, %107 : vector<256x128xi1>
    %cst_44 = arith.constant 0.000000e+00 : f32
    %110 = vector.broadcast %cst_44 : f32 to vector<256x128xf32>
    %111 = arith.select %109, %108, %110 : vector<256x128xi1>, vector<256x128xf32>
    %c1_i32_45 = arith.constant 1 : i32
    %112 = vector.broadcast %c1_i32_45 : i32 to vector<256x128xi32>
    %113 = arith.addi %14, %112 : vector<256x128xi32>
    %c0_i32_46 = arith.constant 0 : i32
    %114 = vector.broadcast %c0_i32_46 : i32 to vector<256x128xi32>
    %115 = arith.cmpi sge, %113, %114 : vector<256x128xi32>
    %c1_i32_47 = arith.constant 1 : i32
    %116 = vector.broadcast %c1_i32_47 : i32 to vector<256x128xi32>
    %117 = arith.addi %14, %116 : vector<256x128xi32>
    %c15_i32_48 = arith.constant 15 : i32
    %118 = vector.broadcast %c15_i32_48 : i32 to vector<256x128xi32>
    %119 = arith.cmpi sle, %117, %118 : vector<256x128xi32>
    %120 = arith.andi %115, %119 : vector<256x128xi1>
    %c-1_i32_49 = arith.constant -1 : i32
    %121 = vector.broadcast %c-1_i32_49 : i32 to vector<256x128xi32>
    %122 = arith.addi %16, %121 : vector<256x128xi32>
    %c0_i32_50 = arith.constant 0 : i32
    %123 = vector.broadcast %c0_i32_50 : i32 to vector<256x128xi32>
    %124 = arith.cmpi sge, %122, %123 : vector<256x128xi32>
    %c-1_i32_51 = arith.constant -1 : i32
    %125 = vector.broadcast %c-1_i32_51 : i32 to vector<256x128xi32>
    %126 = arith.addi %16, %125 : vector<256x128xi32>
    %c15_i32_52 = arith.constant 15 : i32
    %127 = vector.broadcast %c15_i32_52 : i32 to vector<256x128xi32>
    %128 = arith.cmpi sle, %126, %127 : vector<256x128xi32>
    %129 = arith.andi %124, %128 : vector<256x128xi1>
    %c241_i32 = arith.constant 241 : i32
    %130 = tpu.dynamic_rotate %12 by %c241_i32 dim 0 : vector<256x128xf32>, i32 -> vector<256x128xf32>
    %131 = arith.andi %120, %129 : vector<256x128xi1>
    %cst_53 = arith.constant 0.000000e+00 : f32
    %132 = vector.broadcast %cst_53 : f32 to vector<256x128xf32>
    %133 = arith.select %131, %130, %132 : vector<256x128xi1>, vector<256x128xf32>
    %c0_i32_54 = arith.constant 0 : i32
    %134 = vector.broadcast %c0_i32_54 : i32 to vector<256x128xi32>
    %135 = arith.addi %16, %134 : vector<256x128xi32>
    %c0_i32_55 = arith.constant 0 : i32
    %136 = vector.broadcast %c0_i32_55 : i32 to vector<256x128xi32>
    %137 = arith.cmpi sge, %135, %136 : vector<256x128xi32>
    %c0_i32_56 = arith.constant 0 : i32
    %138 = vector.broadcast %c0_i32_56 : i32 to vector<256x128xi32>
    %139 = arith.addi %16, %138 : vector<256x128xi32>
    %c15_i32_57 = arith.constant 15 : i32
    %140 = vector.broadcast %c15_i32_57 : i32 to vector<256x128xi32>
    %141 = arith.cmpi sle, %139, %140 : vector<256x128xi32>
    %142 = arith.andi %137, %141 : vector<256x128xi1>
    %c240_i32 = arith.constant 240 : i32
    %143 = tpu.dynamic_rotate %12 by %c240_i32 dim 0 : vector<256x128xf32>, i32 -> vector<256x128xf32>
    %144 = arith.andi %120, %142 : vector<256x128xi1>
    %cst_58 = arith.constant 0.000000e+00 : f32
    %145 = vector.broadcast %cst_58 : f32 to vector<256x128xf32>
    %146 = arith.select %144, %143, %145 : vector<256x128xi1>, vector<256x128xf32>
    %c1_i32_59 = arith.constant 1 : i32
    %147 = vector.broadcast %c1_i32_59 : i32 to vector<256x128xi32>
    %148 = arith.addi %16, %147 : vector<256x128xi32>
    %c0_i32_60 = arith.constant 0 : i32
    %149 = vector.broadcast %c0_i32_60 : i32 to vector<256x128xi32>
    %150 = arith.cmpi sge, %148, %149 : vector<256x128xi32>
    %c1_i32_61 = arith.constant 1 : i32
    %151 = vector.broadcast %c1_i32_61 : i32 to vector<256x128xi32>
    %152 = arith.addi %16, %151 : vector<256x128xi32>
    %c15_i32_62 = arith.constant 15 : i32
    %153 = vector.broadcast %c15_i32_62 : i32 to vector<256x128xi32>
    %154 = arith.cmpi sle, %152, %153 : vector<256x128xi32>
    %155 = arith.andi %150, %154 : vector<256x128xi1>
    %c239_i32 = arith.constant 239 : i32
    %156 = tpu.dynamic_rotate %12 by %c239_i32 dim 0 : vector<256x128xf32>, i32 -> vector<256x128xf32>
    %157 = arith.andi %120, %155 : vector<256x128xi1>
    %cst_63 = arith.constant 0.000000e+00 : f32
    %158 = vector.broadcast %cst_63 : f32 to vector<256x128xf32>
    %159 = arith.select %157, %156, %158 : vector<256x128xi1>, vector<256x128xf32>
    %160 = tpu.concatenate %38, %51, %64, %86, %98, %111, %133, %146, %159 in 1 : vector<256x128xf32>, vector<256x128xf32>, vector<256x128xf32>, vector<256x128xf32>, vector<256x128xf32>, vector<256x128xf32>, vector<256x128xf32>, vector<256x128xf32>, vector<256x128xf32> -> vector<256x1152xf32>
    %161 = arith.truncf %160 : vector<256x1152xf32> to vector<256x1152xbf16>
    %c0_64 = arith.constant 0 : index
    %c0_65 = arith.constant 0 : index
    %162 = vector.load %arg3[%c0_64, %c0_65] : memref<1152x128xbf16, #tpu.memory_space<vmem>>, vector<1152x128xbf16>
    %cst_66 = arith.constant dense<0.000000e+00> : vector<256x128xf32>
    %163 = tpu.matmul %161, %162, %cst_66 {dimension_numbers = #tpu.dot_dimension_numbers<[1], [0], [0], [1], [0, 0, 1, 1], [], []>} : vector<256x1152xbf16>, vector<1152x128xbf16>, vector<256x128xf32> -> vector<256x128xf32>
    %c0_67 = arith.constant 0 : index
    %c0_68 = arith.constant 0 : index
    %164 = vector.load %arg7[%c0_67, %c0_68] : memref<1x128xf32, #tpu.memory_space<vmem>>, vector<1x128xf32>
    %165 = vector.broadcast %164 : vector<1x128xf32> to vector<256x128xf32>
    %166 = arith.mulf %163, %165 : vector<256x128xf32>
    %c0_69 = arith.constant 0 : index
    %c0_70 = arith.constant 0 : index
    %167 = vector.load %arg8[%c0_69, %c0_70] : memref<1x128xf32, #tpu.memory_space<vmem>>, vector<1x128xf32>
    %168 = vector.broadcast %167 : vector<1x128xf32> to vector<256x128xf32>
    %169 = arith.addf %166, %168 : vector<256x128xf32>
    %cst_71 = arith.constant 0.000000e+00 : f32
    %170 = vector.broadcast %cst_71 : f32 to vector<256x128xf32>
    %171 = arith.maximumf %169, %170 : vector<256x128xf32>
    %172 = arith.truncf %171 : vector<256x128xf32> to vector<256x128xbf16>
    %c0_72 = arith.constant 0 : index
    %c0_73 = arith.constant 0 : index
    %173 = vector.load %arg4[%c0_72, %c0_73] : memref<128x128xbf16, #tpu.memory_space<vmem>>, vector<128x128xbf16>
    %cst_74 = arith.constant dense<0.000000e+00> : vector<256x128xf32>
    %174 = tpu.matmul %172, %173, %cst_74 {dimension_numbers = #tpu.dot_dimension_numbers<[1], [0], [0], [1], [0, 0, 1, 1], [], []>} : vector<256x128xbf16>, vector<128x128xbf16>, vector<256x128xf32> -> vector<256x128xf32>
    %c0_75 = arith.constant 0 : index
    %c0_76 = arith.constant 0 : index
    %175 = vector.load %arg9[%c0_75, %c0_76] : memref<1x128xf32, #tpu.memory_space<vmem>>, vector<1x128xf32>
    %176 = vector.broadcast %175 : vector<1x128xf32> to vector<256x128xf32>
    %177 = arith.mulf %174, %176 : vector<256x128xf32>
    %c0_77 = arith.constant 0 : index
    %c0_78 = arith.constant 0 : index
    %178 = vector.load %arg10[%c0_77, %c0_78] : memref<1x128xf32, #tpu.memory_space<vmem>>, vector<1x128xf32>
    %179 = vector.broadcast %178 : vector<1x128xf32> to vector<256x128xf32>
    %180 = arith.addf %177, %179 : vector<256x128xf32>
    %181 = arith.addf %180, %1 : vector<256x128xf32>
    %cst_79 = arith.constant 0.000000e+00 : f32
    %182 = vector.broadcast %cst_79 : f32 to vector<256x128xf32>
    %183 = arith.maximumf %181, %182 : vector<256x128xf32>
    %c0_80 = arith.constant 0 : index
    %c0_81 = arith.constant 0 : index
    %c0_82 = arith.constant 0 : index
    %184 = vector.load %arg11[%c0_80, %c0_81, %c0_82] : memref<1x256x128xf32, #tpu.memory_space<vmem>>, vector<1x256x128xf32>
    %185 = vector.shape_cast %184 : vector<1x256x128xf32> to vector<256x128xf32>
    %186 = vector.shape_cast %183 : vector<256x128xf32> to vector<1x256x128xf32>
    tpu.vector_store %arg11[%c0_80, %c0_81, %c0_82], %186 {strides = array<i32>} : memref<1x256x128xf32, #tpu.memory_space<vmem>>, vector<1x256x128xf32>,
    return
  }
  func.func @transform_0(%arg0: i32) -> (i32, i32, i32) {
    %c0_i32 = arith.constant 0 : i32
    %c0_i32_0 = arith.constant 0 : i32
    %c0_i32_1 = arith.constant 0 : i32
    return %arg0, %c0_i32, %c0_i32_0 : i32, i32, i32
  }
  func.func @transform_1(%arg0: i32) -> (i32, i32) {
    %c0_i32 = arith.constant 0 : i32
    %c0_i32_0 = arith.constant 0 : i32
    %c0_i32_1 = arith.constant 0 : i32
    return %c0_i32, %c0_i32_0 : i32, i32
  }
  func.func @transform_2(%arg0: i32) -> (i32, i32) {
    %c0_i32 = arith.constant 0 : i32
    %c0_i32_0 = arith.constant 0 : i32
    %c0_i32_1 = arith.constant 0 : i32
    return %c0_i32, %c0_i32_0 : i32, i32
  }
  func.func @transform_3(%arg0: i32) -> (i32, i32) {
    %c0_i32 = arith.constant 0 : i32
    %c0_i32_0 = arith.constant 0 : i32
    %c0_i32_1 = arith.constant 0 : i32
    return %c0_i32, %c0_i32_0 : i32, i32
  }
  func.func @transform_4(%arg0: i32) -> (i32, i32) {
    %c0_i32 = arith.constant 0 : i32
    %c0_i32_0 = arith.constant 0 : i32
    %c0_i32_1 = arith.constant 0 : i32
    return %c0_i32, %c0_i32_0 : i32, i32
  }
  func.func @transform_5(%arg0: i32) -> (i32, i32) {
    %c0_i32 = arith.constant 0 : i32
    %c0_i32_0 = arith.constant 0 : i32
    %c0_i32_1 = arith.constant 0 : i32
    return %c0_i32, %c0_i32_0 : i32, i32
  }
  func.func @transform_6(%arg0: i32) -> (i32, i32) {
    %c0_i32 = arith.constant 0 : i32
    %c0_i32_0 = arith.constant 0 : i32
    %c0_i32_1 = arith.constant 0 : i32
    return %c0_i32, %c0_i32_0 : i32, i32
  }
  func.func @transform_7(%arg0: i32) -> (i32, i32) {
    %c0_i32 = arith.constant 0 : i32
    %c0_i32_0 = arith.constant 0 : i32
    %c0_i32_1 = arith.constant 0 : i32
    return %c0_i32, %c0_i32_0 : i32, i32
  }
  func.func @transform_8(%arg0: i32) -> (i32, i32) {
    %c0_i32 = arith.constant 0 : i32
    %c0_i32_0 = arith.constant 0 : i32
    %c0_i32_1 = arith.constant 0 : i32
    return %c0_i32, %c0_i32_0 : i32, i32
  }
  func.func @transform_9(%arg0: i32) -> (i32, i32) {
    %c0_i32 = arith.constant 0 : i32
    %c0_i32_0 = arith.constant 0 : i32
    %c0_i32_1 = arith.constant 0 : i32
    return %c0_i32, %c0_i32_0 : i32, i32
  }
  func.func @transform_10(%arg0: i32) -> (i32, i32, i32) {
    %c0_i32 = arith.constant 0 : i32
    %c0_i32_0 = arith.constant 0 : i32
    %c0_i32_1 = arith.constant 0 : i32
    return %arg0, %c0_i32, %c0_i32_0 : i32, i32, i32
  }
}

</mosaic_0001>

<llo_original>
// kernel: tpu_custom_call.1
$region0: #{tpu_custom_call.1}
  #allocation0 [shape = 'u32[]', space=smem, size = 0x4, offset = 0x4, fixed_abs, tag = 'smem constant byte address 0x4 - core index']
  #allocation1 [shape = 'u32[144,128]{1,0:T(1,128)}', space=vmem, size = 0x12000, scoped, tag = 'internal scratch']
  %s0 = inlined_call_operand.hbm [shape: f32[2,256,128], index: 0, kind: input, shape index: {}]
  %s1 = inlined_call_operand.hbm [shape: bf16[128,128], index: 1, kind: input, shape index: {}]
  %s2 = inlined_call_operand.hbm [shape: bf16[1152,128], index: 2, kind: input, shape index: {}]
  %s3 = inlined_call_operand.hbm [shape: bf16[128,128], index: 3, kind: input, shape index: {}]
  %s4 = inlined_call_operand.vmem [shape: f32[1,128], index: 4, kind: input, shape index: {}]
  %s5 = inlined_call_operand.vmem [shape: f32[1,128], index: 5, kind: input, shape index: {}]
  %s6 = inlined_call_operand.vmem [shape: f32[1,128], index: 6, kind: input, shape index: {}]
  %s7 = inlined_call_operand.vmem [shape: f32[1,128], index: 7, kind: input, shape index: {}]
  %s8 = inlined_call_operand.vmem [shape: f32[1,128], index: 8, kind: input, shape index: {}]
  %s9 = inlined_call_operand.vmem [shape: f32[1,128], index: 9, kind: input, shape index: {}]
  %s10 = inlined_call_operand.hbm [shape: f32[2,256,128], index: 10, kind: output, shape index: {}]
  %s11 = sld [smem:[#allocation0]]
  $region89: #{tpu_custom_call.1} parent=0
    _
  %s13 = ssub.s32 1, %s11
  %s14 = scalar_select 0, %s13, %s11
  $region1: #{tpu_custom_call.1} parent=0
    #allocation2 [shape = 'u8[262144]{0}', space=vmem, size = 0x40000, scoped, tag = 'input window, operand 0']
    #allocation3 [shape = 's32[2]{0}', space=sflag, size = 0x8, scoped, tag = 'scoped memory for tpu_custom_call.1']
    #allocation4 [shape = 's32[2]{0}', space=sflag, size = 0x8, scoped, tag = 'scoped memory for tpu_custom_call.1']
    #allocation5 [shape = 'u8[32768]{0}', space=vmem, size = 0x8000, scoped, tag = 'input window, operand 1, single buffered']
    #allocation6 [shape = 's32[1]{0}', space=sflag, size = 0x4, scoped, tag = 'scoped memory for tpu_custom_call.1']
    #allocation7 [shape = 'u8[294912]{0}', space=vmem, size = 0x48000, scoped, tag = 'input window, operand 2, single buffered']
    #allocation8 [shape = 'u8[32768]{0}', space=vmem, size = 0x8000, scoped, tag = 'input window, operand 3, single buffered']
    #allocation9 [shape = 's32[1]{0}', space=sflag, size = 0x4, scoped, tag = 'scoped memory for tpu_custom_call.1']
    #allocation10 [shape = 'u8[262144]{0}', space=vmem, size = 0x40000, scoped, tag = 'output window, operand 0']
    %15 = vsyncpa [#allocation3], 0
    %s16 = scalar_lea.sflag [#allocation3], 1
    %17 = vsyncpa %s16, 0
    %18 = vsyncpa [#allocation6], 0
    %19 = vsyncpa [#allocation9], 0
    %20 = vsyncpa [#allocation4], 0
    %s21 = scalar_lea.sflag [#allocation4], 1
    %22 = vsyncpa %s21, 0
    loop: start=0, step=1, limit=4
    $region2: #{tpu_custom_call.1} parent=1 // loop_pre_header
      _
    $region3: #{tpu_custom_call.1} parent=1 // loop_header
      %s24 = sphi 0, %s28
      %p25 = scmp.ge.s32.totalorder %s24, 4
      %s34 = sphi 0, %s36
      %s37 = sphi 0, %s34
      %s38 = sphi 0, %s37
      %s54 = sphi 0, %s38
      %s58 = sphi 0, %s58
      %s60 = sphi 0, %s58
      %s61 = sphi 0, %s60
      %s75 = sphi 0, %s61
      %s79 = sphi 0, %s79
      %s81 = sphi 0, %s79
      %s82 = sphi 0, %s81
      %s96 = sphi 0, %s82
      %s100 = sphi 0, %s100
      %s102 = sphi 0, %s100
      %s103 = sphi 0, %s102
      %s117 = sphi 0, %s103
      %s121 = sphi 0, %s121
      %s123 = sphi 0, %s121
      %s124 = sphi 0, %s123
      %s138 = sphi 0, %s124
      %s142 = sphi 0, %s142
      %s144 = sphi 0, %s142
      %s145 = sphi 0, %s144
      %s159 = sphi 0, %s145
      %s163 = sphi 0, %s163
      %s165 = sphi 0, %s163
      %s166 = sphi 0, %s165
      %s180 = sphi 0, %s166
      %s184 = sphi 0, %s184
      %s186 = sphi 0, %s184
      %s187 = sphi 0, %s186
      %s201 = sphi 0, %s187
      %s205 = sphi 0, %s205
      %s207 = sphi 0, %s205
      %s208 = sphi 0, %s207
      %s222 = sphi 0, %s208
      %s226 = sphi 0, %s226
      %s228 = sphi 0, %s226
      %s229 = sphi 0, %s228
      %s243 = sphi 0, %s229
      %s249 = sphi 0, %s251
      %s252 = sphi 0, %s249
      %s253 = sphi 0, %s252
      %s269 = sphi 0, %s253
    $region4: #{tpu_custom_call.1} parent=1 // loop_header_branch
      %27 = sbr.rel (%p25) target = $region8
    $region5: #{tpu_custom_call.1} parent=1 // loop_body
      %s29 = ssub.s32 %s24, 1
      %s30 = ssub.s32 %s24, 2
      %s31 = sadd.s32 %s24, 1
      %s32 = ssub.s32 %s24, %s31
      %p33 = scmp.eq.s32.totalorder %s32, 0
      %s35 = sadd.s32 %s34, 1
      %s36 = scalar_select %p33, %s34, %s35
      %p39 = pneg %p33
      %p40 = scmp.eq.s32.totalorder %s24, 1
      %p41 = por %p39, %p40
      %p42 = scmp.ne.s32.totalorder %s34, %s37
      %p43 = scmp.eq.s32.totalorder %s24, 0
      %p44 = por %p42, %p43
      %p45 = scmp.ne.s32.totalorder %s34, %s37
      %p46 = scmp.eq.s32.totalorder %s29, 1
      %p47 = por %p45, %p46
      %p48 = scmp.ne.s32.totalorder %s37, %s38
      %p49 = scmp.eq.s32.totalorder %s29, 0
      %p50 = por %p48, %p49
      %p51 = scmp.ne.s32.totalorder %s37, %s38
      %p52 = scmp.eq.s32.totalorder %s30, 1
      %p53 = por %p51, %p52
      %p55 = scmp.ne.s32.totalorder %s38, %s54
      %p56 = scmp.eq.s32.totalorder %s30, 0
      %p57 = por %p55, %p56
      %s59 = sadd.s32 %s58, 1
      %p62 = scmp.eq.s32.totalorder %s24, 1
      %p63 = scmp.ne.s32.totalorder %s58, %s60
      %p64 = scmp.eq.s32.totalorder %s24, 0
      %p65 = por %p63, %p64
      %p66 = scmp.ne.s32.totalorder %s58, %s60
      %p67 = scmp.eq.s32.totalorder %s29, 1
      %p68 = por %p66, %p67
      %p69 = scmp.ne.s32.totalorder %s60, %s61
      %p70 = scmp.eq.s32.totalorder %s29, 0
      %p71 = por %p69, %p70
      %p72 = scmp.ne.s32.totalorder %s60, %s61
      %p73 = scmp.eq.s32.totalorder %s30, 1
      %p74 = por %p72, %p73
      %p76 = scmp.ne.s32.totalorder %s61, %s75
      %p77 = scmp.eq.s32.totalorder %s30, 0
      %p78 = por %p76, %p77
      %s80 = sadd.s32 %s79, 1
      %p83 = scmp.eq.s32.totalorder %s24, 1
      %p84 = scmp.ne.s32.totalorder %s79, %s81
      %p85 = scmp.eq.s32.totalorder %s24, 0
      %p86 = por %p84, %p85
      %p87 = scmp.ne.s32.totalorder %s79, %s81
      %p88 = scmp.eq.s32.totalorder %s29, 1
      %p89 = por %p87, %p88
      %p90 = scmp.ne.s32.totalorder %s81, %s82
      %p91 = scmp.eq.s32.totalorder %s29, 0
      %p92 = por %p90, %p91
      %p93 = scmp.ne.s32.totalorder %s81, %s82
      %p94 = scmp.eq.s32.totalorder %s30, 1
      %p95 = por %p93, %p94
      %p97 = scmp.ne.s32.totalorder %s82, %s96
      %p98 = scmp.eq.s32.totalorder %s30, 0
      %p99 = por %p97, %p98
      %s101 = sadd.s32 %s100, 1
      %p104 = scmp.eq.s32.totalorder %s24, 1
      %p105 = scmp.ne.s32.totalorder %s100, %s102
      %p106 = scmp.eq.s32.totalorder %s24, 0
      %p107 = por %p105, %p106
      %p108 = scmp.ne.s32.totalorder %s100, %s102
      %p109 = scmp.eq.s32.totalorder %s29, 1
      %p110 = por %p108, %p109
      %p111 = scmp.ne.s32.totalorder %s102, %s103
      %p112 = scmp.eq.s32.totalorder %s29, 0
      %p113 = por %p111, %p112
      %p114 = scmp.ne.s32.totalorder %s102, %s103
      %p115 = scmp.eq.s32.totalorder %s30, 1
      %p116 = por %p114, %p115
      %p118 = scmp.ne.s32.totalorder %s103, %s117
      %p119 = scmp.eq.s32.totalorder %s30, 0
      %p120 = por %p118, %p119
      %s122 = sadd.s32 %s121, 1
      %p125 = scmp.eq.s32.totalorder %s24, 1
      %p126 = scmp.ne.s32.totalorder %s121, %s123
      %p127 = scmp.eq.s32.totalorder %s24, 0
      %p128 = por %p126, %p127
      %p129 = scmp.ne.s32.totalorder %s121, %s123
      %p130 = scmp.eq.s32.totalorder %s29, 1
      %p131 = por %p129, %p130
      %p132 = scmp.ne.s32.totalorder %s123, %s124
      %p133 = scmp.eq.s32.totalorder %s29, 0
      %p134 = por %p132, %p133
      %p135 = scmp.ne.s32.totalorder %s123, %s124
      %p136 = scmp.eq.s32.totalorder %s30, 1
      %p137 = por %p135, %p136
      %p139 = scmp.ne.s32.totalorder %s124, %s138
      %p140 = scmp.eq.s32.totalorder %s30, 0
      %p141 = por %p139, %p140
      %s143 = sadd.s32 %s142, 1
      %p146 = scmp.eq.s32.totalorder %s24, 1
      %p147 = scmp.ne.s32.totalorder %s142, %s144
      %p148 = scmp.eq.s32.totalorder %s24, 0
      %p149 = por %p147, %p148
      %p150 = scmp.ne.s32.totalorder %s142, %s144
      %p151 = scmp.eq.s32.totalorder %s29, 1
      %p152 = por %p150, %p151
      %p153 = scmp.ne.s32.totalorder %s144, %s145
      %p154 = scmp.eq.s32.totalorder %s29, 0
      %p155 = por %p153, %p154
      %p156 = scmp.ne.s32.totalorder %s144, %s145
      %p157 = scmp.eq.s32.totalorder %s30, 1
      %p158 = por %p156, %p157
      %p160 = scmp.ne.s32.totalorder %s145, %s159
      %p161 = scmp.eq.s32.totalorder %s30, 0
      %p162 = por %p160, %p161
      %s164 = sadd.s32 %s163, 1
      %p167 = scmp.eq.s32.totalorder %s24, 1
      %p168 = scmp.ne.s32.totalorder %s163, %s165
      %p169 = scmp.eq.s32.totalorder %s24, 0
      %p170 = por %p168, %p169
      %p171 = scmp.ne.s32.totalorder %s163, %s165
      %p172 = scmp.eq.s32.totalorder %s29, 1
      %p173 = por %p171, %p172
      %p174 = scmp.ne.s32.totalorder %s165, %s166
      %p175 = scmp.eq.s32.totalorder %s29, 0
      %p176 = por %p174, %p175
      %p177 = scmp.ne.s32.totalorder %s165, %s166
      %p178 = scmp.eq.s32.totalorder %s30, 1
      %p179 = por %p177, %p178
      %p181 = scmp.ne.s32.totalorder %s166, %s180
      %p182 = scmp.eq.s32.totalorder %s30, 0
      %p183 = por %p181, %p182
      %s185 = sadd.s32 %s184, 1
      %p188 = scmp.eq.s32.totalorder %s24, 1
      %p189 = scmp.ne.s32.totalorder %s184, %s186
      %p190 = scmp.eq.s32.totalorder %s24, 0
      %p191 = por %p189, %p190
      %p192 = scmp.ne.s32.totalorder %s184, %s186
      %p193 = scmp.eq.s32.totalorder %s29, 1
      %p194 = por %p192, %p193
      %p195 = scmp.ne.s32.totalorder %s186, %s187
      %p196 = scmp.eq.s32.totalorder %s29, 0
      %p197 = por %p195, %p196
      %p198 = scmp.ne.s32.totalorder %s186, %s187
      %p199 = scmp.eq.s32.totalorder %s30, 1
      %p200 = por %p198, %p199
      %p202 = scmp.ne.s32.totalorder %s187, %s201
      %p203 = scmp.eq.s32.totalorder %s30, 0
      %p204 = por %p202, %p203
      %s206 = sadd.s32 %s205, 1
      %p209 = scmp.eq.s32.totalorder %s24, 1
      %p210 = scmp.ne.s32.totalorder %s205, %s207
      %p211 = scmp.eq.s32.totalorder %s24, 0
      %p212 = por %p210, %p211
      %p213 = scmp.ne.s32.totalorder %s205, %s207
      %p214 = scmp.eq.s32.totalorder %s29, 1
      %p215 = por %p213, %p214
      %p216 = scmp.ne.s32.totalorder %s207, %s208
      %p217 = scmp.eq.s32.totalorder %s29, 0
      %p218 = por %p216, %p217
      %p219 = scmp.ne.s32.totalorder %s207, %s208
      %p220 = scmp.eq.s32.totalorder %s30, 1
      %p221 = por %p219, %p220
      %p223 = scmp.ne.s32.totalorder %s208, %s222
      %p224 = scmp.eq.s32.totalorder %s30, 0
      %p225 = por %p223, %p224
      %s227 = sadd.s32 %s226, 1
      %p230 = scmp.eq.s32.totalorder %s24, 1
      %p231 = scmp.ne.s32.totalorder %s226, %s228
      %p232 = scmp.eq.s32.totalorder %s24, 0
      %p233 = por %p231, %p232
      %p234 = scmp.ne.s32.totalorder %s226, %s228
      %p235 = scmp.eq.s32.totalorder %s29, 1
      %p236 = por %p234, %p235
      %p237 = scmp.ne.s32.totalorder %s228, %s229
      %p238 = scmp.eq.s32.totalorder %s29, 0
      %p239 = por %p237, %p238
      %p240 = scmp.ne.s32.totalorder %s228, %s229
      %p241 = scmp.eq.s32.totalorder %s30, 1
      %p242 = por %p240, %p241
      %p244 = scmp.ne.s32.totalorder %s229, %s243
      %p245 = scmp.eq.s32.totalorder %s30, 0
      %p246 = por %p244, %p245
      %s247 = ssub.s32 %s24, %s31
      %p248 = scmp.eq.s32.totalorder %s247, 0
      %s250 = sadd.s32 %s249, 1
      %s251 = scalar_select %p248, %s249, %s250
      %p254 = pneg %p248
      %p255 = scmp.eq.s32.totalorder %s24, 1
      %p256 = por %p254, %p255
      %p257 = scmp.ne.s32.totalorder %s249, %s252
      %p258 = scmp.eq.s32.totalorder %s24, 0
      %p259 = por %p257, %p258
      %p260 = scmp.ne.s32.totalorder %s249, %s252
      %p261 = scmp.eq.s32.totalorder %s29, 1
      %p262 = por %p260, %p261
      %p263 = scmp.ne.s32.totalorder %s252, %s253
      %p264 = scmp.eq.s32.totalorder %s29, 0
      %p265 = por %p263, %p264
      %p266 = scmp.ne.s32.totalorder %s252, %s253
      %p267 = scmp.eq.s32.totalorder %s30, 1
      %p268 = por %p266, %p267
      %p270 = scmp.ne.s32.totalorder %s253, %s269
      %p271 = scmp.eq.s32.totalorder %s30, 0
      %p272 = por %p270, %p271
      %p273 = scmp.le.s32.totalorder 1, %s24
      %p274 = scmp.lt.s32.totalorder %s24, 3
      %p275 = pnand %p273, %p274
      %p276 = pneg %p275
      // Predicated region
      $region9: #{tpu_custom_call.1} parent=5 // pred_check
        _
      $region10: #{tpu_custom_call.1} parent=5 // pred_check_branch
        %278 = sbr.rel (%p275) target = $region12
      $region11: #{tpu_custom_call.1} parent=5 // pred_region
        %s279 = ssub.s32 %s24, 1
        // Predicated region
        $region13: #{tpu_custom_call.1} parent=11 // pred_check
          %p280 = pneg %p71
        $region14: #{tpu_custom_call.1} parent=11 // pred_check_branch
          %282 = sbr.rel (%p280) target = $region16
        $region15: #{tpu_custom_call.1} parent=11 // pred_region
          %s284 = ssub.s32 1024, 1024
          %285 = vsyncadd [#allocation6], %s284
          %s286 = sshll.u32 [#allocation5], 4
          %s287 = int_to_ptr.vmem [resolvable:$true] %s286
          %292 = dma.hbm_to_vmem [thread:$0]  %s1, 1024, %s287, [#allocation6], 64, 64, 4
        $region16: #{tpu_custom_call.1} parent=11 // pred_fallthru
          _
        // Predicated region
        $region17: #{tpu_custom_call.1} parent=11 // pred_check
          %p293 = pneg %p92
        $region18: #{tpu_custom_call.1} parent=11 // pred_check_branch
          %295 = sbr.rel (%p293) target = $region20
        $region19: #{tpu_custom_call.1} parent=11 // pred_region
          %s297 = ssub.s32 9216, 9216
          %298 = vsyncadd [#allocation6], %s297
          %s299 = sshll.u32 [#allocation7], 4
          %s300 = int_to_ptr.vmem [resolvable:$true] %s299
          %305 = dma.hbm_to_vmem [thread:$0]  %s2, 9216, %s300, [#allocation6], 64, 64, 4
        $region20: #{tpu_custom_call.1} parent=11 // pred_fallthru
          _
        // Predicated region
        $region21: #{tpu_custom_call.1} parent=11 // pred_check
          %p306 = pneg %p113
        $region22: #{tpu_custom_call.1} parent=11 // pred_check_branch
          %308 = sbr.rel (%p306) target = $region24
        $region23: #{tpu_custom_call.1} parent=11 // pred_region
          %s310 = ssub.s32 1024, 1024
          %311 = vsyncadd [#allocation9], %s310
          %s312 = sshll.u32 [#allocation8], 4
          %s313 = int_to_ptr.vmem [resolvable:$true] %s312
          %318 = dma.hbm_to_vmem [thread:$0]  %s3, 1024, %s313, [#allocation9], 64, 64, 4
        $region24: #{tpu_custom_call.1} parent=11 // pred_fallthru
          _
        // Predicated region
        $region25: #{tpu_custom_call.1} parent=11 // pred_check
          %p319 = pneg %p134
        $region26: #{tpu_custom_call.1} parent=11 // pred_check_branch
          %321 = sbr.rel (%p319) target = $region28
        $region27: #{tpu_custom_call.1} parent=11 // pred_region
          _
        $region28: #{tpu_custom_call.1} parent=11 // pred_fallthru
          _
        // Predicated region
        $region29: #{tpu_custom_call.1} parent=11 // pred_check
          %p322 = pneg %p155
        $region30: #{tpu_custom_call.1} parent=11 // pred_check_branch
          %324 = sbr.rel (%p322) target = $region32
        $region31: #{tpu_custom_call.1} parent=11 // pred_region
          _
        $region32: #{tpu_custom_call.1} parent=11 // pred_fallthru
          _
        // Predicated region
        $region33: #{tpu_custom_call.1} parent=11 // pred_check
          %p325 = pneg %p176
        $region34: #{tpu_custom_call.1} parent=11 // pred_check_branch
          %327 = sbr.rel (%p325) target = $region36
        $region35: #{tpu_custom_call.1} parent=11 // pred_region
          _
        $region36: #{tpu_custom_call.1} parent=11 // pred_fallthru
          _
        // Predicated region
        $region37: #{tpu_custom_call.1} parent=11 // pred_check
          %p328 = pneg %p197
        $region38: #{tpu_custom_call.1} parent=11 // pred_check_branch
          %330 = sbr.rel (%p328) target = $region40
        $region39: #{tpu_custom_call.1} parent=11 // pred_region
          _
        $region40: #{tpu_custom_call.1} parent=11 // pred_fallthru
          _
        // Predicated region
        $region41: #{tpu_custom_call.1} parent=11 // pred_check
          %p331 = pneg %p218
        $region42: #{tpu_custom_call.1} parent=11 // pred_check_branch
          %333 = sbr.rel (%p331) target = $region44
        $region43: #{tpu_custom_call.1} parent=11 // pred_region
          _
        $region44: #{tpu_custom_call.1} parent=11 // pred_fallthru
          _
        // Predicated region
        $region45: #{tpu_custom_call.1} parent=11 // pred_check
          %p334 = pneg %p239
        $region46: #{tpu_custom_call.1} parent=11 // pred_check_branch
          %336 = sbr.rel (%p334) target = $region48
        $region47: #{tpu_custom_call.1} parent=11 // pred_region
          _
        $region48: #{tpu_custom_call.1} parent=11 // pred_fallthru
          _
      $region12: #{tpu_custom_call.1} parent=5 // pred_fallthru
        _
      %p337 = scmp.lt.s32.totalorder %s24, 2
      // Predicated region
      $region49: #{tpu_custom_call.1} parent=5 // pred_check
        %p338 = pneg %p337
      $region50: #{tpu_custom_call.1} parent=5 // pred_check_branch
        %340 = sbr.rel (%p338) target = $region52
      $region51: #{tpu_custom_call.1} parent=5 // pred_region
        // Predicated region
        $region53: #{tpu_custom_call.1} parent=51 // pred_check
          %p341 = pneg %p44
        $region54: #{tpu_custom_call.1} parent=51 // pred_check_branch
          %343 = sbr.rel (%p341) target = $region56
        $region55: #{tpu_custom_call.1} parent=51 // pred_region
          %s344 = sand.u32 %s34, 1
          %s345 = scalar_lea.sflag [#allocation3], %s344
          %s346 = sand.u32 %s34, 1
          %s347 = smul.addr %s346, 256
          %s348 = scalar_lea.vmem [#allocation2], %s347
          %s350 = ssub.s32 4096, 4096
          %351 = vsyncadd %s345, %s350
          %s352 = smul.addr %s24, 32
          %s353 = smul.addr %s352, 128
          %s354 = scalar_lea.hbm %s0, %s353
          %s355 = sshll.u32 %s348, 4
          %s356 = int_to_ptr.vmem [resolvable:$true] %s355
          %361 = dma.hbm_to_vmem [thread:$0]  %s354, 4096, %s356, %s345, 128, 128, 8
        $region56: #{tpu_custom_call.1} parent=51 // pred_fallthru
          _
      $region52: #{tpu_custom_call.1} parent=5 // pred_fallthru
        _
      %p362 = scmp.le.s32.totalorder 1, %s24
      %p363 = scmp.lt.s32.totalorder %s24, 3
      %p364 = pnand %p362, %p363
      %p365 = pneg %p364
      // Predicated region
      $region57: #{tpu_custom_call.1} parent=5 // pred_check
        _
      $region58: #{tpu_custom_call.1} parent=5 // pred_check_branch
        %367 = sbr.rel (%p364) target = $region60
      $region59: #{tpu_custom_call.1} parent=5 // pred_region
        %s368 = ssub.s32 %s24, 1
        %s369 = sand.u32 %s37, 1
        %s370 = scalar_lea.sflag [#allocation3], %s369
        %s371 = sand.u32 %s37, 1
        %s372 = smul.addr %s371, 256
        %s373 = scalar_lea.vmem [#allocation2], %s372
        // Predicated region
        $region61: #{tpu_custom_call.1} parent=59 // pred_check
          %p374 = pneg %p50
        $region62: #{tpu_custom_call.1} parent=59 // pred_check_branch
          %376 = sbr.rel (%p374) target = $region64
        $region63: #{tpu_custom_call.1} parent=59 // pred_region
          %377 = dma.done %s370, 4096
        $region64: #{tpu_custom_call.1} parent=59 // pred_fallthru
          _
        // Predicated region
        $region65: #{tpu_custom_call.1} parent=59 // pred_check
          %p378 = pneg %p71
        $region66: #{tpu_custom_call.1} parent=59 // pred_check_branch
          %380 = sbr.rel (%p378) target = $region68
        $region67: #{tpu_custom_call.1} parent=59 // pred_region
          %381 = dma.done [#allocation6], 1024
        $region68: #{tpu_custom_call.1} parent=59 // pred_fallthru
          _
        // Predicated region
        $region69: #{tpu_custom_call.1} parent=59 // pred_check
          %p382 = pneg %p92
        $region70: #{tpu_custom_call.1} parent=59 // pred_check_branch
          %384 = sbr.rel (%p382) target = $region72
        $region71: #{tpu_custom_call.1} parent=59 // pred_region
          %385 = dma.done [#allocation6], 9216
        $region72: #{tpu_custom_call.1} parent=59 // pred_fallthru
          _
        // Predicated region
        $region73: #{tpu_custom_call.1} parent=59 // pred_check
          %p386 = pneg %p113
        $region74: #{tpu_custom_call.1} parent=59 // pred_check_branch
          %388 = sbr.rel (%p386) target = $region76
        $region75: #{tpu_custom_call.1} parent=59 // pred_region
          %389 = dma.done [#allocation9], 1024
        $region76: #{tpu_custom_call.1} parent=59 // pred_fallthru
          _
        %s390 = sand.u32 %s37, 1
        %s391 = scalar_lea.sflag [#allocation3], %s390
        %s392 = sand.u32 %s37, 1
        %s393 = smul.addr %s392, 256
        %s394 = scalar_lea.vmem [#allocation2], %s393
        %p395 = pneg %p50
        %p396 = pneg %p47
        %p397 = pneg %p71
        %p398 = pneg %p68
        %p399 = pneg %p92
        %p400 = pneg %p89
        %p401 = pneg %p113
        %p402 = pneg %p110
        %p403 = pneg %p134
        %p404 = pneg %p131
        %p405 = pneg %p155
        %p406 = pneg %p152
        %p407 = pneg %p176
        %p408 = pneg %p173
        %p409 = pneg %p197
        %p410 = pneg %p194
        %p411 = pneg %p218
        %p412 = pneg %p215
        %p413 = pneg %p239
        %p414 = pneg %p236
        %p415 = pneg %p265
        %p416 = pneg %p262
        %s417 = sand.u32 %s252, 1
        %s418 = scalar_lea.sflag [#allocation4], %s417
        %s419 = sand.u32 %s252, 1
        %s420 = smul.addr %s419, 256
        %s421 = scalar_lea.vmem [#allocation10], %s420
        %v423 = vld [vmem:[%s373] sm:$0xff]
        %v424 = vld [vmem:[%s373 + $0x8] sm:$0xff]
        %v425 = vld [vmem:[%s373 + $0x10] sm:$0xff]
        %v426 = vld [vmem:[%s373 + $0x18] sm:$0xff]
        %v427 = vld [vmem:[%s373 + $0x20] sm:$0xff]
        %v428 = vld [vmem:[%s373 + $0x28] sm:$0xff]
        %v429 = vld [vmem:[%s373 + $0x30] sm:$0xff]
        %v430 = vld [vmem:[%s373 + $0x38] sm:$0xff]
        %v431 = vld [vmem:[%s373 + $0x40] sm:$0xff]
        %v432 = vld [vmem:[%s373 + $0x48] sm:$0xff]
        %v433 = vld [vmem:[%s373 + $0x50] sm:$0xff]
        %v434 = vld [vmem:[%s373 + $0x58] sm:$0xff]
        %v435 = vld [vmem:[%s373 + $0x60] sm:$0xff]
        %v436 = vld [vmem:[%s373 + $0x68] sm:$0xff]
        %v437 = vld [vmem:[%s373 + $0x70] sm:$0xff]
        %v438 = vld [vmem:[%s373 + $0x78] sm:$0xff]
        %v439 = vld [vmem:[%s373 + $0x80] sm:$0xff]
        %v440 = vld [vmem:[%s373 + $0x88] sm:$0xff]
        %v441 = vld [vmem:[%s373 + $0x90] sm:$0xff]
        %v442 = vld [vmem:[%s373 + $0x98] sm:$0xff]
        %v443 = vld [vmem:[%s373 + $0xa0] sm:$0xff]
        %v444 = vld [vmem:[%s373 + $0xa8] sm:$0xff]
        %v445 = vld [vmem:[%s373 + $0xb0] sm:$0xff]
        %v446 = vld [vmem:[%s373 + $0xb8] sm:$0xff]
        %v447 = vld [vmem:[%s373 + $0xc0] sm:$0xff]
        %v448 = vld [vmem:[%s373 + $0xc8] sm:$0xff]
        %v449 = vld [vmem:[%s373 + $0xd0] sm:$0xff]
        %v450 = vld [vmem:[%s373 + $0xd8] sm:$0xff]
        %v451 = vld [vmem:[%s373 + $0xe0] sm:$0xff]
        %v452 = vld [vmem:[%s373 + $0xe8] sm:$0xff]
        %v453 = vld [vmem:[%s373 + $0xf0] sm:$0xff]
        %v454 = vld [vmem:[%s373 + $0xf8] sm:$0xff]
        %v455 = vpack.c.bf16 %v424, %v423
        %v456 = vpack.c.bf16 %v426, %v425
        %v457 = vpack.c.bf16 %v428, %v427
        %v458 = vpack.c.bf16 %v430, %v429
        %v459 = vpack.c.bf16 %v432, %v431
        %v460 = vpack.c.bf16 %v434, %v433
        %v461 = vpack.c.bf16 %v436, %v435
        %v462 = vpack.c.bf16 %v438, %v437
        %v463 = vpack.c.bf16 %v440, %v439
        %v464 = vpack.c.bf16 %v442, %v441
        %v465 = vpack.c.bf16 %v444, %v443
        %v466 = vpack.c.bf16 %v446, %v445
        %v467 = vpack.c.bf16 %v448, %v447
        %v468 = vpack.c.bf16 %v450, %v449
        %v469 = vpack.c.bf16 %v452, %v451
        %v470 = vpack.c.bf16 %v454, %v453
        %v471 = vld [vmem:[#allocation5] sm:$0xf]
        %v472 = vld [vmem:[#allocation5 + $0x4] sm:$0xf]
        %v473 = vld [vmem:[#allocation5 + $0x8] sm:$0xf]
        %v474 = vld [vmem:[#allocation5 + $0xc] sm:$0xf]
        %v475 = vld [vmem:[#allocation5 + $0x10] sm:$0xf]
        %v476 = vld [vmem:[#allocation5 + $0x14] sm:$0xf]
        %v477 = vld [vmem:[#allocation5 + $0x18] sm:$0xf]
        %v478 = vld [vmem:[#allocation5 + $0x1c] sm:$0xf]
        %v479 = vld [vmem:[#allocation5 + $0x20] sm:$0xf]
        %v480 = vld [vmem:[#allocation5 + $0x24] sm:$0xf]
        %v481 = vld [vmem:[#allocation5 + $0x28] sm:$0xf]
        %v482 = vld [vmem:[#allocation5 + $0x2c] sm:$0xf]
        %v483 = vld [vmem:[#allocation5 + $0x30] sm:$0xf]
        %v484 = vld [vmem:[#allocation5 + $0x34] sm:$0xf]
        %v485 = vld [vmem:[#allocation5 + $0x38] sm:$0xf]
        %v486 = vld [vmem:[#allocation5 + $0x3c] sm:$0xf]
        %v503 = vunpack.c.l.b16 %v471
        %v504 = vunpack.c.l.b16 %v472
        %v505 = vunpack.c.l.b16 %v473
        %v506 = vunpack.c.l.b16 %v474
        %v507 = vunpack.c.l.b16 %v475
        %v508 = vunpack.c.l.b16 %v476
        %v509 = vunpack.c.l.b16 %v477
        %v510 = vunpack.c.l.b16 %v478
        %v511 = vunpack.c.l.b16 %v479
        %v512 = vunpack.c.l.b16 %v480
        %v513 = vunpack.c.l.b16 %v481
        %v514 = vunpack.c.l.b16 %v482
        %v515 = vunpack.c.l.b16 %v483
        %v516 = vunpack.c.l.b16 %v484
        %v517 = vunpack.c.l.b16 %v485
        %v518 = vunpack.c.l.b16 %v486
        %v519 = vpack.c.b16 %v504, %v503
        %v520 = vpack.c.b16 %v506, %v505
        %v521 = vpack.c.b16 %v508, %v507
        %v522 = vpack.c.b16 %v510, %v509
        %v523 = vpack.c.b16 %v512, %v511
        %v524 = vpack.c.b16 %v514, %v513
        %v525 = vpack.c.b16 %v516, %v515
        %v526 = vpack.c.b16 %v518, %v517
        %535 = vmatprep.subr.bf16.mxu0 0
        %536 = vmatpush1.bf16.msra.mxu0 %v519
        %537 = vmatprep.subr.bf16.mxu0 0
        %538 = vmatpush1.bf16.msra.mxu0 %v520
        %539 = vmatprep.subr.bf16.mxu0 0
        %540 = vmatpush1.bf16.msra.mxu0 %v521
        %541 = vmatprep.subr.bf16.mxu0 0
        %542 = vmatpush1.bf16.msra.mxu0 %v522
        %543 = vmatprep.subr.bf16.mxu0 0
        %544 = vmatpush1.bf16.msra.mxu0 %v523
        %545 = vmatprep.subr.bf16.mxu0 0
        %546 = vmatpush1.bf16.msra.mxu0 %v524
        %547 = vmatprep.subr.bf16.mxu0 0
        %548 = vmatpush1.bf16.msra.mxu0 %v525
        %549 = vmatprep.subr.bf16.mxu0 0
        %550 = vmatpush1.bf16.msra.mxu0 %v526
        %551 = vmatprep.subr.bf16.mxu0 0
        %552 = vmatpush1.bf16.msra.mxu0 0
        %553 = vmatprep.subr.bf16.mxu0 0
        %554 = vmatpush1.bf16.msra.mxu0 0
        %555 = vmatprep.subr.bf16.mxu0 0
        %556 = vmatpush1.bf16.msra.mxu0 0
        %557 = vmatprep.subr.bf16.mxu0 0
        %558 = vmatpush1.bf16.msra.mxu0 0
        %559 = vmatprep.subr.bf16.mxu0 0
        %560 = vmatpush1.bf16.msra.mxu0 0
        %561 = vmatprep.subr.bf16.mxu0 0
        %562 = vmatpush1.bf16.msra.mxu0 0
        %563 = vmatprep.subr.bf16.mxu0 0
        %564 = vmatpush1.bf16.msra.mxu0 0
        %565 = vmatprep.subr.bf16.mxu0 0
        %566 = vmatpush1.bf16.msra.mxu0 0
        %567 = vmatprep.mubr.bf16.mxu0 0
        %568 = vmatmul.mubr.bf16.gmra.mrb[0].mxu0 %v455
        %v569 = vpop.f32.mrb[0].mxu0
        %v570 = vadd.f32 0.0, %v569
        %v571 = vpop.f32.mrb[0].mxu0
        %v572 = vpop.f32.mrb[0].mxu0
        %v573 = vadd.f32 0.0, %v572
        %v574 = vpop.f32.mrb[0].mxu0
        %575 = vmatprep.mubr.bf16.mxu0 0
        %576 = vmatmul.mubr.bf16.gmra.mrb[0].mxu0 %v456
        %v577 = vpop.f32.mrb[0].mxu0
        %v578 = vadd.f32 0.0, %v577
        %v579 = vpop.f32.mrb[0].mxu0
        %v580 = vpop.f32.mrb[0].mxu0
        %v581 = vadd.f32 0.0, %v580
        %v582 = vpop.f32.mrb[0].mxu0
        %583 = vmatprep.mubr.bf16.mxu0 0
        %584 = vmatmul.mubr.bf16.gmra.mrb[0].mxu0 %v457
        %v585 = vpop.f32.mrb[0].mxu0
        %v586 = vadd.f32 0.0, %v585
        %v587 = vpop.f32.mrb[0].mxu0
        %v588 = vpop.f32.mrb[0].mxu0
        %v589 = vadd.f32 0.0, %v588
        %v590 = vpop.f32.mrb[0].mxu0
        %591 = vmatprep.mubr.bf16.mxu0 0
        %592 = vmatmul.mubr.bf16.gmra.mrb[0].mxu0 %v458
        %v593 = vpop.f32.mrb[0].mxu0
        %v594 = vadd.f32 0.0, %v593
        %v595 = vpop.f32.mrb[0].mxu0
        %v596 = vpop.f32.mrb[0].mxu0
        %v597 = vadd.f32 0.0, %v596
        %v598 = vpop.f32.mrb[0].mxu0
        %599 = vmatprep.mubr.bf16.mxu0 0
        %600 = vmatmul.mubr.bf16.gmra.mrb[0].mxu0 %v459
        %v601 = vpop.f32.mrb[0].mxu0
        %v602 = vadd.f32 0.0, %v601
        %v603 = vpop.f32.mrb[0].mxu0
        %v604 = vpop.f32.mrb[0].mxu0
        %v605 = vadd.f32 0.0, %v604
        %v606 = vpop.f32.mrb[0].mxu0
        %607 = vmatprep.mubr.bf16.mxu0 0
        %608 = vmatmul.mubr.bf16.gmra.mrb[0].mxu0 %v460
        %v609 = vpop.f32.mrb[0].mxu0
        %v610 = vadd.f32 0.0, %v609
        %v611 = vpop.f32.mrb[0].mxu0
        %v612 = vpop.f32.mrb[0].mxu0
        %v613 = vadd.f32 0.0, %v612
        %v614 = vpop.f32.mrb[0].mxu0
        %615 = vmatprep.mubr.bf16.mxu0 0
        %616 = vmatmul.mubr.bf16.gmra.mrb[0].mxu0 %v461
        %v617 = vpop.f32.mrb[0].mxu0
        %v618 = vadd.f32 0.0, %v617
        %v619 = vpop.f32.mrb[0].mxu0
        %v620 = vpop.f32.mrb[0].mxu0
        %v621 = vadd.f32 0.0, %v620
        %v622 = vpop.f32.mrb[0].mxu0
        %623 = vmatprep.mubr.bf16.mxu0 0
        %624 = vmatmul.mubr.bf16.gmra.mrb[0].mxu0 %v462
        %v625 = vpop.f32.mrb[0].mxu0
        %v626 = vadd.f32 0.0, %v625
        %v627 = vpop.f32.mrb[0].mxu0
        %v628 = vpop.f32.mrb[0].mxu0
        %v629 = vadd.f32 0.0, %v628
        %v630 = vpop.f32.mrb[0].mxu0
        %631 = vmatprep.mubr.bf16.mxu0 0
        %632 = vmatmul.mubr.bf16.gmra.mrb[0].mxu0 %v463
        %v633 = vpop.f32.mrb[0].mxu0
        %v634 = vadd.f32 0.0, %v633
        %v635 = vpop.f32.mrb[0].mxu0
        %v636 = vpop.f32.mrb[0].mxu0
        %v637 = vadd.f32 0.0, %v636
        %v638 = vpop.f32.mrb[0].mxu0
        %639 = vmatprep.mubr.bf16.mxu0 0
        %640 = vmatmul.mubr.bf16.gmra.mrb[0].mxu0 %v464
        %v641 = vpop.f32.mrb[0].mxu0
        %v642 = vadd.f32 0.0, %v641
        %v643 = vpop.f32.mrb[0].mxu0
        %v644 = vpop.f32.mrb[0].mxu0
        %v645 = vadd.f32 0.0, %v644
        %v646 = vpop.f32.mrb[0].mxu0
        %647 = vmatprep.mubr.bf16.mxu0 0
        %648 = vmatmul.mubr.bf16.gmra.mrb[0].mxu0 %v465
        %v649 = vpop.f32.mrb[0].mxu0
        %v650 = vadd.f32 0.0, %v649
        %v651 = vpop.f32.mrb[0].mxu0
        %v652 = vpop.f32.mrb[0].mxu0
        %v653 = vadd.f32 0.0, %v652
        %v654 = vpop.f32.mrb[0].mxu0
        %655 = vmatprep.mubr.bf16.mxu0 0
        %656 = vmatmul.mubr.bf16.gmra.mrb[0].mxu0 %v466
        %v657 = vpop.f32.mrb[0].mxu0
        %v658 = vadd.f32 0.0, %v657
        %v659 = vpop.f32.mrb[0].mxu0
        %v660 = vpop.f32.mrb[0].mxu0
        %v661 = vadd.f32 0.0, %v660
        %v662 = vpop.f32.mrb[0].mxu0
        %663 = vmatprep.mubr.bf16.mxu0 0
        %664 = vmatmul.mubr.bf16.gmra.mrb[0].mxu0 %v467
        %v665 = vpop.f32.mrb[0].mxu0
        %v666 = vadd.f32 0.0, %v665
        %v667 = vpop.f32.mrb[0].mxu0
        %v668 = vpop.f32.mrb[0].mxu0
        %v669 = vadd.f32 0.0, %v668
        %v670 = vpop.f32.mrb[0].mxu0
        %671 = vmatprep.mubr.bf16.mxu0 0
        %672 = vmatmul.mubr.bf16.gmra.mrb[0].mxu0 %v468
        %v673 = vpop.f32.mrb[0].mxu0
        %v674 = vadd.f32 0.0, %v673
        %v675 = vpop.f32.mrb[0].mxu0
        %v676 = vpop.f32.mrb[0].mxu0
        %v677 = vadd.f32 0.0, %v676
        %v678 = vpop.f32.mrb[0].mxu0
        %679 = vmatprep.mubr.bf16.mxu0 0
        %680 = vmatmul.mubr.bf16.gmra.mrb[0].mxu0 %v469
        %v681 = vpop.f32.mrb[0].mxu0
        %v682 = vadd.f32 0.0, %v681
        %v683 = vpop.f32.mrb[0].mxu0
        %v684 = vpop.f32.mrb[0].mxu0
        %v685 = vadd.f32 0.0, %v684
        %v686 = vpop.f32.mrb[0].mxu0
        %687 = vmatprep.mubr.bf16.mxu0 0
        %688 = vmatmul.mubr.bf16.gmra.mrb[0].mxu0 %v470
        %v689 = vpop.f32.mrb[0].mxu0
        %v690 = vadd.f32 0.0, %v689
        %v691 = vpop.f32.mrb[0].mxu0
        %v692 = vpop.f32.mrb[0].mxu0
        %v693 = vadd.f32 0.0, %v692
        %v694 = vpop.f32.mrb[0].mxu0
        %695 = vdwg.mxu0
        %v696 = vld [vmem:[%s4] sm:$0x1]
        %v698 = vlaneseq
        %v699 = vshrl.u32 %v698, 7
        %v700 = vsub.s32 0, %v699
        %v701 = vrot.slane %v696, %v700
        %v703 = vmul.f32 %v570, %v701
        %v704 = vmul.f32 %v573, %v701
        %v705 = vmul.f32 %v578, %v701
        %v706 = vmul.f32 %v581, %v701
        %v707 = vmul.f32 %v586, %v701
        %v708 = vmul.f32 %v589, %v701
        %v709 = vmul.f32 %v594, %v701
        %v710 = vmul.f32 %v597, %v701
        %v711 = vmul.f32 %v602, %v701
        %v712 = vmul.f32 %v605, %v701
        %v713 = vmul.f32 %v610, %v701
        %v714 = vmul.f32 %v613, %v701
        %v715 = vmul.f32 %v618, %v701
        %v716 = vmul.f32 %v621, %v701
        %v717 = vmul.f32 %v626, %v701
        %v718 = vmul.f32 %v629, %v701
        %v719 = vmul.f32 %v634, %v701
        %v720 = vmul.f32 %v637, %v701
        %v721 = vmul.f32 %v642, %v701
        %v722 = vmul.f32 %v645, %v701
        %v723 = vmul.f32 %v650, %v701
        %v724 = vmul.f32 %v653, %v701
        %v725 = vmul.f32 %v658, %v701
        %v726 = vmul.f32 %v661, %v701
        %v727 = vmul.f32 %v666, %v701
        %v728 = vmul.f32 %v669, %v701
        %v729 = vmul.f32 %v674, %v701
        %v730 = vmul.f32 %v677, %v701
        %v731 = vmul.f32 %v682, %v701
        %v732 = vmul.f32 %v685, %v701
        %v733 = vmul.f32 %v690, %v701
        %v734 = vmul.f32 %v693, %v701
        %v735 = vld [vmem:[%s5] sm:$0x1]
        %v737 = vlaneseq
        %v738 = vshrl.u32 %v737, 7
        %v739 = vsub.s32 0, %v738
        %v740 = vrot.slane %v735, %v739
        %v742 = vadd.f32 %v703, %v740
        %v743 = vadd.f32 %v704, %v740
        %v744 = vadd.f32 %v705, %v740
        %v745 = vadd.f32 %v706, %v740
        %v746 = vadd.f32 %v707, %v740
        %v747 = vadd.f32 %v708, %v740
        %v748 = vadd.f32 %v709, %v740
        %v749 = vadd.f32 %v710, %v740
        %v750 = vadd.f32 %v711, %v740
        %v751 = vadd.f32 %v712, %v740
        %v752 = vadd.f32 %v713, %v740
        %v753 = vadd.f32 %v714, %v740
        %v754 = vadd.f32 %v715, %v740
        %v755 = vadd.f32 %v716, %v740
        %v756 = vadd.f32 %v717, %v740
        %v757 = vadd.f32 %v718, %v740
        %v758 = vadd.f32 %v719, %v740
        %v759 = vadd.f32 %v720, %v740
        %v760 = vadd.f32 %v721, %v740
        %v761 = vadd.f32 %v722, %v740
        %v762 = vadd.f32 %v723, %v740
        %v763 = vadd.f32 %v724, %v740
        %v764 = vadd.f32 %v725, %v740
        %v765 = vadd.f32 %v726, %v740
        %v766 = vadd.f32 %v727, %v740
        %v767 = vadd.f32 %v728, %v740
        %v768 = vadd.f32 %v729, %v740
        %v769 = vadd.f32 %v730, %v740
        %v770 = vadd.f32 %v731, %v740
        %v771 = vadd.f32 %v732, %v740
        %v772 = vadd.f32 %v733, %v740
        %v773 = vadd.f32 %v734, %v740
        %v774 = vmax.f32 %v742, 0.0
        %v775 = vmax.f32 %v743, 0.0
        %v776 = vmax.f32 %v744, 0.0
        %v777 = vmax.f32 %v745, 0.0
        %v778 = vmax.f32 %v746, 0.0
        %v779 = vmax.f32 %v747, 0.0
        %v780 = vmax.f32 %v748, 0.0
        %v781 = vmax.f32 %v749, 0.0
        %v782 = vmax.f32 %v750, 0.0
        %v783 = vmax.f32 %v751, 0.0
        %v784 = vmax.f32 %v752, 0.0
        %v785 = vmax.f32 %v753, 0.0
        %v786 = vmax.f32 %v754, 0.0
        %v787 = vmax.f32 %v755, 0.0
        %v788 = vmax.f32 %v756, 0.0
        %v789 = vmax.f32 %v757, 0.0
        %v790 = vmax.f32 %v758, 0.0
        %v791 = vmax.f32 %v759, 0.0
        %v792 = vmax.f32 %v760, 0.0
        %v793 = vmax.f32 %v761, 0.0
        %v794 = vmax.f32 %v762, 0.0
        %v795 = vmax.f32 %v763, 0.0
        %v796 = vmax.f32 %v764, 0.0
        %v797 = vmax.f32 %v765, 0.0
        %v798 = vmax.f32 %v766, 0.0
        %v799 = vmax.f32 %v767, 0.0
        %v800 = vmax.f32 %v768, 0.0
        %v801 = vmax.f32 %v769, 0.0
        %v802 = vmax.f32 %v770, 0.0
        %v803 = vmax.f32 %v771, 0.0
        %v804 = vmax.f32 %v772, 0.0
        %v805 = vmax.f32 %v773, 0.0
        %v806 = vlaneseq
        %v807 = vshrl.u32 %v806, 7
        %v808 = vadd.s32 %v807, 8
        %v809 = vadd.s32 %v807, 4294967295
        %v810 = vadd.s32 %v808, 4294967295
        %vm811 = vcmp.ge.s32.totalorder %v809, 0
        %vm812 = vcmp.ge.s32.totalorder %v810, 0
        %vm813 = vcmp.le.s32.totalorder %v809, 15
        %vm814 = vcmp.le.s32.totalorder %v810, 15
        %vm815 = vmand %vm811, %vm813
        %vm816 = vmand %vm812, %vm814
        %v817 = vrot.slane %v774, 7
        %v818 = vrot.slane %v775, 7
        %v819 = vrot.slane %v776, 7
        %v820 = vrot.slane %v777, 7
        %v821 = vrot.slane %v778, 7
        %v822 = vrot.slane %v779, 7
        %v823 = vrot.slane %v780, 7
        %v824 = vrot.slane %v781, 7
        %v825 = vrot.slane %v782, 7
        %v826 = vrot.slane %v783, 7
        %v827 = vrot.slane %v784, 7
        %v828 = vrot.slane %v785, 7
        %v829 = vrot.slane %v786, 7
        %v830 = vrot.slane %v787, 7
        %v831 = vrot.slane %v788, 7
        %v832 = vrot.slane %v789, 7
        %v833 = vrot.slane %v790, 7
        %v834 = vrot.slane %v791, 7
        %v835 = vrot.slane %v792, 7
        %v836 = vrot.slane %v793, 7
        %v837 = vrot.slane %v794, 7
        %v838 = vrot.slane %v795, 7
        %v839 = vrot.slane %v796, 7
        %v840 = vrot.slane %v797, 7
        %v841 = vrot.slane %v798, 7
        %v842 = vrot.slane %v799, 7
        %v843 = vrot.slane %v800, 7
        %v844 = vrot.slane %v801, 7
        %v845 = vrot.slane %v802, 7
        %v846 = vrot.slane %v803, 7
        %v847 = vrot.slane %v805, 7
        %vm848 = vcmp.lt.s32.totalorder %v807, 1
        %v849 = vsel %vm848, %v845, %v846
        %v850 = vsel %vm848, %v844, %v845
        %v851 = vsel %vm848, %v843, %v844
        %v852 = vsel %vm848, %v842, %v843
        %v853 = vsel %vm848, %v841, %v842
        %v854 = vsel %vm848, %v840, %v841
        %v855 = vsel %vm848, %v839, %v840
        %v856 = vsel %vm848, %v838, %v839
        %v857 = vsel %vm848, %v837, %v838
        %v858 = vsel %vm848, %v836, %v837
        %v859 = vsel %vm848, %v835, %v836
        %v860 = vsel %vm848, %v834, %v835
        %v861 = vsel %vm848, %v833, %v834
        %v862 = vsel %vm848, %v832, %v833
        %v863 = vsel %vm848, %v831, %v832
        %v864 = vsel %vm848, %v830, %v831
        %v865 = vsel %vm848, %v829, %v830
        %v866 = vsel %vm848, %v828, %v829
        %v867 = vsel %vm848, %v827, %v828
        %v868 = vsel %vm848, %v826, %v827
        %v869 = vsel %vm848, %v825, %v826
        %v870 = vsel %vm848, %v824, %v825
        %v871 = vsel %vm848, %v823, %v824
        %v872 = vsel %vm848, %v822, %v823
        %v873 = vsel %vm848, %v821, %v822
        %v874 = vsel %vm848, %v820, %v821
        %v875 = vsel %vm848, %v819, %v820
        %v876 = vsel %vm848, %v818, %v819
        %v877 = vsel %vm848, %v817, %v818
        %v878 = vsel %vm848, %v847, %v817
        %v879 = vsel %vm815, %v878, 0.0
        %v880 = vsel %vm816, %v877, 0.0
        %v881 = vsel %vm815, %v876, 0.0
        %v882 = vsel %vm816, %v875, 0.0
        %v883 = vsel %vm815, %v874, 0.0
        %v884 = vsel %vm816, %v873, 0.0
        %v885 = vsel %vm815, %v872, 0.0
        %v886 = vsel %vm816, %v871, 0.0
        %v887 = vsel %vm815, %v870, 0.0
        %v888 = vsel %vm816, %v869, 0.0
        %v889 = vsel %vm815, %v868, 0.0
        %v890 = vsel %vm816, %v867, 0.0
        %v891 = vsel %vm815, %v866, 0.0
        %v892 = vsel %vm816, %v865, 0.0
        %v893 = vsel %vm815, %v864, 0.0
        %v894 = vsel %vm816, %v863, 0.0
        %v895 = vsel %vm815, %v862, 0.0
        %v896 = vsel %vm816, %v861, 0.0
        %v897 = vsel %vm815, %v860, 0.0
        %v898 = vsel %vm816, %v859, 0.0
        %v899 = vsel %vm815, %v858, 0.0
        %v900 = vsel %vm816, %v857, 0.0
        %v901 = vsel %vm815, %v856, 0.0
        %v902 = vsel %vm816, %v855, 0.0
        %v903 = vsel %vm815, %v854, 0.0
        %v904 = vsel %vm816, %v853, 0.0
        %v905 = vsel %vm815, %v852, 0.0
        %v906 = vsel %vm816, %v851, 0.0
        %v907 = vsel %vm815, %v850, 0.0
        %v908 = vsel %vm816, %v849, 0.0
        %vm909 = vcmp.ge.s32.totalorder %v807, 0
        %vm910 = vcmp.ge.s32.totalorder %v808, 0
        %vm911 = vcmp.le.s32.totalorder %v807, 15
        %vm912 = vcmp.le.s32.totalorder %v808, 15
        %vm913 = vmand %vm909, %vm911
        %vm914 = vmand %vm910, %vm912
        %v915 = vsel %vm913, %v774, 0.0
        %v916 = vsel %vm914, %v775, 0.0
        %v917 = vsel %vm913, %v776, 0.0
        %v918 = vsel %vm914, %v777, 0.0
        %v919 = vsel %vm913, %v778, 0.0
        %v920 = vsel %vm914, %v779, 0.0
        %v921 = vsel %vm913, %v780, 0.0
        %v922 = vsel %vm914, %v781, 0.0
        %v923 = vsel %vm913, %v782, 0.0
        %v924 = vsel %vm914, %v783, 0.0
        %v925 = vsel %vm913, %v784, 0.0
        %v926 = vsel %vm914, %v785, 0.0
        %v927 = vsel %vm913, %v786, 0.0
        %v928 = vsel %vm914, %v787, 0.0
        %v929 = vsel %vm913, %v788, 0.0
        %v930 = vsel %vm914, %v789, 0.0
        %v931 = vsel %vm913, %v790, 0.0
        %v932 = vsel %vm914, %v791, 0.0
        %v933 = vsel %vm913, %v792, 0.0
        %v934 = vsel %vm914, %v793, 0.0
        %v935 = vsel %vm913, %v794, 0.0
        %v936 = vsel %vm914, %v795, 0.0
        %v937 = vsel %vm913, %v796, 0.0
        %v938 = vsel %vm914, %v797, 0.0
        %v939 = vsel %vm913, %v798, 0.0
        %v940 = vsel %vm914, %v799, 0.0
        %v941 = vsel %vm913, %v800, 0.0
        %v942 = vsel %vm914, %v801, 0.0
        %v943 = vsel %vm913, %v802, 0.0
        %v944 = vsel %vm914, %v803, 0.0
        %v945 = vadd.s32 %v807, 1
        %v946 = vadd.s32 %v808, 1
        %vm947 = vcmp.ge.s32.totalorder %v945, 0
        %vm948 = vcmp.ge.s32.totalorder %v946, 0
        %vm949 = vcmp.le.s32.totalorder %v945, 15
        %vm950 = vcmp.le.s32.totalorder %v946, 15
        %vm951 = vmand %vm947, %vm949
        %vm952 = vmand %vm948, %vm950
        %v953 = vrot.slane %v774, 1
        %v954 = vrot.slane %v775, 1
        %v955 = vrot.slane %v776, 1
        %v956 = vrot.slane %v777, 1
        %v957 = vrot.slane %v778, 1
        %v958 = vrot.slane %v779, 1
        %v959 = vrot.slane %v780, 1
        %v960 = vrot.slane %v781, 1
        %v961 = vrot.slane %v782, 1
        %v962 = vrot.slane %v783, 1
        %v963 = vrot.slane %v784, 1
        %v964 = vrot.slane %v785, 1
        %v965 = vrot.slane %v786, 1
        %v966 = vrot.slane %v787, 1
        %v967 = vrot.slane %v788, 1
        %v968 = vrot.slane %v789, 1
        %v969 = vrot.slane %v790, 1
        %v970 = vrot.slane %v791, 1
        %v971 = vrot.slane %v792, 1
        %v972 = vrot.slane %v793, 1
        %v973 = vrot.slane %v794, 1
        %v974 = vrot.slane %v795, 1
        %v975 = vrot.slane %v796, 1
        %v976 = vrot.slane %v797, 1
        %v977 = vrot.slane %v798, 1
        %v978 = vrot.slane %v799, 1
        %v979 = vrot.slane %v800, 1
        %v980 = vrot.slane %v801, 1
        %v981 = vrot.slane %v802, 1
        %v982 = vrot.slane %v803, 1
        %v983 = vrot.slane %v804, 1
        %vm984 = vcmp.lt.s32.totalorder %v807, 7
        %v985 = vsel %vm984, %v982, %v983
        %v986 = vsel %vm984, %v981, %v982
        %v987 = vsel %vm984, %v980, %v981
        %v988 = vsel %vm984, %v979, %v980
        %v989 = vsel %vm984, %v978, %v979
        %v990 = vsel %vm984, %v977, %v978
        %v991 = vsel %vm984, %v976, %v977
        %v992 = vsel %vm984, %v975, %v976
        %v993 = vsel %vm984, %v974, %v975
        %v994 = vsel %vm984, %v973, %v974
        %v995 = vsel %vm984, %v972, %v973
        %v996 = vsel %vm984, %v971, %v972
        %v997 = vsel %vm984, %v970, %v971
        %v998 = vsel %vm984, %v969, %v970
        %v999 = vsel %vm984, %v968, %v969
        %v1000 = vsel %vm984, %v967, %v968
        %v1001 = vsel %vm984, %v966, %v967
        %v1002 = vsel %vm984, %v965, %v966
        %v1003 = vsel %vm984, %v964, %v965
        %v1004 = vsel %vm984, %v963, %v964
        %v1005 = vsel %vm984, %v962, %v963
        %v1006 = vsel %vm984, %v961, %v962
        %v1007 = vsel %vm984, %v960, %v961
        %v1008 = vsel %vm984, %v959, %v960
        %v1009 = vsel %vm984, %v958, %v959
        %v1010 = vsel %vm984, %v957, %v958
        %v1011 = vsel %vm984, %v956, %v957
        %v1012 = vsel %vm984, %v955, %v956
        %v1013 = vsel %vm984, %v954, %v955
        %v1014 = vsel %vm984, %v953, %v954
        %v1015 = vsel %vm951, %v1014, 0.0
        %v1016 = vsel %vm952, %v1013, 0.0
        %v1017 = vsel %vm951, %v1012, 0.0
        %v1018 = vsel %vm952, %v1011, 0.0
        %v1019 = vsel %vm951, %v1010, 0.0
        %v1020 = vsel %vm952, %v1009, 0.0
        %v1021 = vsel %vm951, %v1008, 0.0
        %v1022 = vsel %vm952, %v1007, 0.0
        %v1023 = vsel %vm951, %v1006, 0.0
        %v1024 = vsel %vm952, %v1005, 0.0
        %v1025 = vsel %vm951, %v1004, 0.0
        %v1026 = vsel %vm952, %v1003, 0.0
        %v1027 = vsel %vm951, %v1002, 0.0
        %v1028 = vsel %vm952, %v1001, 0.0
        %v1029 = vsel %vm951, %v1000, 0.0
        %v1030 = vsel %vm952, %v999, 0.0
        %v1031 = vsel %vm951, %v998, 0.0
        %v1032 = vsel %vm952, %v997, 0.0
        %v1033 = vsel %vm951, %v996, 0.0
        %v1034 = vsel %vm952, %v995, 0.0
        %v1035 = vsel %vm951, %v994, 0.0
        %v1036 = vsel %vm952, %v993, 0.0
        %v1037 = vsel %vm951, %v992, 0.0
        %v1038 = vsel %vm952, %v991, 0.0
        %v1039 = vsel %vm951, %v990, 0.0
        %v1040 = vsel %vm952, %v989, 0.0
        %v1041 = vsel %vm951, %v988, 0.0
        %v1042 = vsel %vm952, %v987, 0.0
        %v1043 = vsel %vm951, %v986, 0.0
        %v1044 = vsel %vm952, %v985, 0.0
        %v1045 = vrot.slane %v804, 7
        %v1046 = vsel %vm848, %v1045, %v847
        %v1047 = vsel %vm848, %v846, %v1045
        %v1048 = vsel %vm815, %v1047, 0.0
        %v1049 = vsel %vm816, %v1046, 0.0
        %v1050 = vsel %vm913, %v804, 0.0
        %v1051 = vsel %vm914, %v805, 0.0
        %v1052 = vrot.slane %v805, 1
        %v1053 = vsel %vm984, %v983, %v1052
        %v1054 = vsel %vm984, %v1052, %v953
        %v1055 = vsel %vm951, %v1053, 0.0
        %v1056 = vsel %vm952, %v1054, 0.0
        %v1057 = vpack.c.bf16 0.0, 0.0
        %v1058 = vpack.c.bf16 %v880, %v879
        %v1059 = vpack.c.bf16 %v916, %v915
        %v1060 = vpack.c.bf16 %v1016, %v1015
        %v1061 = vpack.c.bf16 %v882, %v881
        %v1062 = vpack.c.bf16 %v918, %v917
        %v1063 = vpack.c.bf16 %v1018, %v1017
        %v1064 = vpack.c.bf16 %v884, %v883
        %v1065 = vpack.c.bf16 %v920, %v919
        %v1066 = vpack.c.bf16 %v1020, %v1019
        %v1067 = vpack.c.bf16 %v886, %v885
        %v1068 = vpack.c.bf16 %v922, %v921
        %v1069 = vpack.c.bf16 %v1022, %v1021
        %v1070 = vpack.c.bf16 %v888, %v887
        %v1071 = vpack.c.bf16 %v924, %v923
        %v1072 = vpack.c.bf16 %v1024, %v1023
        %v1073 = vpack.c.bf16 %v890, %v889
        %v1074 = vpack.c.bf16 %v926, %v925
        %v1075 = vpack.c.bf16 %v1026, %v1025
        %v1076 = vpack.c.bf16 %v892, %v891
        %v1077 = vpack.c.bf16 %v928, %v927
        %v1078 = vpack.c.bf16 %v1028, %v1027
        %v1079 = vpack.c.bf16 %v894, %v893
        %v1080 = vpack.c.bf16 %v930, %v929
        %v1081 = vpack.c.bf16 %v1030, %v1029
        %v1082 = vpack.c.bf16 %v896, %v895
        %v1083 = vpack.c.bf16 %v932, %v931
        %v1084 = vpack.c.bf16 %v1032, %v1031
        %v1085 = vpack.c.bf16 %v898, %v897
        %v1086 = vpack.c.bf16 %v934, %v933
        %v1087 = vpack.c.bf16 %v1034, %v1033
        %v1088 = vpack.c.bf16 %v900, %v899
        %v1089 = vpack.c.bf16 %v936, %v935
        %v1090 = vpack.c.bf16 %v1036, %v1035
        %v1091 = vpack.c.bf16 %v902, %v901
        %v1092 = vpack.c.bf16 %v938, %v937
        %v1093 = vpack.c.bf16 %v1038, %v1037
        %v1094 = vpack.c.bf16 %v904, %v903
        %v1095 = vpack.c.bf16 %v940, %v939
        %v1096 = vpack.c.bf16 %v1040, %v1039
        %v1097 = vpack.c.bf16 %v906, %v905
        %v1098 = vpack.c.bf16 %v942, %v941
        %v1099 = vpack.c.bf16 %v1042, %v1041
        %v1100 = vpack.c.bf16 %v908, %v907
        %v1101 = vpack.c.bf16 %v944, %v943
        %v1102 = vpack.c.bf16 %v1044, %v1043
        %v1103 = vpack.c.bf16 %v1049, %v1048
        %v1104 = vpack.c.bf16 %v1051, %v1050
        %v1105 = vpack.c.bf16 %v1056, %v1055
        %v1106 = vld [vmem:[#allocation7] sm:$0xf]
        %v1107 = vld [vmem:[#allocation7 + $0x4] sm:$0xf]
        %v1108 = vld [vmem:[#allocation7 + $0x8] sm:$0xf]
        %v1109 = vld [vmem:[#allocation7 + $0xc] sm:$0xf]
        %v1110 = vld [vmem:[#allocation7 + $0x10] sm:$0xf]
        %v1111 = vld [vmem:[#allocation7 + $0x14] sm:$0xf]
        %v1112 = vld [vmem:[#allocation7 + $0x18] sm:$0xf]
        %v1113 = vld [vmem:[#allocation7 + $0x1c] sm:$0xf]
        %v1114 = vld [vmem:[#allocation7 + $0x20] sm:$0xf]
        %v1115 = vld [vmem:[#allocation7 + $0x24] sm:$0xf]
        %v1116 = vld [vmem:[#allocation7 + $0x28] sm:$0xf]
        %v1117 = vld [vmem:[#allocation7 + $0x2c] sm:$0xf]
        %v1118 = vld [vmem:[#allocation7 + $0x30] sm:$0xf]
        %v1119 = vld [vmem:[#allocation7 + $0x34] sm:$0xf]
        %v1120 = vld [vmem:[#allocation7 + $0x38] sm:$0xf]
        %v1121 = vld [vmem:[#allocation7 + $0x3c] sm:$0xf]
        %v1122 = vld [vmem:[#allocation7 + $0x40] sm:$0xf]
        %v1123 = vld [vmem:[#allocation7 + $0x44] sm:$0xf]
        %v1124 = vld [vmem:[#allocation7 + $0x48] sm:$0xf]
        %v1125 = vld [vmem:[#allocation7 + $0x4c] sm:$0xf]
        %v1126 = vld [vmem:[#allocation7 + $0x50] sm:$0xf]
        %v1127 = vld [vmem:[#allocation7 + $0x54] sm:$0xf]
        %v1128 = vld [vmem:[#allocation7 + $0x58] sm:$0xf]
        %v1129 = vld [vmem:[#allocation7 + $0x5c] sm:$0xf]
        %v1130 = vld [vmem:[#allocation7 + $0x60] sm:$0xf]
        %v1131 = vld [vmem:[#allocation7 + $0x64] sm:$0xf]
        %v1132 = vld [vmem:[#allocation7 + $0x68] sm:$0xf]
        %v1133 = vld [vmem:[#allocation7 + $0x6c] sm:$0xf]
        %v1134 = vld [vmem:[#allocation7 + $0x70] sm:$0xf]
        %v1135 = vld [vmem:[#allocation7 + $0x74] sm:$0xf]
        %v1136 = vld [vmem:[#allocation7 + $0x78] sm:$0xf]
        %v1137 = vld [vmem:[#allocation7 + $0x7c] sm:$0xf]
        %v1138 = vld [vmem:[#allocation7 + $0x80] sm:$0xf]
        %v1139 = vld [vmem:[#allocation7 + $0x84] sm:$0xf]
        %v1140 = vld [vmem:[#allocation7 + $0x88] sm:$0xf]
        %v1141 = vld [vmem:[#allocation7 + $0x8c] sm:$0xf]
        %v1142 = vld [vmem:[#allocation7 + $0x90] sm:$0xf]
        %v1143 = vld [vmem:[#allocation7 + $0x94] sm:$0xf]
        %v1144 = vld [vmem:[#allocation7 + $0x98] sm:$0xf]
        %v1145 = vld [vmem:[#allocation7 + $0x9c] sm:$0xf]
        %v1146 = vld [vmem:[#allocation7 + $0xa0] sm:$0xf]
        %v1147 = vld [vmem:[#allocation7 + $0xa4] sm:$0xf]
        %v1148 = vld [vmem:[#allocation7 + $0xa8] sm:$0xf]
        %v1149 = vld [vmem:[#allocation7 + $0xac] sm:$0xf]
        %v1150 = vld [vmem:[#allocation7 + $0xb0] sm:$0xf]
        %v1151 = vld [vmem:[#allocation7 + $0xb4] sm:$0xf]
        %v1152 = vld [vmem:[#allocation7 + $0xb8] sm:$0xf]
        %v1153 = vld [vmem:[#allocation7 + $0xbc] sm:$0xf]
        %v1154 = vld [vmem:[#allocation7 + $0xc0] sm:$0xf]
        %v1155 = vld [vmem:[#allocation7 + $0xc4] sm:$0xf]
        %v1156 = vld [vmem:[#allocation7 + $0xc8] sm:$0xf]
        %v1157 = vld [vmem:[#allocation7 + $0xcc] sm:$0xf]
        %v1158 = vld [vmem:[#allocation7 + $0xd0] sm:$0xf]
        %v1159 = vld [vmem:[#allocation7 + $0xd4] sm:$0xf]
        %v1160 = vld [vmem:[#allocation7 + $0xd8] sm:$0xf]
        %v1161 = vld [vmem:[#allocation7 + $0xdc] sm:$0xf]
        %v1162 = vld [vmem:[#allocation7 + $0xe0] sm:$0xf]
        %v1163 = vld [vmem:[#allocation7 + $0xe4] sm:$0xf]
        %v1164 = vld [vmem:[#allocation7 + $0xe8] sm:$0xf]
        %v1165 = vld [vmem:[#allocation7 + $0xec] sm:$0xf]
        %v1166 = vld [vmem:[#allocation7 + $0xf0] sm:$0xf]
        %v1167 = vld [vmem:[#allocation7 + $0xf4] sm:$0xf]
        %v1168 = vld [vmem:[#allocation7 + $0xf8] sm:$0xf]
        %v1169 = vld [vmem:[#allocation7 + $0xfc] sm:$0xf]
        %v1170 = vld [vmem:[#allocation7 + $0x100] sm:$0xf]
        %v1171 = vld [vmem:[#allocation7 + $0x104] sm:$0xf]
        %v1172 = vld [vmem:[#allocation7 + $0x108] sm:$0xf]
        %v1173 = vld [vmem:[#allocation7 + $0x10c] sm:$0xf]
        %v1174 = vld [vmem:[#allocation7 + $0x110] sm:$0xf]
        %v1175 = vld [vmem:[#allocation7 + $0x114] sm:$0xf]
        %v1176 = vld [vmem:[#allocation7 + $0x118] sm:$0xf]
        %v1177 = vld [vmem:[#allocation7 + $0x11c] sm:$0xf]
        %v1178 = vld [vmem:[#allocation7 + $0x120] sm:$0xf]
        %v1179 = vld [vmem:[#allocation7 + $0x124] sm:$0xf]
        %v1180 = vld [vmem:[#allocation7 + $0x128] sm:$0xf]
        %v1181 = vld [vmem:[#allocation7 + $0x12c] sm:$0xf]
        %v1182 = vld [vmem:[#allocation7 + $0x130] sm:$0xf]
        %v1183 = vld [vmem:[#allocation7 + $0x134] sm:$0xf]
        %v1184 = vld [vmem:[#allocation7 + $0x138] sm:$0xf]
        %v1185 = vld [vmem:[#allocation7 + $0x13c] sm:$0xf]
        %v1186 = vld [vmem:[#allocation7 + $0x140] sm:$0xf]
        %v1187 = vld [vmem:[#allocation7 + $0x144] sm:$0xf]
        %v1188 = vld [vmem:[#allocation7 + $0x148] sm:$0xf]
        %v1189 = vld [vmem:[#allocation7 + $0x14c] sm:$0xf]
        %v1190 = vld [vmem:[#allocation7 + $0x150] sm:$0xf]
        %v1191 = vld [vmem:[#allocation7 + $0x154] sm:$0xf]
        %v1192 = vld [vmem:[#allocation7 + $0x158] sm:$0xf]
        %v1193 = vld [vmem:[#allocation7 + $0x15c] sm:$0xf]
        %v1194 = vld [vmem:[#allocation7 + $0x160] sm:$0xf]
        %v1195 = vld [vmem:[#allocation7 + $0x164] sm:$0xf]
        %v1196 = vld [vmem:[#allocation7 + $0x168] sm:$0xf]
        %v1197 = vld [vmem:[#allocation7 + $0x16c] sm:$0xf]
        %v1198 = vld [vmem:[#allocation7 + $0x170] sm:$0xf]
        %v1199 = vld [vmem:[#allocation7 + $0x174] sm:$0xf]
        %v1200 = vld [vmem:[#allocation7 + $0x178] sm:$0xf]
        %v1201 = vld [vmem:[#allocation7 + $0x17c] sm:$0xf]
        %v1202 = vld [vmem:[#allocation7 + $0x180] sm:$0xf]
        %v1203 = vld [vmem:[#allocation7 + $0x184] sm:$0xf]
        %v1204 = vld [vmem:[#allocation7 + $0x188] sm:$0xf]
        %v1205 = vld [vmem:[#allocation7 + $0x18c] sm:$0xf]
        %v1206 = vld [vmem:[#allocation7 + $0x190] sm:$0xf]
        %v1207 = vld [vmem:[#allocation7 + $0x194] sm:$0xf]
        %v1208 = vld [vmem:[#allocation7 + $0x198] sm:$0xf]
        %v1209 = vld [vmem:[#allocation7 + $0x19c] sm:$0xf]
        %v1210 = vld [vmem:[#allocation7 + $0x1a0] sm:$0xf]
        %v1211 = vld [vmem:[#allocation7 + $0x1a4] sm:$0xf]
        %v1212 = vld [vmem:[#allocation7 + $0x1a8] sm:$0xf]
        %v1213 = vld [vmem:[#allocation7 + $0x1ac] sm:$0xf]
        %v1214 = vld [vmem:[#allocation7 + $0x1b0] sm:$0xf]
        %v1215 = vld [vmem:[#allocation7 + $0x1b4] sm:$0xf]
        %v1216 = vld [vmem:[#allocation7 + $0x1b8] sm:$0xf]
        %v1217 = vld [vmem:[#allocation7 + $0x1bc] sm:$0xf]
        %v1218 = vld [vmem:[#allocation7 + $0x1c0] sm:$0xf]
        %v1219 = vld [vmem:[#allocation7 + $0x1c4] sm:$0xf]
        %v1220 = vld [vmem:[#allocation7 + $0x1c8] sm:$0xf]
        %v1221 = vld [vmem:[#allocation7 + $0x1cc] sm:$0xf]
        %v1222 = vld [vmem:[#allocation7 + $0x1d0] sm:$0xf]
        %v1223 = vld [vmem:[#allocation7 + $0x1d4] sm:$0xf]
        %v1224 = vld [vmem:[#allocation7 + $0x1d8] sm:$0xf]
        %v1225 = vld [vmem:[#allocation7 + $0x1dc] sm:$0xf]
        %v1226 = vld [vmem:[#allocation7 + $0x1e0] sm:$0xf]
        %v1227 = vld [vmem:[#allocation7 + $0x1e4] sm:$0xf]
        %v1228 = vld [vmem:[#allocation7 + $0x1e8] sm:$0xf]
        %v1229 = vld [vmem:[#allocation7 + $0x1ec] sm:$0xf]
        %v1230 = vld [vmem:[#allocation7 + $0x1f0] sm:$0xf]
        %v1231 = vld [vmem:[#allocation7 + $0x1f4] sm:$0xf]
        %v1232 = vld [vmem:[#allocation7 + $0x1f8] sm:$0xf]
        %v1233 = vld [vmem:[#allocation7 + $0x1fc] sm:$0xf]
        %v1234 = vld [vmem:[#allocation7 + $0x200] sm:$0xf]
        %v1235 = vld [vmem:[#allocation7 + $0x204] sm:$0xf]
        %v1236 = vld [vmem:[#allocation7 + $0x208] sm:$0xf]
        %v1237 = vld [vmem:[#allocation7 + $0x20c] sm:$0xf]
        %v1238 = vld [vmem:[#allocation7 + $0x210] sm:$0xf]
        %v1239 = vld [vmem:[#allocation7 + $0x214] sm:$0xf]
        %v1240 = vld [vmem:[#allocation7 + $0x218] sm:$0xf]
        %v1241 = vld [vmem:[#allocation7 + $0x21c] sm:$0xf]
        %v1242 = vld [vmem:[#allocation7 + $0x220] sm:$0xf]
        %v1243 = vld [vmem:[#allocation7 + $0x224] sm:$0xf]
        %v1244 = vld [vmem:[#allocation7 + $0x228] sm:$0xf]
        %v1245 = vld [vmem:[#allocation7 + $0x22c] sm:$0xf]
        %v1246 = vld [vmem:[#allocation7 + $0x230] sm:$0xf]
        %v1247 = vld [vmem:[#allocation7 + $0x234] sm:$0xf]
        %v1248 = vld [vmem:[#allocation7 + $0x238] sm:$0xf]
        %v1249 = vld [vmem:[#allocation7 + $0x23c] sm:$0xf]
        %v1394 = vunpack.c.l.b16 %v1106
        %v1395 = vunpack.c.l.b16 %v1107
        %v1396 = vunpack.c.l.b16 %v1108
        %v1397 = vunpack.c.l.b16 %v1109
        %v1398 = vunpack.c.l.b16 %v1110
        %v1399 = vunpack.c.l.b16 %v1111
        %v1400 = vunpack.c.l.b16 %v1112
        %v1401 = vunpack.c.l.b16 %v1113
        %v1402 = vunpack.c.l.b16 %v1114
        %v1403 = vunpack.c.l.b16 %v1115
        %v1404 = vunpack.c.l.b16 %v1116
        %v1405 = vunpack.c.l.b16 %v1117
        %v1406 = vunpack.c.l.b16 %v1118
        %v1407 = vunpack.c.l.b16 %v1119
        %v1408 = vunpack.c.l.b16 %v1120
        %v1409 = vunpack.c.l.b16 %v1121
        %v1410 = vunpack.c.l.b16 %v1122
        %v1411 = vunpack.c.l.b16 %v1123
        %v1412 = vunpack.c.l.b16 %v1124
        %v1413 = vunpack.c.l.b16 %v1125
        %v1414 = vunpack.c.l.b16 %v1126
        %v1415 = vunpack.c.l.b16 %v1127
        %v1416 = vunpack.c.l.b16 %v1128
        %v1417 = vunpack.c.l.b16 %v1129
        %v1418 = vunpack.c.l.b16 %v1130
        %v1419 = vunpack.c.l.b16 %v1131
        %v1420 = vunpack.c.l.b16 %v1132
        %v1421 = vunpack.c.l.b16 %v1133
        %v1422 = vunpack.c.l.b16 %v1134
        %v1423 = vunpack.c.l.b16 %v1135
        %v1424 = vunpack.c.l.b16 %v1136
        %v1425 = vunpack.c.l.b16 %v1137
        %v1426 = vunpack.c.l.b16 %v1138
        %v1427 = vunpack.c.l.b16 %v1139
        %v1428 = vunpack.c.l.b16 %v1140
        %v1429 = vunpack.c.l.b16 %v1141
        %v1430 = vunpack.c.l.b16 %v1142
        %v1431 = vunpack.c.l.b16 %v1143
        %v1432 = vunpack.c.l.b16 %v1144
        %v1433 = vunpack.c.l.b16 %v1145
        %v1434 = vunpack.c.l.b16 %v1146
        %v1435 = vunpack.c.l.b16 %v1147
        %v1436 = vunpack.c.l.b16 %v1148
        %v1437 = vunpack.c.l.b16 %v1149
        %v1438 = vunpack.c.l.b16 %v1150
        %v1439 = vunpack.c.l.b16 %v1151
        %v1440 = vunpack.c.l.b16 %v1152
        %v1441 = vunpack.c.l.b16 %v1153
        %v1442 = vunpack.c.l.b16 %v1154
        %v1443 = vunpack.c.l.b16 %v1155
        %v1444 = vunpack.c.l.b16 %v1156
        %v1445 = vunpack.c.l.b16 %v1157
        %v1446 = vunpack.c.l.b16 %v1158
        %v1447 = vunpack.c.l.b16 %v1159
        %v1448 = vunpack.c.l.b16 %v1160
        %v1449 = vunpack.c.l.b16 %v1161
        %v1450 = vunpack.c.l.b16 %v1162
        %v1451 = vunpack.c.l.b16 %v1163
        %v1452 = vunpack.c.l.b16 %v1164
        %v1453 = vunpack.c.l.b16 %v1165
        %v1454 = vunpack.c.l.b16 %v1166
        %v1455 = vunpack.c.l.b16 %v1167
        %v1456 = vunpack.c.l.b16 %v1168
        %v1457 = vunpack.c.l.b16 %v1169
        %v1458 = vunpack.c.l.b16 %v1170
        %v1459 = vunpack.c.l.b16 %v1171
        %v1460 = vunpack.c.l.b16 %v1172
        %v1461 = vunpack.c.l.b16 %v1173
        %v1462 = vunpack.c.l.b16 %v1174
        %v1463 = vunpack.c.l.b16 %v1175
        %v1464 = vunpack.c.l.b16 %v1176
        %v1465 = vunpack.c.l.b16 %v1177
        %v1466 = vunpack.c.l.b16 %v1178
        %v1467 = vunpack.c.l.b16 %v1179
        %v1468 = vunpack.c.l.b16 %v1180
        %v1469 = vunpack.c.l.b16 %v1181
        %v1470 = vunpack.c.l.b16 %v1182
        %v1471 = vunpack.c.l.b16 %v1183
        %v1472 = vunpack.c.l.b16 %v1184
        %v1473 = vunpack.c.l.b16 %v1185
        %v1474 = vunpack.c.l.b16 %v1186
        %v1475 = vunpack.c.l.b16 %v1187
        %v1476 = vunpack.c.l.b16 %v1188
        %v1477 = vunpack.c.l.b16 %v1189
        %v1478 = vunpack.c.l.b16 %v1190
        %v1479 = vunpack.c.l.b16 %v1191
        %v1480 = vunpack.c.l.b16 %v1192
        %v1481 = vunpack.c.l.b16 %v1193
        %v1482 = vunpack.c.l.b16 %v1194
        %v1483 = vunpack.c.l.b16 %v1195
        %v1484 = vunpack.c.l.b16 %v1196
        %v1485 = vunpack.c.l.b16 %v1197
        %v1486 = vunpack.c.l.b16 %v1198
        %v1487 = vunpack.c.l.b16 %v1199
        %v1488 = vunpack.c.l.b16 %v1200
        %v1489 = vunpack.c.l.b16 %v1201
        %v1490 = vunpack.c.l.b16 %v1202
        %v1491 = vunpack.c.l.b16 %v1203
        %v1492 = vunpack.c.l.b16 %v1204
        %v1493 = vunpack.c.l.b16 %v1205
        %v1494 = vunpack.c.l.b16 %v1206
        %v1495 = vunpack.c.l.b16 %v1207
        %v1496 = vunpack.c.l.b16 %v1208
        %v1497 = vunpack.c.l.b16 %v1209
        %v1498 = vunpack.c.l.b16 %v1210
        %v1499 = vunpack.c.l.b16 %v1211
        %v1500 = vunpack.c.l.b16 %v1212
        %v1501 = vunpack.c.l.b16 %v1213
        %v1502 = vunpack.c.l.b16 %v1214
        %v1503 = vunpack.c.l.b16 %v1215
        %v1504 = vunpack.c.l.b16 %v1216
        %v1505 = vunpack.c.l.b16 %v1217
        %v1506 = vunpack.c.l.b16 %v1218
        %v1507 = vunpack.c.l.b16 %v1219
        %v1508 = vunpack.c.l.b16 %v1220
        %v1509 = vunpack.c.l.b16 %v1221
        %v1510 = vunpack.c.l.b16 %v1222
        %v1511 = vunpack.c.l.b16 %v1223
        %v1512 = vunpack.c.l.b16 %v1224
        %v1513 = vunpack.c.l.b16 %v1225
        %v1514 = vunpack.c.l.b16 %v1226
        %v1515 = vunpack.c.l.b16 %v1227
        %v1516 = vunpack.c.l.b16 %v1228
        %v1517 = vunpack.c.l.b16 %v1229
        %v1518 = vunpack.c.l.b16 %v1230
        %v1519 = vunpack.c.l.b16 %v1231
        %v1520 = vunpack.c.l.b16 %v1232
        %v1521 = vunpack.c.l.b16 %v1233
        %v1522 = vunpack.c.l.b16 %v1234
        %v1523 = vunpack.c.l.b16 %v1235
        %v1524 = vunpack.c.l.b16 %v1236
        %v1525 = vunpack.c.l.b16 %v1237
        %v1526 = vunpack.c.l.b16 %v1238
        %v1527 = vunpack.c.l.b16 %v1239
        %v1528 = vunpack.c.l.b16 %v1240
        %v1529 = vunpack.c.l.b16 %v1241
        %v1530 = vunpack.c.l.b16 %v1242
        %v1531 = vunpack.c.l.b16 %v1243
        %v1532 = vunpack.c.l.b16 %v1244
        %v1533 = vunpack.c.l.b16 %v1245
        %v1534 = vunpack.c.l.b16 %v1246
        %v1535 = vunpack.c.l.b16 %v1247
        %v1536 = vunpack.c.l.b16 %v1248
        %v1537 = vunpack.c.l.b16 %v1249
        %v1538 = vpack.c.b16 %v1395, %v1394
        %v1539 = vpack.c.b16 %v1397, %v1396
        %v1540 = vpack.c.b16 %v1399, %v1398
        %v1541 = vpack.c.b16 %v1401, %v1400
        %v1542 = vpack.c.b16 %v1403, %v1402
        %v1543 = vpack.c.b16 %v1405, %v1404
        %v1544 = vpack.c.b16 %v1407, %v1406
        %v1545 = vpack.c.b16 %v1409, %v1408
        %v1546 = vpack.c.b16 %v1411, %v1410
        %v1547 = vpack.c.b16 %v1413, %v1412
        %v1548 = vpack.c.b16 %v1415, %v1414
        %v1549 = vpack.c.b16 %v1417, %v1416
        %v1550 = vpack.c.b16 %v1419, %v1418
        %v1551 = vpack.c.b16 %v1421, %v1420
        %v1552 = vpack.c.b16 %v1423, %v1422
        %v1553 = vpack.c.b16 %v1425, %v1424
        %v1554 = vpack.c.b16 %v1427, %v1426
        %v1555 = vpack.c.b16 %v1429, %v1428
        %v1556 = vpack.c.b16 %v1431, %v1430
        %v1557 = vpack.c.b16 %v1433, %v1432
        %v1558 = vpack.c.b16 %v1435, %v1434
        %v1559 = vpack.c.b16 %v1437, %v1436
        %v1560 = vpack.c.b16 %v1439, %v1438
        %v1561 = vpack.c.b16 %v1441, %v1440
        %v1562 = vpack.c.b16 %v1443, %v1442
        %v1563 = vpack.c.b16 %v1445, %v1444
        %v1564 = vpack.c.b16 %v1447, %v1446
        %v1565 = vpack.c.b16 %v1449, %v1448
        %v1566 = vpack.c.b16 %v1451, %v1450
        %v1567 = vpack.c.b16 %v1453, %v1452
        %v1568 = vpack.c.b16 %v1455, %v1454
        %v1569 = vpack.c.b16 %v1457, %v1456
        %v1570 = vpack.c.b16 %v1459, %v1458
        %v1571 = vpack.c.b16 %v1461, %v1460
        %v1572 = vpack.c.b16 %v1463, %v1462
        %v1573 = vpack.c.b16 %v1465, %v1464
        %v1574 = vpack.c.b16 %v1467, %v1466
        %v1575 = vpack.c.b16 %v1469, %v1468
        %v1576 = vpack.c.b16 %v1471, %v1470
        %v1577 = vpack.c.b16 %v1473, %v1472
        %v1578 = vpack.c.b16 %v1475, %v1474
        %v1579 = vpack.c.b16 %v1477, %v1476
        %v1580 = vpack.c.b16 %v1479, %v1478
        %v1581 = vpack.c.b16 %v1481, %v1480
        %v1582 = vpack.c.b16 %v1483, %v1482
        %v1583 = vpack.c.b16 %v1485, %v1484
        %v1584 = vpack.c.b16 %v1487, %v1486
        %v1585 = vpack.c.b16 %v1489, %v1488
        %v1586 = vpack.c.b16 %v1491, %v1490
        %v1587 = vpack.c.b16 %v1493, %v1492
        %v1588 = vpack.c.b16 %v1495, %v1494
        %v1589 = vpack.c.b16 %v1497, %v1496
        %v1590 = vpack.c.b16 %v1499, %v1498
        %v1591 = vpack.c.b16 %v1501, %v1500
        %v1592 = vpack.c.b16 %v1503, %v1502
        %v1593 = vpack.c.b16 %v1505, %v1504
        %v1594 = vpack.c.b16 %v1507, %v1506
        %v1595 = vpack.c.b16 %v1509, %v1508
        %v1596 = vpack.c.b16 %v1511, %v1510
        %v1597 = vpack.c.b16 %v1513, %v1512
        %v1598 = vpack.c.b16 %v1515, %v1514
        %v1599 = vpack.c.b16 %v1517, %v1516
        %v1600 = vpack.c.b16 %v1519, %v1518
        %v1601 = vpack.c.b16 %v1521, %v1520
        %v1602 = vpack.c.b16 %v1523, %v1522
        %v1603 = vpack.c.b16 %v1525, %v1524
        %v1604 = vpack.c.b16 %v1527, %v1526
        %v1605 = vpack.c.b16 %v1529, %v1528
        %v1606 = vpack.c.b16 %v1531, %v1530
        %v1607 = vpack.c.b16 %v1533, %v1532
        %v1608 = vpack.c.b16 %v1535, %v1534
        %v1609 = vpack.c.b16 %v1537, %v1536
        %1682 = vmatprep.subr.bf16.mxu0 0
        %1683 = vmatpush1.bf16.msra.mxu0 %v1538
        %1684 = vmatprep.subr.bf16.mxu0 0
        %1685 = vmatpush1.bf16.msra.mxu0 %v1539
        %1686 = vmatprep.subr.bf16.mxu0 0
        %1687 = vmatpush1.bf16.msra.mxu0 %v1540
        %1688 = vmatprep.subr.bf16.mxu0 0
        %1689 = vmatpush1.bf16.msra.mxu0 %v1541
        %1690 = vmatprep.subr.bf16.mxu0 0
        %1691 = vmatpush1.bf16.msra.mxu0 %v1542
        %1692 = vmatprep.subr.bf16.mxu0 0
        %1693 = vmatpush1.bf16.msra.mxu0 %v1543
        %1694 = vmatprep.subr.bf16.mxu0 0
        %1695 = vmatpush1.bf16.msra.mxu0 %v1544
        %1696 = vmatprep.subr.bf16.mxu0 0
        %1697 = vmatpush1.bf16.msra.mxu0 %v1545
        %1698 = vmatprep.subr.bf16.mxu0 0
        %1699 = vmatpush1.bf16.msra.mxu0 %v1546
        %1700 = vmatprep.subr.bf16.mxu0 0
        %1701 = vmatpush1.bf16.msra.mxu0 %v1547
        %1702 = vmatprep.subr.bf16.mxu0 0
        %1703 = vmatpush1.bf16.msra.mxu0 %v1548
        %1704 = vmatprep.subr.bf16.mxu0 0
        %1705 = vmatpush1.bf16.msra.mxu0 %v1549
        %1706 = vmatprep.subr.bf16.mxu0 0
        %1707 = vmatpush1.bf16.msra.mxu0 %v1550
        %1708 = vmatprep.subr.bf16.mxu0 0
        %1709 = vmatpush1.bf16.msra.mxu0 %v1551
        %1710 = vmatprep.subr.bf16.mxu0 0
        %1711 = vmatpush1.bf16.msra.mxu0 %v1552
        %1712 = vmatprep.subr.bf16.mxu0 0
        %1713 = vmatpush1.bf16.msra.mxu0 %v1553
        %1714 = vmatprep.mubr.bf16.mxu0 %v1057
        %1715 = vmatmul.mubr.bf16.gmra.mrb[0].mxu0 %v1057
        %v1716 = vpop.f32.mrb[0].mxu0
        %v1717 = vadd.f32 0.0, %v1716
        %v1718 = vpop.f32.mrb[0].mxu0
        %v1719 = vpop.f32.mrb[0].mxu0
        %v1720 = vadd.f32 0.0, %v1719
        %v1721 = vpop.f32.mrb[0].mxu0
        %1722 = vmatprep.mubr.bf16.mxu0 %v1059
        %1723 = vmatmul.mubr.bf16.gmra.mrb[0].mxu0 %v1058
        %v1724 = vpop.f32.mrb[0].mxu0
        %v1725 = vadd.f32 0.0, %v1724
        %v1726 = vpop.f32.mrb[0].mxu0
        %v1727 = vpop.f32.mrb[0].mxu0
        %v1728 = vadd.f32 0.0, %v1727
        %v1729 = vpop.f32.mrb[0].mxu0
        %1730 = vmatprep.mubr.bf16.mxu0 %v1062
        %1731 = vmatmul.mubr.bf16.gmra.mrb[0].mxu0 %v1061
        %v1732 = vpop.f32.mrb[0].mxu0
        %v1733 = vadd.f32 0.0, %v1732
        %v1734 = vpop.f32.mrb[0].mxu0
        %v1735 = vpop.f32.mrb[0].mxu0
        %v1736 = vadd.f32 0.0, %v1735
        %v1737 = vpop.f32.mrb[0].mxu0
        %1738 = vmatprep.mubr.bf16.mxu0 %v1065
        %1739 = vmatmul.mubr.bf16.gmra.mrb[0].mxu0 %v1064
        %v1740 = vpop.f32.mrb[0].mxu0
        %v1741 = vadd.f32 0.0, %v1740
        %v1742 = vpop.f32.mrb[0].mxu0
        %v1743 = vpop.f32.mrb[0].mxu0
        %v1744 = vadd.f32 0.0, %v1743
        %v1745 = vpop.f32.mrb[0].mxu0
        %1746 = vmatprep.mubr.bf16.mxu0 %v1068
        %1747 = vmatmul.mubr.bf16.gmra.mrb[0].mxu0 %v1067
        %v1748 = vpop.f32.mrb[0].mxu0
        %v1749 = vadd.f32 0.0, %v1748
        %v1750 = vpop.f32.mrb[0].mxu0
        %v1751 = vpop.f32.mrb[0].mxu0
        %v1752 = vadd.f32 0.0, %v1751
        %v1753 = vpop.f32.mrb[0].mxu0
        %1754 = vmatprep.mubr.bf16.mxu0 %v1071
        %1755 = vmatmul.mubr.bf16.gmra.mrb[0].mxu0 %v1070
        %v1756 = vpop.f32.mrb[0].mxu0
        %v1757 = vadd.f32 0.0, %v1756
        %v1758 = vpop.f32.mrb[0].mxu0
        %v1759 = vpop.f32.mrb[0].mxu0
        %v1760 = vadd.f32 0.0, %v1759
        %v1761 = vpop.f32.mrb[0].mxu0
        %1762 = vmatprep.mubr.bf16.mxu0 %v1074
        %1763 = vmatmul.mubr.bf16.gmra.mrb[0].mxu0 %v1073
        %v1764 = vpop.f32.mrb[0].mxu0
        %v1765 = vadd.f32 0.0, %v1764
        %v1766 = vpop.f32.mrb[0].mxu0
        %v1767 = vpop.f32.mrb[0].mxu0
        %v1768 = vadd.f32 0.0, %v1767
        %v1769 = vpop.f32.mrb[0].mxu0
        %1770 = vmatprep.mubr.bf16.mxu0 %v1077
        %1771 = vmatmul.mubr.bf16.gmra.mrb[0].mxu0 %v1076
        %v1772 = vpop.f32.mrb[0].mxu0
        %v1773 = vadd.f32 0.0, %v1772
        %v1774 = vpop.f32.mrb[0].mxu0
        %v1775 = vpop.f32.mrb[0].mxu0
        %v1776 = vadd.f32 0.0, %v1775
        %v1777 = vpop.f32.mrb[0].mxu0
        %1778 = vmatprep.mubr.bf16.mxu0 %v1080
        %1779 = vmatmul.mubr.bf16.gmra.mrb[0].mxu0 %v1079
        %v1780 = vpop.f32.mrb[0].mxu0
        %v1781 = vadd.f32 0.0, %v1780
        %v1782 = vpop.f32.mrb[0].mxu0
        %v1783 = vpop.f32.mrb[0].mxu0
        %v1784 = vadd.f32 0.0, %v1783
        %v1785 = vpop.f32.mrb[0].mxu0
        %1786 = vmatprep.mubr.bf16.mxu0 %v1083
        %1787 = vmatmul.mubr.bf16.gmra.mrb[0].mxu0 %v1082
        %v1788 = vpop.f32.mrb[0].mxu0
        %v1789 = vadd.f32 0.0, %v1788
        %v1790 = vpop.f32.mrb[0].mxu0
        %v1791 = vpop.f32.mrb[0].mxu0
        %v1792 = vadd.f32 0.0, %v1791
        %v1793 = vpop.f32.mrb[0].mxu0
        %1794 = vmatprep.mubr.bf16.mxu0 %v1086
        %1795 = vmatmul.mubr.bf16.gmra.mrb[0].mxu0 %v1085
        %v1796 = vpop.f32.mrb[0].mxu0
        %v1797 = vadd.f32 0.0, %v1796
        %v1798 = vpop.f32.mrb[0].mxu0
        %v1799 = vpop.f32.mrb[0].mxu0
        %v1800 = vadd.f32 0.0, %v1799
        %v1801 = vpop.f32.mrb[0].mxu0
        %1802 = vmatprep.mubr.bf16.mxu0 %v1089
        %1803 = vmatmul.mubr.bf16.gmra.mrb[0].mxu0 %v1088
        %v1804 = vpop.f32.mrb[0].mxu0
        %v1805 = vadd.f32 0.0, %v1804
        %v1806 = vpop.f32.mrb[0].mxu0
        %v1807 = vpop.f32.mrb[0].mxu0
        %v1808 = vadd.f32 0.0, %v1807
        %v1809 = vpop.f32.mrb[0].mxu0
        %1810 = vmatprep.mubr.bf16.mxu0 %v1092
        %1811 = vmatmul.mubr.bf16.gmra.mrb[0].mxu0 %v1091
        %v1812 = vpop.f32.mrb[0].mxu0
        %v1813 = vadd.f32 0.0, %v1812
        %v1814 = vpop.f32.mrb[0].mxu0
        %v1815 = vpop.f32.mrb[0].mxu0
        %v1816 = vadd.f32 0.0, %v1815
        %v1817 = vpop.f32.mrb[0].mxu0
        %1818 = vmatprep.mubr.bf16.mxu0 %v1095
        %1819 = vmatmul.mubr.bf16.gmra.mrb[0].mxu0 %v1094
        %v1820 = vpop.f32.mrb[0].mxu0
        %v1821 = vadd.f32 0.0, %v1820
        %v1822 = vpop.f32.mrb[0].mxu0
        %v1823 = vpop.f32.mrb[0].mxu0
        %v1824 = vadd.f32 0.0, %v1823
        %v1825 = vpop.f32.mrb[0].mxu0
        %1826 = vmatprep.mubr.bf16.mxu0 %v1098
        %1827 = vmatmul.mubr.bf16.gmra.mrb[0].mxu0 %v1097
        %v1828 = vpop.f32.mrb[0].mxu0
        %v1829 = vadd.f32 0.0, %v1828
        %v1830 = vpop.f32.mrb[0].mxu0
        %v1831 = vpop.f32.mrb[0].mxu0
        %v1832 = vadd.f32 0.0, %v1831
        %v1833 = vpop.f32.mrb[0].mxu0
        %1834 = vmatprep.mubr.bf16.mxu0 %v1101
        %1835 = vmatmul.mubr.bf16.gmra.mrb[0].mxu0 %v1100
        %v1836 = vpop.f32.mrb[0].mxu0
        %v1837 = vadd.f32 0.0, %v1836
        %v1838 = vpop.f32.mrb[0].mxu0
        %v1839 = vpop.f32.mrb[0].mxu0
        %v1840 = vadd.f32 0.0, %v1839
        %v1841 = vpop.f32.mrb[0].mxu0
        %1842 = vdwg.mxu0
        %1843 = vmatprep.subr.bf16.mxu0 0
        %1844 = vmatpush1.bf16.msra.mxu0 %v1554
        %1845 = vmatprep.subr.bf16.mxu0 0
        %1846 = vmatpush1.bf16.msra.mxu0 %v1555
        %1847 = vmatprep.subr.bf16.mxu0 0
        %1848 = vmatpush1.bf16.msra.mxu0 %v1556
        %1849 = vmatprep.subr.bf16.mxu0 0
        %1850 = vmatpush1.bf16.msra.mxu0 %v1557
        %1851 = vmatprep.subr.bf16.mxu0 0
        %1852 = vmatpush1.bf16.msra.mxu0 %v1558
        %1853 = vmatprep.subr.bf16.mxu0 0
        %1854 = vmatpush1.bf16.msra.mxu0 %v1559
        %1855 = vmatprep.subr.bf16.mxu0 0
        %1856 = vmatpush1.bf16.msra.mxu0 %v1560
        %1857 = vmatprep.subr.bf16.mxu0 0
        %1858 = vmatpush1.bf16.msra.mxu0 %v1561
        %1859 = vmatprep.subr.bf16.mxu0 0
        %1860 = vmatpush1.bf16.msra.mxu0 %v1562
        %1861 = vmatprep.subr.bf16.mxu0 0
        %1862 = vmatpush1.bf16.msra.mxu0 %v1563
        %1863 = vmatprep.subr.bf16.mxu0 0
        %1864 = vmatpush1.bf16.msra.mxu0 %v1564
        %1865 = vmatprep.subr.bf16.mxu0 0
        %1866 = vmatpush1.bf16.msra.mxu0 %v1565
        %1867 = vmatprep.subr.bf16.mxu0 0
        %1868 = vmatpush1.bf16.msra.mxu0 %v1566
        %1869 = vmatprep.subr.bf16.mxu0 0
        %1870 = vmatpush1.bf16.msra.mxu0 %v1567
        %1871 = vmatprep.subr.bf16.mxu0 0
        %1872 = vmatpush1.bf16.msra.mxu0 %v1568
        %1873 = vmatprep.subr.bf16.mxu0 0
        %1874 = vmatpush1.bf16.msra.mxu0 %v1569
        %1875 = vmatprep.mubr.bf16.mxu0 %v1058
        %1876 = vmatmul.mubr.bf16.gmra.mrb[0].mxu0 %v1057
        %v1877 = vpop.f32.mrb[0].mxu0
        %v1878 = vadd.f32 %v1717, %v1877
        %v1879 = vpop.f32.mrb[0].mxu0
        %v1880 = vpop.f32.mrb[0].mxu0
        %v1881 = vadd.f32 %v1720, %v1880
        %v1882 = vpop.f32.mrb[0].mxu0
        %1883 = vmatprep.mubr.bf16.mxu0 %v1061
        %1884 = vmatmul.mubr.bf16.gmra.mrb[0].mxu0 %v1060
        %v1885 = vpop.f32.mrb[0].mxu0
        %v1886 = vadd.f32 %v1725, %v1885
        %v1887 = vpop.f32.mrb[0].mxu0
        %v1888 = vpop.f32.mrb[0].mxu0
        %v1889 = vadd.f32 %v1728, %v1888
        %v1890 = vpop.f32.mrb[0].mxu0
        %1891 = vmatprep.mubr.bf16.mxu0 %v1064
        %1892 = vmatmul.mubr.bf16.gmra.mrb[0].mxu0 %v1063
        %v1893 = vpop.f32.mrb[0].mxu0
        %v1894 = vadd.f32 %v1733, %v1893
        %v1895 = vpop.f32.mrb[0].mxu0
        %v1896 = vpop.f32.mrb[0].mxu0
        %v1897 = vadd.f32 %v1736, %v1896
        %v1898 = vpop.f32.mrb[0].mxu0
        %1899 = vmatprep.mubr.bf16.mxu0 %v1067
        %1900 = vmatmul.mubr.bf16.gmra.mrb[0].mxu0 %v1066
        %v1901 = vpop.f32.mrb[0].mxu0
        %v1902 = vadd.f32 %v1741, %v1901
        %v1903 = vpop.f32.mrb[0].mxu0
        %v1904 = vpop.f32.mrb[0].mxu0
        %v1905 = vadd.f32 %v1744, %v1904
        %v1906 = vpop.f32.mrb[0].mxu0
        %1907 = vmatprep.mubr.bf16.mxu0 %v1070
        %1908 = vmatmul.mubr.bf16.gmra.mrb[0].mxu0 %v1069
        %v1909 = vpop.f32.mrb[0].mxu0
        %v1910 = vadd.f32 %v1749, %v1909
        %v1911 = vpop.f32.mrb[0].mxu0
        %v1912 = vpop.f32.mrb[0].mxu0
        %v1913 = vadd.f32 %v1752, %v1912
        %v1914 = vpop.f32.mrb[0].mxu0
        %1915 = vmatprep.mubr.bf16.mxu0 %v1073
        %1916 = vmatmul.mubr.bf16.gmra.mrb[0].mxu0 %v1072
        %v1917 = vpop.f32.mrb[0].mxu0
        %v1918 = vadd.f32 %v1757, %v1917
        %v1919 = vpop.f32.mrb[0].mxu0
        %v1920 = vpop.f32.mrb[0].mxu0
        %v1921 = vadd.f32 %v1760, %v1920
        %v1922 = vpop.f32.mrb[0].mxu0
        %1923 = vmatprep.mubr.bf16.mxu0 %v1076
        %1924 = vmatmul.mubr.bf16.gmra.mrb[0].mxu0 %v1075
        %v1925 = vpop.f32.mrb[0].mxu0
        %v1926 = vadd.f32 %v1765, %v1925
        %v1927 = vpop.f32.mrb[0].mxu0
        %v1928 = vpop.f32.mrb[0].mxu0
        %v1929 = vadd.f32 %v1768, %v1928
        %v1930 = vpop.f32.mrb[0].mxu0
        %1931 = vmatprep.mubr.bf16.mxu0 %v1079
        %1932 = vmatmul.mubr.bf16.gmra.mrb[0].mxu0 %v1078
        %v1933 = vpop.f32.mrb[0].mxu0
        %v1934 = vadd.f32 %v1773, %v1933
        %v1935 = vpop.f32.mrb[0].mxu0
        %v1936 = vpop.f32.mrb[0].mxu0
        %v1937 = vadd.f32 %v1776, %v1936
        %v1938 = vpop.f32.mrb[0].mxu0
        %1939 = vmatprep.mubr.bf16.mxu0 %v1082
        %1940 = vmatmul.mubr.bf16.gmra.mrb[0].mxu0 %v1081
        %v1941 = vpop.f32.mrb[0].mxu0
        %v1942 = vadd.f32 %v1781, %v1941
        %v1943 = vpop.f32.mrb[0].mxu0
        %v1944 = vpop.f32.mrb[0].mxu0
        %v1945 = vadd.f32 %v1784, %v1944
        %v1946 = vpop.f32.mrb[0].mxu0
        %1947 = vmatprep.mubr.bf16.mxu0 %v1085
        %1948 = vmatmul.mubr.bf16.gmra.mrb[0].mxu0 %v1084
        %v1949 = vpop.f32.mrb[0].mxu0
        %v1950 = vadd.f32 %v1789, %v1949
        %v1951 = vpop.f32.mrb[0].mxu0
        %v1952 = vpop.f32.mrb[0].mxu0
        %v1953 = vadd.f32 %v1792, %v1952
        %v1954 = vpop.f32.mrb[0].mxu0
        %1955 = vmatprep.mubr.bf16.mxu0 %v1088
        %1956 = vmatmul.mubr.bf16.gmra.mrb[0].mxu0 %v1087
        %v1957 = vpop.f32.mrb[0].mxu0
        %v1958 = vadd.f32 %v1797, %v1957
        %v1959 = vpop.f32.mrb[0].mxu0
        %v1960 = vpop.f32.mrb[0].mxu0
        %v1961 = vadd.f32 %v1800, %v1960
        %v1962 = vpop.f32.mrb[0].mxu0
        %1963 = vmatprep.mubr.bf16.mxu0 %v1091
        %1964 = vmatmul.mubr.bf16.gmra.mrb[0].mxu0 %v1090
        %v1965 = vpop.f32.mrb[0].mxu0
        %v1966 = vadd.f32 %v1805, %v1965
        %v1967 = vpop.f32.mrb[0].mxu0
        %v1968 = vpop.f32.mrb[0].mxu0
        %v1969 = vadd.f32 %v1808, %v1968
        %v1970 = vpop.f32.mrb[0].mxu0
        %1971 = vmatprep.mubr.bf16.mxu0 %v1094
        %1972 = vmatmul.mubr.bf16.gmra.mrb[0].mxu0 %v1093
        %v1973 = vpop.f32.mrb[0].mxu0
        %v1974 = vadd.f32 %v1813, %v1973
        %v1975 = vpop.f32.mrb[0].mxu0
        %v1976 = vpop.f32.mrb[0].mxu0
        %v1977 = vadd.f32 %v1816, %v1976
        %v1978 = vpop.f32.mrb[0].mxu0
        %1979 = vmatprep.mubr.bf16.mxu0 %v1097
        %1980 = vmatmul.mubr.bf16.gmra.mrb[0].mxu0 %v1096
        %v1981 = vpop.f32.mrb[0].mxu0
        %v1982 = vadd.f32 %v1821, %v1981
        %v1983 = vpop.f32.mrb[0].mxu0
        %v1984 = vpop.f32.mrb[0].mxu0
        %v1985 = vadd.f32 %v1824, %v1984
        %v1986 = vpop.f32.mrb[0].mxu0
        %1987 = vmatprep.mubr.bf16.mxu0 %v1100
        %1988 = vmatmul.mubr.bf16.gmra.mrb[0].mxu0 %v1099
        %v1989 = vpop.f32.mrb[0].mxu0
        %v1990 = vadd.f32 %v1829, %v1989
        %v1991 = vpop.f32.mrb[0].mxu0
        %v1992 = vpop.f32.mrb[0].mxu0
        %v1993 = vadd.f32 %v1832, %v1992
        %v1994 = vpop.f32.mrb[0].mxu0
        %1995 = vmatprep.mubr.bf16.mxu0 %v1103
        %1996 = vmatmul.mubr.bf16.gmra.mrb[0].mxu0 %v1102
        %v1997 = vpop.f32.mrb[0].mxu0
        %v1998 = vadd.f32 %v1837, %v1997
        %v1999 = vpop.f32.mrb[0].mxu0
        %v2000 = vpop.f32.mrb[0].mxu0
        %v2001 = vadd.f32 %v1840, %v2000
        %v2002 = vpop.f32.mrb[0].mxu0
        %2003 = vdwg.mxu0
        %2004 = vmatprep.subr.bf16.mxu0 0
        %2005 = vmatpush1.bf16.msra.mxu0 %v1570
        %2006 = vmatprep.subr.bf16.mxu0 0
        %2007 = vmatpush1.bf16.msra.mxu0 %v1571
        %2008 = vmatprep.subr.bf16.mxu0 0
        %2009 = vmatpush1.bf16.msra.mxu0 %v1572
        %2010 = vmatprep.subr.bf16.mxu0 0
        %2011 = vmatpush1.bf16.msra.mxu0 %v1573
        %2012 = vmatprep.subr.bf16.mxu0 0
        %2013 = vmatpush1.bf16.msra.mxu0 %v1574
        %2014 = vmatprep.subr.bf16.mxu0 0
        %2015 = vmatpush1.bf16.msra.mxu0 %v1575
        %2016 = vmatprep.subr.bf16.mxu0 0
        %2017 = vmatpush1.bf16.msra.mxu0 %v1576
        %2018 = vmatprep.subr.bf16.mxu0 0
        %2019 = vmatpush1.bf16.msra.mxu0 %v1577
        %2020 = vmatprep.subr.bf16.mxu0 0
        %2021 = vmatpush1.bf16.msra.mxu0 %v1578
        %2022 = vmatprep.subr.bf16.mxu0 0
        %2023 = vmatpush1.bf16.msra.mxu0 %v1579
        %2024 = vmatprep.subr.bf16.mxu0 0
        %2025 = vmatpush1.bf16.msra.mxu0 %v1580
        %2026 = vmatprep.subr.bf16.mxu0 0
        %2027 = vmatpush1.bf16.msra.mxu0 %v1581
        %2028 = vmatprep.subr.bf16.mxu0 0
        %2029 = vmatpush1.bf16.msra.mxu0 %v1582
        %2030 = vmatprep.subr.bf16.mxu0 0
        %2031 = vmatpush1.bf16.msra.mxu0 %v1583
        %2032 = vmatprep.subr.bf16.mxu0 0
        %2033 = vmatpush1.bf16.msra.mxu0 %v1584
        %2034 = vmatprep.subr.bf16.mxu0 0
        %2035 = vmatpush1.bf16.msra.mxu0 %v1585
        %2036 = vmatprep.mubr.bf16.mxu0 %v1060
        %2037 = vmatmul.mubr.bf16.gmra.mrb[0].mxu0 %v1059
        %v2038 = vpop.f32.mrb[0].mxu0
        %v2039 = vadd.f32 %v1878, %v2038
        %v2040 = vpop.f32.mrb[0].mxu0
        %v2041 = vpop.f32.mrb[0].mxu0
        %v2042 = vadd.f32 %v1881, %v2041
        %v2043 = vpop.f32.mrb[0].mxu0
        %2044 = vmatprep.mubr.bf16.mxu0 %v1063
        %2045 = vmatmul.mubr.bf16.gmra.mrb[0].mxu0 %v1062
        %v2046 = vpop.f32.mrb[0].mxu0
        %v2047 = vadd.f32 %v1886, %v2046
        %v2048 = vpop.f32.mrb[0].mxu0
        %v2049 = vpop.f32.mrb[0].mxu0
        %v2050 = vadd.f32 %v1889, %v2049
        %v2051 = vpop.f32.mrb[0].mxu0
        %2052 = vmatprep.mubr.bf16.mxu0 %v1066
        %2053 = vmatmul.mubr.bf16.gmra.mrb[0].mxu0 %v1065
        %v2054 = vpop.f32.mrb[0].mxu0
        %v2055 = vadd.f32 %v1894, %v2054
        %v2056 = vpop.f32.mrb[0].mxu0
        %v2057 = vpop.f32.mrb[0].mxu0
        %v2058 = vadd.f32 %v1897, %v2057
        %v2059 = vpop.f32.mrb[0].mxu0
        %2060 = vmatprep.mubr.bf16.mxu0 %v1069
        %2061 = vmatmul.mubr.bf16.gmra.mrb[0].mxu0 %v1068
        %v2062 = vpop.f32.mrb[0].mxu0
        %v2063 = vadd.f32 %v1902, %v2062
        %v2064 = vpop.f32.mrb[0].mxu0
        %v2065 = vpop.f32.mrb[0].mxu0
        %v2066 = vadd.f32 %v1905, %v2065
        %v2067 = vpop.f32.mrb[0].mxu0
        %2068 = vmatprep.mubr.bf16.mxu0 %v1072
        %2069 = vmatmul.mubr.bf16.gmra.mrb[0].mxu0 %v1071
        %v2070 = vpop.f32.mrb[0].mxu0
        %v2071 = vadd.f32 %v1910, %v2070
        %v2072 = vpop.f32.mrb[0].mxu0
        %v2073 = vpop.f32.mrb[0].mxu0
        %v2074 = vadd.f32 %v1913, %v2073
        %v2075 = vpop.f32.mrb[0].mxu0
        %2076 = vmatprep.mubr.bf16.mxu0 %v1075
        %2077 = vmatmul.mubr.bf16.gmra.mrb[0].mxu0 %v1074
        %v2078 = vpop.f32.mrb[0].mxu0
        %v2079 = vadd.f32 %v1918, %v2078
        %v2080 = vpop.f32.mrb[0].mxu0
        %v2081 = vpop.f32.mrb[0].mxu0
        %v2082 = vadd.f32 %v1921, %v2081
        %v2083 = vpop.f32.mrb[0].mxu0
        %2084 = vmatprep.mubr.bf16.mxu0 %v1078
        %2085 = vmatmul.mubr.bf16.gmra.mrb[0].mxu0 %v1077
        %v2086 = vpop.f32.mrb[0].mxu0
        %v2087 = vadd.f32 %v1926, %v2086
        %v2088 = vpop.f32.mrb[0].mxu0
        %v2089 = vpop.f32.mrb[0].mxu0
        %v2090 = vadd.f32 %v1929, %v2089
        %v2091 = vpop.f32.mrb[0].mxu0
        %2092 = vmatprep.mubr.bf16.mxu0 %v1081
        %2093 = vmatmul.mubr.bf16.gmra.mrb[0].mxu0 %v1080
        %v2094 = vpop.f32.mrb[0].mxu0
        %v2095 = vadd.f32 %v1934, %v2094
        %v2096 = vpop.f32.mrb[0].mxu0
        %v2097 = vpop.f32.mrb[0].mxu0
        %v2098 = vadd.f32 %v1937, %v2097
        %v2099 = vpop.f32.mrb[0].mxu0
        %2100 = vmatprep.mubr.bf16.mxu0 %v1084
        %2101 = vmatmul.mubr.bf16.gmra.mrb[0].mxu0 %v1083
        %v2102 = vpop.f32.mrb[0].mxu0
        %v2103 = vadd.f32 %v1942, %v2102
        %v2104 = vpop.f32.mrb[0].mxu0
        %v2105 = vpop.f32.mrb[0].mxu0
        %v2106 = vadd.f32 %v1945, %v2105
        %v2107 = vpop.f32.mrb[0].mxu0
        %2108 = vmatprep.mubr.bf16.mxu0 %v1087
        %2109 = vmatmul.mubr.bf16.gmra.mrb[0].mxu0 %v1086
        %v2110 = vpop.f32.mrb[0].mxu0
        %v2111 = vadd.f32 %v1950, %v2110
        %v2112 = vpop.f32.mrb[0].mxu0
        %v2113 = vpop.f32.mrb[0].mxu0
        %v2114 = vadd.f32 %v1953, %v2113
        %v2115 = vpop.f32.mrb[0].mxu0
        %2116 = vmatprep.mubr.bf16.mxu0 %v1090
        %2117 = vmatmul.mubr.bf16.gmra.mrb[0].mxu0 %v1089
        %v2118 = vpop.f32.mrb[0].mxu0
        %v2119 = vadd.f32 %v1958, %v2118
        %v2120 = vpop.f32.mrb[0].mxu0
        %v2121 = vpop.f32.mrb[0].mxu0
        %v2122 = vadd.f32 %v1961, %v2121
        %v2123 = vpop.f32.mrb[0].mxu0
        %2124 = vmatprep.mubr.bf16.mxu0 %v1093
        %2125 = vmatmul.mubr.bf16.gmra.mrb[0].mxu0 %v1092
        %v2126 = vpop.f32.mrb[0].mxu0
        %v2127 = vadd.f32 %v1966, %v2126
        %v2128 = vpop.f32.mrb[0].mxu0
        %v2129 = vpop.f32.mrb[0].mxu0
        %v2130 = vadd.f32 %v1969, %v2129
        %v2131 = vpop.f32.mrb[0].mxu0
        %2132 = vmatprep.mubr.bf16.mxu0 %v1096
        %2133 = vmatmul.mubr.bf16.gmra.mrb[0].mxu0 %v1095
        %v2134 = vpop.f32.mrb[0].mxu0
        %v2135 = vadd.f32 %v1974, %v2134
        %v2136 = vpop.f32.mrb[0].mxu0
        %v2137 = vpop.f32.mrb[0].mxu0
        %v2138 = vadd.f32 %v1977, %v2137
        %v2139 = vpop.f32.mrb[0].mxu0
        %2140 = vmatprep.mubr.bf16.mxu0 %v1099
        %2141 = vmatmul.mubr.bf16.gmra.mrb[0].mxu0 %v1098
        %v2142 = vpop.f32.mrb[0].mxu0
        %v2143 = vadd.f32 %v1982, %v2142
        %v2144 = vpop.f32.mrb[0].mxu0
        %v2145 = vpop.f32.mrb[0].mxu0
        %v2146 = vadd.f32 %v1985, %v2145
        %v2147 = vpop.f32.mrb[0].mxu0
        %2148 = vmatprep.mubr.bf16.mxu0 %v1102
        %2149 = vmatmul.mubr.bf16.gmra.mrb[0].mxu0 %v1101
        %v2150 = vpop.f32.mrb[0].mxu0
        %v2151 = vadd.f32 %v1990, %v2150
        %v2152 = vpop.f32.mrb[0].mxu0
        %v2153 = vpop.f32.mrb[0].mxu0
        %v2154 = vadd.f32 %v1993, %v2153
        %v2155 = vpop.f32.mrb[0].mxu0
        %2156 = vmatprep.mubr.bf16.mxu0 %v1105
        %2157 = vmatmul.mubr.bf16.gmra.mrb[0].mxu0 %v1104
        %v2158 = vpop.f32.mrb[0].mxu0
        %v2159 = vadd.f32 %v1998, %v2158
        %v2160 = vpop.f32.mrb[0].mxu0
        %v2161 = vpop.f32.mrb[0].mxu0
        %v2162 = vadd.f32 %v2001, %v2161
        %v2163 = vpop.f32.mrb[0].mxu0
        %2164 = vdwg.mxu0
        %2165 = vmatprep.subr.bf16.mxu0 0
        %2166 = vmatpush1.bf16.msra.mxu0 %v1586
        %2167 = vmatprep.subr.bf16.mxu0 0
        %2168 = vmatpush1.bf16.msra.mxu0 %v1587
        %2169 = vmatprep.subr.bf16.mxu0 0
        %2170 = vmatpush1.bf16.msra.mxu0 %v1588
        %2171 = vmatprep.subr.bf16.mxu0 0
        %2172 = vmatpush1.bf16.msra.mxu0 %v1589
        %2173 = vmatprep.subr.bf16.mxu0 0
        %2174 = vmatpush1.bf16.msra.mxu0 %v1590
        %2175 = vmatprep.subr.bf16.mxu0 0
        %2176 = vmatpush1.bf16.msra.mxu0 %v1591
        %2177 = vmatprep.subr.bf16.mxu0 0
        %2178 = vmatpush1.bf16.msra.mxu0 %v1592
        %2179 = vmatprep.subr.bf16.mxu0 0
        %2180 = vmatpush1.bf16.msra.mxu0 %v1593
        %2181 = vmatprep.subr.bf16.mxu0 0
        %2182 = vmatpush1.bf16.msra.mxu0 %v1594
        %2183 = vmatprep.subr.bf16.mxu0 0
        %2184 = vmatpush1.bf16.msra.mxu0 %v1595
        %2185 = vmatprep.subr.bf16.mxu0 0
        %2186 = vmatpush1.bf16.msra.mxu0 %v1596
        %2187 = vmatprep.subr.bf16.mxu0 0
        %2188 = vmatpush1.bf16.msra.mxu0 %v1597
        %2189 = vmatprep.subr.bf16.mxu0 0
        %2190 = vmatpush1.bf16.msra.mxu0 %v1598
        %2191 = vmatprep.subr.bf16.mxu0 0
        %2192 = vmatpush1.bf16.msra.mxu0 %v1599
        %2193 = vmatprep.subr.bf16.mxu0 0
        %2194 = vmatpush1.bf16.msra.mxu0 %v1600
        %2195 = vmatprep.subr.bf16.mxu0 0
        %2196 = vmatpush1.bf16.msra.mxu0 %v1601
        %2197 = vmatprep.mubr.bf16.mxu0 %v1062
        %2198 = vmatmul.mubr.bf16.gmra.mrb[0].mxu0 %v1061
        %v2199 = vpop.f32.mrb[0].mxu0
        %v2200 = vadd.f32 %v2039, %v2199
        %v2201 = vpop.f32.mrb[0].mxu0
        %v2202 = vpop.f32.mrb[0].mxu0
        %v2203 = vadd.f32 %v2042, %v2202
        %v2204 = vpop.f32.mrb[0].mxu0
        %2205 = vmatprep.mubr.bf16.mxu0 %v1065
        %2206 = vmatmul.mubr.bf16.gmra.mrb[0].mxu0 %v1064
        %v2207 = vpop.f32.mrb[0].mxu0
        %v2208 = vadd.f32 %v2047, %v2207
        %v2209 = vpop.f32.mrb[0].mxu0
        %v2210 = vpop.f32.mrb[0].mxu0
        %v2211 = vadd.f32 %v2050, %v2210
        %v2212 = vpop.f32.mrb[0].mxu0
        %2213 = vmatprep.mubr.bf16.mxu0 %v1068
        %2214 = vmatmul.mubr.bf16.gmra.mrb[0].mxu0 %v1067
        %v2215 = vpop.f32.mrb[0].mxu0
        %v2216 = vadd.f32 %v2055, %v2215
        %v2217 = vpop.f32.mrb[0].mxu0
        %v2218 = vpop.f32.mrb[0].mxu0
        %v2219 = vadd.f32 %v2058, %v2218
        %v2220 = vpop.f32.mrb[0].mxu0
        %2221 = vmatprep.mubr.bf16.mxu0 %v1071
        %2222 = vmatmul.mubr.bf16.gmra.mrb[0].mxu0 %v1070
        %v2223 = vpop.f32.mrb[0].mxu0
        %v2224 = vadd.f32 %v2063, %v2223
        %v2225 = vpop.f32.mrb[0].mxu0
        %v2226 = vpop.f32.mrb[0].mxu0
        %v2227 = vadd.f32 %v2066, %v2226
        %v2228 = vpop.f32.mrb[0].mxu0
        %2229 = vmatprep.mubr.bf16.mxu0 %v1074
        %2230 = vmatmul.mubr.bf16.gmra.mrb[0].mxu0 %v1073
        %v2231 = vpop.f32.mrb[0].mxu0
        %v2232 = vadd.f32 %v2071, %v2231
        %v2233 = vpop.f32.mrb[0].mxu0
        %v2234 = vpop.f32.mrb[0].mxu0
        %v2235 = vadd.f32 %v2074, %v2234
        %v2236 = vpop.f32.mrb[0].mxu0
        %2237 = vmatprep.mubr.bf16.mxu0 %v1077
        %2238 = vmatmul.mubr.bf16.gmra.mrb[0].mxu0 %v1076
        %v2239 = vpop.f32.mrb[0].mxu0
        %v2240 = vadd.f32 %v2079, %v2239
        %v2241 = vpop.f32.mrb[0].mxu0
        %v2242 = vpop.f32.mrb[0].mxu0
        %v2243 = vadd.f32 %v2082, %v2242
        %v2244 = vpop.f32.mrb[0].mxu0
        %2245 = vmatprep.mubr.bf16.mxu0 %v1080
        %2246 = vmatmul.mubr.bf16.gmra.mrb[0].mxu0 %v1079
        %v2247 = vpop.f32.mrb[0].mxu0
        %v2248 = vadd.f32 %v2087, %v2247
        %v2249 = vpop.f32.mrb[0].mxu0
        %v2250 = vpop.f32.mrb[0].mxu0
        %v2251 = vadd.f32 %v2090, %v2250
        %v2252 = vpop.f32.mrb[0].mxu0
        %2253 = vmatprep.mubr.bf16.mxu0 %v1083
        %2254 = vmatmul.mubr.bf16.gmra.mrb[0].mxu0 %v1082
        %v2255 = vpop.f32.mrb[0].mxu0
        %v2256 = vadd.f32 %v2095, %v2255
        %v2257 = vpop.f32.mrb[0].mxu0
        %v2258 = vpop.f32.mrb[0].mxu0
        %v2259 = vadd.f32 %v2098, %v2258
        %v2260 = vpop.f32.mrb[0].mxu0
        %2261 = vmatprep.mubr.bf16.mxu0 %v1086
        %2262 = vmatmul.mubr.bf16.gmra.mrb[0].mxu0 %v1085
        %v2263 = vpop.f32.mrb[0].mxu0
        %v2264 = vadd.f32 %v2103, %v2263
        %v2265 = vpop.f32.mrb[0].mxu0
        %v2266 = vpop.f32.mrb[0].mxu0
        %v2267 = vadd.f32 %v2106, %v2266
        %v2268 = vpop.f32.mrb[0].mxu0
        %2269 = vmatprep.mubr.bf16.mxu0 %v1089
        %2270 = vmatmul.mubr.bf16.gmra.mrb[0].mxu0 %v1088
        %v2271 = vpop.f32.mrb[0].mxu0
        %v2272 = vadd.f32 %v2111, %v2271
        %v2273 = vpop.f32.mrb[0].mxu0
        %v2274 = vpop.f32.mrb[0].mxu0
        %v2275 = vadd.f32 %v2114, %v2274
        %v2276 = vpop.f32.mrb[0].mxu0
        %2277 = vmatprep.mubr.bf16.mxu0 %v1092
        %2278 = vmatmul.mubr.bf16.gmra.mrb[0].mxu0 %v1091
        %v2279 = vpop.f32.mrb[0].mxu0
        %v2280 = vadd.f32 %v2119, %v2279
        %v2281 = vpop.f32.mrb[0].mxu0
        %v2282 = vpop.f32.mrb[0].mxu0
        %v2283 = vadd.f32 %v2122, %v2282
        %v2284 = vpop.f32.mrb[0].mxu0
        %2285 = vmatprep.mubr.bf16.mxu0 %v1095
        %2286 = vmatmul.mubr.bf16.gmra.mrb[0].mxu0 %v1094
        %v2287 = vpop.f32.mrb[0].mxu0
        %v2288 = vadd.f32 %v2127, %v2287
        %v2289 = vpop.f32.mrb[0].mxu0
        %v2290 = vpop.f32.mrb[0].mxu0
        %v2291 = vadd.f32 %v2130, %v2290
        %v2292 = vpop.f32.mrb[0].mxu0
        %2293 = vmatprep.mubr.bf16.mxu0 %v1098
        %2294 = vmatmul.mubr.bf16.gmra.mrb[0].mxu0 %v1097
        %v2295 = vpop.f32.mrb[0].mxu0
        %v2296 = vadd.f32 %v2135, %v2295
        %v2297 = vpop.f32.mrb[0].mxu0
        %v2298 = vpop.f32.mrb[0].mxu0
        %v2299 = vadd.f32 %v2138, %v2298
        %v2300 = vpop.f32.mrb[0].mxu0
        %2301 = vmatprep.mubr.bf16.mxu0 %v1101
        %2302 = vmatmul.mubr.bf16.gmra.mrb[0].mxu0 %v1100
        %v2303 = vpop.f32.mrb[0].mxu0
        %v2304 = vadd.f32 %v2143, %v2303
        %v2305 = vpop.f32.mrb[0].mxu0
        %v2306 = vpop.f32.mrb[0].mxu0
        %v2307 = vadd.f32 %v2146, %v2306
        %v2308 = vpop.f32.mrb[0].mxu0
        %2309 = vmatprep.mubr.bf16.mxu0 %v1104
        %2310 = vmatmul.mubr.bf16.gmra.mrb[0].mxu0 %v1103
        %v2311 = vpop.f32.mrb[0].mxu0
        %v2312 = vadd.f32 %v2151, %v2311
        %v2313 = vpop.f32.mrb[0].mxu0
        %v2314 = vpop.f32.mrb[0].mxu0
        %v2315 = vadd.f32 %v2154, %v2314
        %v2316 = vpop.f32.mrb[0].mxu0
        %2317 = vmatprep.mubr.bf16.mxu0 %v1057
        %2318 = vmatmul.mubr.bf16.gmra.mrb[0].mxu0 %v1057
        %v2319 = vpop.f32.mrb[0].mxu0
        %v2320 = vadd.f32 %v2159, %v2319
        %v2321 = vpop.f32.mrb[0].mxu0
        %v2322 = vpop.f32.mrb[0].mxu0
        %v2323 = vadd.f32 %v2162, %v2322
        %v2324 = vpop.f32.mrb[0].mxu0
        %2325 = vdwg.mxu0
        %2326 = vmatprep.subr.bf16.mxu0 0
        %2327 = vmatpush1.bf16.msra.mxu0 %v1602
        %2328 = vmatprep.subr.bf16.mxu0 0
        %2329 = vmatpush1.bf16.msra.mxu0 %v1603
        %2330 = vmatprep.subr.bf16.mxu0 0
        %2331 = vmatpush1.bf16.msra.mxu0 %v1604
        %2332 = vmatprep.subr.bf16.mxu0 0
        %2333 = vmatpush1.bf16.msra.mxu0 %v1605
        %2334 = vmatprep.subr.bf16.mxu0 0
        %2335 = vmatpush1.bf16.msra.mxu0 %v1606
        %2336 = vmatprep.subr.bf16.mxu0 0
        %2337 = vmatpush1.bf16.msra.mxu0 %v1607
        %2338 = vmatprep.subr.bf16.mxu0 0
        %2339 = vmatpush1.bf16.msra.mxu0 %v1608
        %2340 = vmatprep.subr.bf16.mxu0 0
        %2341 = vmatpush1.bf16.msra.mxu0 %v1609
        %2342 = vmatprep.subr.bf16.mxu0 0
        %2343 = vmatpush1.bf16.msra.mxu0 0
        %2344 = vmatprep.subr.bf16.mxu0 0
        %2345 = vmatpush1.bf16.msra.mxu0 0
        %2346 = vmatprep.subr.bf16.mxu0 0
        %2347 = vmatpush1.bf16.msra.mxu0 0
        %2348 = vmatprep.subr.bf16.mxu0 0
        %2349 = vmatpush1.bf16.msra.mxu0 0
        %2350 = vmatprep.subr.bf16.mxu0 0
        %2351 = vmatpush1.bf16.msra.mxu0 0
        %2352 = vmatprep.subr.bf16.mxu0 0
        %2353 = vmatpush1.bf16.msra.mxu0 0
        %2354 = vmatprep.subr.bf16.mxu0 0
        %2355 = vmatpush1.bf16.msra.mxu0 0
        %2356 = vmatprep.subr.bf16.mxu0 0
        %2357 = vmatpush1.bf16.msra.mxu0 0
        %2358 = vmatprep.mubr.bf16.mxu0 0
        %2359 = vmatmul.mubr.bf16.gmra.mrb[0].mxu0 %v1063
        %v2360 = vpop.f32.mrb[0].mxu0
        %v2361 = vadd.f32 %v2200, %v2360
        %v2362 = vpop.f32.mrb[0].mxu0
        %v2363 = vpop.f32.mrb[0].mxu0
        %v2364 = vadd.f32 %v2203, %v2363
        %v2365 = vpop.f32.mrb[0].mxu0
        %2366 = vmatprep.mubr.bf16.mxu0 0
        %2367 = vmatmul.mubr.bf16.gmra.mrb[0].mxu0 %v1066
        %v2368 = vpop.f32.mrb[0].mxu0
        %v2369 = vadd.f32 %v2208, %v2368
        %v2370 = vpop.f32.mrb[0].mxu0
        %v2371 = vpop.f32.mrb[0].mxu0
        %v2372 = vadd.f32 %v2211, %v2371
        %v2373 = vpop.f32.mrb[0].mxu0
        %2374 = vmatprep.mubr.bf16.mxu0 0
        %2375 = vmatmul.mubr.bf16.gmra.mrb[0].mxu0 %v1069
        %v2376 = vpop.f32.mrb[0].mxu0
        %v2377 = vadd.f32 %v2216, %v2376
        %v2378 = vpop.f32.mrb[0].mxu0
        %v2379 = vpop.f32.mrb[0].mxu0
        %v2380 = vadd.f32 %v2219, %v2379
        %v2381 = vpop.f32.mrb[0].mxu0
        %2382 = vmatprep.mubr.bf16.mxu0 0
        %2383 = vmatmul.mubr.bf16.gmra.mrb[0].mxu0 %v1072
        %v2384 = vpop.f32.mrb[0].mxu0
        %v2385 = vadd.f32 %v2224, %v2384
        %v2386 = vpop.f32.mrb[0].mxu0
        %v2387 = vpop.f32.mrb[0].mxu0
        %v2388 = vadd.f32 %v2227, %v2387
        %v2389 = vpop.f32.mrb[0].mxu0
        %2390 = vmatprep.mubr.bf16.mxu0 0
        %2391 = vmatmul.mubr.bf16.gmra.mrb[0].mxu0 %v1075
        %v2392 = vpop.f32.mrb[0].mxu0
        %v2393 = vadd.f32 %v2232, %v2392
        %v2394 = vpop.f32.mrb[0].mxu0
        %v2395 = vpop.f32.mrb[0].mxu0
        %v2396 = vadd.f32 %v2235, %v2395
        %v2397 = vpop.f32.mrb[0].mxu0
        %2398 = vmatprep.mubr.bf16.mxu0 0
        %2399 = vmatmul.mubr.bf16.gmra.mrb[0].mxu0 %v1078
        %v2400 = vpop.f32.mrb[0].mxu0
        %v2401 = vadd.f32 %v2240, %v2400
        %v2402 = vpop.f32.mrb[0].mxu0
        %v2403 = vpop.f32.mrb[0].mxu0
        %v2404 = vadd.f32 %v2243, %v2403
        %v2405 = vpop.f32.mrb[0].mxu0
        %2406 = vmatprep.mubr.bf16.mxu0 0
        %2407 = vmatmul.mubr.bf16.gmra.mrb[0].mxu0 %v1081
        %v2408 = vpop.f32.mrb[0].mxu0
        %v2409 = vadd.f32 %v2248, %v2408
        %v2410 = vpop.f32.mrb[0].mxu0
        %v2411 = vpop.f32.mrb[0].mxu0
        %v2412 = vadd.f32 %v2251, %v2411
        %v2413 = vpop.f32.mrb[0].mxu0
        %2414 = vmatprep.mubr.bf16.mxu0 0
        %2415 = vmatmul.mubr.bf16.gmra.mrb[0].mxu0 %v1084
        %v2416 = vpop.f32.mrb[0].mxu0
        %v2417 = vadd.f32 %v2256, %v2416
        %v2418 = vpop.f32.mrb[0].mxu0
        %v2419 = vpop.f32.mrb[0].mxu0
        %v2420 = vadd.f32 %v2259, %v2419
        %v2421 = vpop.f32.mrb[0].mxu0
        %2422 = vmatprep.mubr.bf16.mxu0 0
        %2423 = vmatmul.mubr.bf16.gmra.mrb[0].mxu0 %v1087
        %v2424 = vpop.f32.mrb[0].mxu0
        %v2425 = vadd.f32 %v2264, %v2424
        %v2426 = vpop.f32.mrb[0].mxu0
        %v2427 = vpop.f32.mrb[0].mxu0
        %v2428 = vadd.f32 %v2267, %v2427
        %v2429 = vpop.f32.mrb[0].mxu0
        %2430 = vmatprep.mubr.bf16.mxu0 0
        %2431 = vmatmul.mubr.bf16.gmra.mrb[0].mxu0 %v1090
        %v2432 = vpop.f32.mrb[0].mxu0
        %v2433 = vadd.f32 %v2272, %v2432
        %v2434 = vpop.f32.mrb[0].mxu0
        %v2435 = vpop.f32.mrb[0].mxu0
        %v2436 = vadd.f32 %v2275, %v2435
        %v2437 = vpop.f32.mrb[0].mxu0
        %2438 = vmatprep.mubr.bf16.mxu0 0
        %2439 = vmatmul.mubr.bf16.gmra.mrb[0].mxu0 %v1093
        %v2440 = vpop.f32.mrb[0].mxu0
        %v2441 = vadd.f32 %v2280, %v2440
        %v2442 = vpop.f32.mrb[0].mxu0
        %v2443 = vpop.f32.mrb[0].mxu0
        %v2444 = vadd.f32 %v2283, %v2443
        %v2445 = vpop.f32.mrb[0].mxu0
        %2446 = vmatprep.mubr.bf16.mxu0 0
        %2447 = vmatmul.mubr.bf16.gmra.mrb[0].mxu0 %v1096
        %v2448 = vpop.f32.mrb[0].mxu0
        %v2449 = vadd.f32 %v2288, %v2448
        %v2450 = vpop.f32.mrb[0].mxu0
        %v2451 = vpop.f32.mrb[0].mxu0
        %v2452 = vadd.f32 %v2291, %v2451
        %v2453 = vpop.f32.mrb[0].mxu0
        %2454 = vmatprep.mubr.bf16.mxu0 0
        %2455 = vmatmul.mubr.bf16.gmra.mrb[0].mxu0 %v1099
        %v2456 = vpop.f32.mrb[0].mxu0
        %v2457 = vadd.f32 %v2296, %v2456
        %v2458 = vpop.f32.mrb[0].mxu0
        %v2459 = vpop.f32.mrb[0].mxu0
        %v2460 = vadd.f32 %v2299, %v2459
        %v2461 = vpop.f32.mrb[0].mxu0
        %2462 = vmatprep.mubr.bf16.mxu0 0
        %2463 = vmatmul.mubr.bf16.gmra.mrb[0].mxu0 %v1102
        %v2464 = vpop.f32.mrb[0].mxu0
        %v2465 = vadd.f32 %v2304, %v2464
        %v2466 = vpop.f32.mrb[0].mxu0
        %v2467 = vpop.f32.mrb[0].mxu0
        %v2468 = vadd.f32 %v2307, %v2467
        %v2469 = vpop.f32.mrb[0].mxu0
        %2470 = vmatprep.mubr.bf16.mxu0 0
        %2471 = vmatmul.mubr.bf16.gmra.mrb[0].mxu0 %v1105
        %v2472 = vpop.f32.mrb[0].mxu0
        %v2473 = vadd.f32 %v2312, %v2472
        %v2474 = vpop.f32.mrb[0].mxu0
        %v2475 = vpop.f32.mrb[0].mxu0
        %v2476 = vadd.f32 %v2315, %v2475
        %v2477 = vpop.f32.mrb[0].mxu0
        %2478 = vmatprep.mubr.bf16.mxu0 0
        %2479 = vmatmul.mubr.bf16.gmra.mrb[0].mxu0 %v1057
        %v2480 = vpop.f32.mrb[0].mxu0
        %v2481 = vadd.f32 %v2320, %v2480
        %v2482 = vpop.f32.mrb[0].mxu0
        %v2483 = vpop.f32.mrb[0].mxu0
        %v2484 = vadd.f32 %v2323, %v2483
        %v2485 = vpop.f32.mrb[0].mxu0
        %2486 = vdwg.mxu0
        %v2487 = vld [vmem:[%s6] sm:$0x1]
        %v2489 = vlaneseq
        %v2490 = vshrl.u32 %v2489, 7
        %v2491 = vsub.s32 0, %v2490
        %v2492 = vrot.slane %v2487, %v2491
        %v2494 = vmul.f32 %v2361, %v2492
        %v2495 = vmul.f32 %v2364, %v2492
        %v2496 = vmul.f32 %v2369, %v2492
        %v2497 = vmul.f32 %v2372, %v2492
        %v2498 = vmul.f32 %v2377, %v2492
        %v2499 = vmul.f32 %v2380, %v2492
        %v2500 = vmul.f32 %v2385, %v2492
        %v2501 = vmul.f32 %v2388, %v2492
        %v2502 = vmul.f32 %v2393, %v2492
        %v2503 = vmul.f32 %v2396, %v2492
        %v2504 = vmul.f32 %v2401, %v2492
        %v2505 = vmul.f32 %v2404, %v2492
        %v2506 = vmul.f32 %v2409, %v2492
        %v2507 = vmul.f32 %v2412, %v2492
        %v2508 = vmul.f32 %v2417, %v2492
        %v2509 = vmul.f32 %v2420, %v2492
        %v2510 = vmul.f32 %v2425, %v2492
        %v2511 = vmul.f32 %v2428, %v2492
        %v2512 = vmul.f32 %v2433, %v2492
        %v2513 = vmul.f32 %v2436, %v2492
        %v2514 = vmul.f32 %v2441, %v2492
        %v2515 = vmul.f32 %v2444, %v2492
        %v2516 = vmul.f32 %v2449, %v2492
        %v2517 = vmul.f32 %v2452, %v2492
        %v2518 = vmul.f32 %v2457, %v2492
        %v2519 = vmul.f32 %v2460, %v2492
        %v2520 = vmul.f32 %v2465, %v2492
        %v2521 = vmul.f32 %v2468, %v2492
        %v2522 = vmul.f32 %v2473, %v2492
        %v2523 = vmul.f32 %v2476, %v2492
        %v2524 = vmul.f32 %v2481, %v2492
        %v2525 = vmul.f32 %v2484, %v2492
        %v2526 = vld [vmem:[%s7] sm:$0x1]
        %v2528 = vlaneseq
        %v2529 = vshrl.u32 %v2528, 7
        %v2530 = vsub.s32 0, %v2529
        %v2531 = vrot.slane %v2526, %v2530
        %v2533 = vadd.f32 %v2494, %v2531
        %v2534 = vadd.f32 %v2495, %v2531
        %v2535 = vadd.f32 %v2496, %v2531
        %v2536 = vadd.f32 %v2497, %v2531
        %v2537 = vadd.f32 %v2498, %v2531
        %v2538 = vadd.f32 %v2499, %v2531
        %v2539 = vadd.f32 %v2500, %v2531
        %v2540 = vadd.f32 %v2501, %v2531
        %v2541 = vadd.f32 %v2502, %v2531
        %v2542 = vadd.f32 %v2503, %v2531
        %v2543 = vadd.f32 %v2504, %v2531
        %v2544 = vadd.f32 %v2505, %v2531
        %v2545 = vadd.f32 %v2506, %v2531
        %v2546 = vadd.f32 %v2507, %v2531
        %v2547 = vadd.f32 %v2508, %v2531
        %v2548 = vadd.f32 %v2509, %v2531
        %v2549 = vadd.f32 %v2510, %v2531
        %v2550 = vadd.f32 %v2511, %v2531
        %v2551 = vadd.f32 %v2512, %v2531
        %v2552 = vadd.f32 %v2513, %v2531
        %v2553 = vadd.f32 %v2514, %v2531
        %v2554 = vadd.f32 %v2515, %v2531
        %v2555 = vadd.f32 %v2516, %v2531
        %v2556 = vadd.f32 %v2517, %v2531
        %v2557 = vadd.f32 %v2518, %v2531
        %v2558 = vadd.f32 %v2519, %v2531
        %v2559 = vadd.f32 %v2520, %v2531
        %v2560 = vadd.f32 %v2521, %v2531
        %v2561 = vadd.f32 %v2522, %v2531
        %v2562 = vadd.f32 %v2523, %v2531
        %v2563 = vadd.f32 %v2524, %v2531
        %v2564 = vadd.f32 %v2525, %v2531
        %v2565 = vmax.f32 %v2533, 0.0
        %v2566 = vmax.f32 %v2534, 0.0
        %v2567 = vmax.f32 %v2535, 0.0
        %v2568 = vmax.f32 %v2536, 0.0
        %v2569 = vmax.f32 %v2537, 0.0
        %v2570 = vmax.f32 %v2538, 0.0
        %v2571 = vmax.f32 %v2539, 0.0
        %v2572 = vmax.f32 %v2540, 0.0
        %v2573 = vmax.f32 %v2541, 0.0
        %v2574 = vmax.f32 %v2542, 0.0
        %v2575 = vmax.f32 %v2543, 0.0
        %v2576 = vmax.f32 %v2544, 0.0
        %v2577 = vmax.f32 %v2545, 0.0
        %v2578 = vmax.f32 %v2546, 0.0
        %v2579 = vmax.f32 %v2547, 0.0
        %v2580 = vmax.f32 %v2548, 0.0
        %v2581 = vmax.f32 %v2549, 0.0
        %v2582 = vmax.f32 %v2550, 0.0
        %v2583 = vmax.f32 %v2551, 0.0
        %v2584 = vmax.f32 %v2552, 0.0
        %v2585 = vmax.f32 %v2553, 0.0
        %v2586 = vmax.f32 %v2554, 0.0
        %v2587 = vmax.f32 %v2555, 0.0
        %v2588 = vmax.f32 %v2556, 0.0
        %v2589 = vmax.f32 %v2557, 0.0
        %v2590 = vmax.f32 %v2558, 0.0
        %v2591 = vmax.f32 %v2559, 0.0
        %v2592 = vmax.f32 %v2560, 0.0
        %v2593 = vmax.f32 %v2561, 0.0
        %v2594 = vmax.f32 %v2562, 0.0
        %v2595 = vmax.f32 %v2563, 0.0
        %v2596 = vmax.f32 %v2564, 0.0
        %v2597 = vpack.c.bf16 %v2566, %v2565
        %v2598 = vpack.c.bf16 %v2568, %v2567
        %v2599 = vpack.c.bf16 %v2570, %v2569
        %v2600 = vpack.c.bf16 %v2572, %v2571
        %v2601 = vpack.c.bf16 %v2574, %v2573
        %v2602 = vpack.c.bf16 %v2576, %v2575
        %v2603 = vpack.c.bf16 %v2578, %v2577
        %v2604 = vpack.c.bf16 %v2580, %v2579
        %v2605 = vpack.c.bf16 %v2582, %v2581
        %v2606 = vpack.c.bf16 %v2584, %v2583
        %v2607 = vpack.c.bf16 %v2586, %v2585
        %v2608 = vpack.c.bf16 %v2588, %v2587
        %v2609 = vpack.c.bf16 %v2590, %v2589
        %v2610 = vpack.c.bf16 %v2592, %v2591
        %v2611 = vpack.c.bf16 %v2594, %v2593
        %v2612 = vpack.c.bf16 %v2596, %v2595
        %v2613 = vld [vmem:[#allocation8] sm:$0xf]
        %v2614 = vld [vmem:[#allocation8 + $0x4] sm:$0xf]
        %v2615 = vld [vmem:[#allocation8 + $0x8] sm:$0xf]
        %v2616 = vld [vmem:[#allocation8 + $0xc] sm:$0xf]
        %v2617 = vld [vmem:[#allocation8 + $0x10] sm:$0xf]
        %v2618 = vld [vmem:[#allocation8 + $0x14] sm:$0xf]
        %v2619 = vld [vmem:[#allocation8 + $0x18] sm:$0xf]
        %v2620 = vld [vmem:[#allocation8 + $0x1c] sm:$0xf]
        %v2621 = vld [vmem:[#allocation8 + $0x20] sm:$0xf]
        %v2622 = vld [vmem:[#allocation8 + $0x24] sm:$0xf]
        %v2623 = vld [vmem:[#allocation8 + $0x28] sm:$0xf]
        %v2624 = vld [vmem:[#allocation8 + $0x2c] sm:$0xf]
        %v2625 = vld [vmem:[#allocation8 + $0x30] sm:$0xf]
        %v2626 = vld [vmem:[#allocation8 + $0x34] sm:$0xf]
        %v2627 = vld [vmem:[#allocation8 + $0x38] sm:$0xf]
        %v2628 = vld [vmem:[#allocation8 + $0x3c] sm:$0xf]
        %v2645 = vunpack.c.l.b16 %v2613
        %v2646 = vunpack.c.l.b16 %v2614
        %v2647 = vunpack.c.l.b16 %v2615
        %v2648 = vunpack.c.l.b16 %v2616
        %v2649 = vunpack.c.l.b16 %v2617
        %v2650 = vunpack.c.l.b16 %v2618
        %v2651 = vunpack.c.l.b16 %v2619
        %v2652 = vunpack.c.l.b16 %v2620
        %v2653 = vunpack.c.l.b16 %v2621
        %v2654 = vunpack.c.l.b16 %v2622
        %v2655 = vunpack.c.l.b16 %v2623
        %v2656 = vunpack.c.l.b16 %v2624
        %v2657 = vunpack.c.l.b16 %v2625
        %v2658 = vunpack.c.l.b16 %v2626
        %v2659 = vunpack.c.l.b16 %v2627
        %v2660 = vunpack.c.l.b16 %v2628
        %v2661 = vpack.c.b16 %v2646, %v2645
        %v2662 = vpack.c.b16 %v2648, %v2647
        %v2663 = vpack.c.b16 %v2650, %v2649
        %v2664 = vpack.c.b16 %v2652, %v2651
        %v2665 = vpack.c.b16 %v2654, %v2653
        %v2666 = vpack.c.b16 %v2656, %v2655
        %v2667 = vpack.c.b16 %v2658, %v2657
        %v2668 = vpack.c.b16 %v2660, %v2659
        %2677 = vmatprep.subr.bf16.mxu0 0
        %2678 = vmatpush1.bf16.msra.mxu0 %v2661
        %2679 = vmatprep.subr.bf16.mxu0 0
        %2680 = vmatpush1.bf16.msra.mxu0 %v2662
        %2681 = vmatprep.subr.bf16.mxu0 0
        %2682 = vmatpush1.bf16.msra.mxu0 %v2663
        %2683 = vmatprep.subr.bf16.mxu0 0
        %2684 = vmatpush1.bf16.msra.mxu0 %v2664
        %2685 = vmatprep.subr.bf16.mxu0 0
        %2686 = vmatpush1.bf16.msra.mxu0 %v2665
        %2687 = vmatprep.subr.bf16.mxu0 0
        %2688 = vmatpush1.bf16.msra.mxu0 %v2666
        %2689 = vmatprep.subr.bf16.mxu0 0
        %2690 = vmatpush1.bf16.msra.mxu0 %v2667
        %2691 = vmatprep.subr.bf16.mxu0 0
        %2692 = vmatpush1.bf16.msra.mxu0 %v2668
        %2693 = vmatprep.subr.bf16.mxu0 0
        %2694 = vmatpush1.bf16.msra.mxu0 0
        %2695 = vmatprep.subr.bf16.mxu0 0
        %2696 = vmatpush1.bf16.msra.mxu0 0
        %2697 = vmatprep.subr.bf16.mxu0 0
        %2698 = vmatpush1.bf16.msra.mxu0 0
        %2699 = vmatprep.subr.bf16.mxu0 0
        %2700 = vmatpush1.bf16.msra.mxu0 0
        %2701 = vmatprep.subr.bf16.mxu0 0
        %2702 = vmatpush1.bf16.msra.mxu0 0
        %2703 = vmatprep.subr.bf16.mxu0 0
        %2704 = vmatpush1.bf16.msra.mxu0 0
        %2705 = vmatprep.subr.bf16.mxu0 0
        %2706 = vmatpush1.bf16.msra.mxu0 0
        %2707 = vmatprep.subr.bf16.mxu0 0
        %2708 = vmatpush1.bf16.msra.mxu0 0
        %2709 = vmatprep.mubr.bf16.mxu0 0
        %2710 = vmatmul.mubr.bf16.gmra.mrb[0].mxu0 %v2597
        %v2711 = vpop.f32.mrb[0].mxu0
        %v2712 = vadd.f32 0.0, %v2711
        %v2713 = vpop.f32.mrb[0].mxu0
        %v2714 = vpop.f32.mrb[0].mxu0
        %v2715 = vadd.f32 0.0, %v2714
        %v2716 = vpop.f32.mrb[0].mxu0
        %2717 = vmatprep.mubr.bf16.mxu0 0
        %2718 = vmatmul.mubr.bf16.gmra.mrb[0].mxu0 %v2598
        %v2719 = vpop.f32.mrb[0].mxu0
        %v2720 = vadd.f32 0.0, %v2719
        %v2721 = vpop.f32.mrb[0].mxu0
        %v2722 = vpop.f32.mrb[0].mxu0
        %v2723 = vadd.f32 0.0, %v2722
        %v2724 = vpop.f32.mrb[0].mxu0
        %2725 = vmatprep.mubr.bf16.mxu0 0
        %2726 = vmatmul.mubr.bf16.gmra.mrb[0].mxu0 %v2599
        %v2727 = vpop.f32.mrb[0].mxu0
        %v2728 = vadd.f32 0.0, %v2727
        %v2729 = vpop.f32.mrb[0].mxu0
        %v2730 = vpop.f32.mrb[0].mxu0
        %v2731 = vadd.f32 0.0, %v2730
        %v2732 = vpop.f32.mrb[0].mxu0
        %2733 = vmatprep.mubr.bf16.mxu0 0
        %2734 = vmatmul.mubr.bf16.gmra.mrb[0].mxu0 %v2600
        %v2735 = vpop.f32.mrb[0].mxu0
        %v2736 = vadd.f32 0.0, %v2735
        %v2737 = vpop.f32.mrb[0].mxu0
        %v2738 = vpop.f32.mrb[0].mxu0
        %v2739 = vadd.f32 0.0, %v2738
        %v2740 = vpop.f32.mrb[0].mxu0
        %2741 = vmatprep.mubr.bf16.mxu0 0
        %2742 = vmatmul.mubr.bf16.gmra.mrb[0].mxu0 %v2601
        %v2743 = vpop.f32.mrb[0].mxu0
        %v2744 = vadd.f32 0.0, %v2743
        %v2745 = vpop.f32.mrb[0].mxu0
        %v2746 = vpop.f32.mrb[0].mxu0
        %v2747 = vadd.f32 0.0, %v2746
        %v2748 = vpop.f32.mrb[0].mxu0
        %2749 = vmatprep.mubr.bf16.mxu0 0
        %2750 = vmatmul.mubr.bf16.gmra.mrb[0].mxu0 %v2602
        %v2751 = vpop.f32.mrb[0].mxu0
        %v2752 = vadd.f32 0.0, %v2751
        %v2753 = vpop.f32.mrb[0].mxu0
        %v2754 = vpop.f32.mrb[0].mxu0
        %v2755 = vadd.f32 0.0, %v2754
        %v2756 = vpop.f32.mrb[0].mxu0
        %2757 = vmatprep.mubr.bf16.mxu0 0
        %2758 = vmatmul.mubr.bf16.gmra.mrb[0].mxu0 %v2603
        %v2759 = vpop.f32.mrb[0].mxu0
        %v2760 = vadd.f32 0.0, %v2759
        %v2761 = vpop.f32.mrb[0].mxu0
        %v2762 = vpop.f32.mrb[0].mxu0
        %v2763 = vadd.f32 0.0, %v2762
        %v2764 = vpop.f32.mrb[0].mxu0
        %2765 = vmatprep.mubr.bf16.mxu0 0
        %2766 = vmatmul.mubr.bf16.gmra.mrb[0].mxu0 %v2604
        %v2767 = vpop.f32.mrb[0].mxu0
        %v2768 = vadd.f32 0.0, %v2767
        %v2769 = vpop.f32.mrb[0].mxu0
        %v2770 = vpop.f32.mrb[0].mxu0
        %v2771 = vadd.f32 0.0, %v2770
        %v2772 = vpop.f32.mrb[0].mxu0
        %2773 = vmatprep.mubr.bf16.mxu0 0
        %2774 = vmatmul.mubr.bf16.gmra.mrb[0].mxu0 %v2605
        %v2775 = vpop.f32.mrb[0].mxu0
        %v2776 = vadd.f32 0.0, %v2775
        %v2777 = vpop.f32.mrb[0].mxu0
        %v2778 = vpop.f32.mrb[0].mxu0
        %v2779 = vadd.f32 0.0, %v2778
        %v2780 = vpop.f32.mrb[0].mxu0
        %2781 = vmatprep.mubr.bf16.mxu0 0
        %2782 = vmatmul.mubr.bf16.gmra.mrb[0].mxu0 %v2606
        %v2783 = vpop.f32.mrb[0].mxu0
        %v2784 = vadd.f32 0.0, %v2783
        %v2785 = vpop.f32.mrb[0].mxu0
        %v2786 = vpop.f32.mrb[0].mxu0
        %v2787 = vadd.f32 0.0, %v2786
        %v2788 = vpop.f32.mrb[0].mxu0
        %2789 = vmatprep.mubr.bf16.mxu0 0
        %2790 = vmatmul.mubr.bf16.gmra.mrb[0].mxu0 %v2607
        %v2791 = vpop.f32.mrb[0].mxu0
        %v2792 = vadd.f32 0.0, %v2791
        %v2793 = vpop.f32.mrb[0].mxu0
        %v2794 = vpop.f32.mrb[0].mxu0
        %v2795 = vadd.f32 0.0, %v2794
        %v2796 = vpop.f32.mrb[0].mxu0
        %2797 = vmatprep.mubr.bf16.mxu0 0
        %2798 = vmatmul.mubr.bf16.gmra.mrb[0].mxu0 %v2608
        %v2799 = vpop.f32.mrb[0].mxu0
        %v2800 = vadd.f32 0.0, %v2799
        %v2801 = vpop.f32.mrb[0].mxu0
        %v2802 = vpop.f32.mrb[0].mxu0
        %v2803 = vadd.f32 0.0, %v2802
        %v2804 = vpop.f32.mrb[0].mxu0
        %2805 = vmatprep.mubr.bf16.mxu0 0
        %2806 = vmatmul.mubr.bf16.gmra.mrb[0].mxu0 %v2609
        %v2807 = vpop.f32.mrb[0].mxu0
        %v2808 = vadd.f32 0.0, %v2807
        %v2809 = vpop.f32.mrb[0].mxu0
        %v2810 = vpop.f32.mrb[0].mxu0
        %v2811 = vadd.f32 0.0, %v2810
        %v2812 = vpop.f32.mrb[0].mxu0
        %2813 = vmatprep.mubr.bf16.mxu0 0
        %2814 = vmatmul.mubr.bf16.gmra.mrb[0].mxu0 %v2610
        %v2815 = vpop.f32.mrb[0].mxu0
        %v2816 = vadd.f32 0.0, %v2815
        %v2817 = vpop.f32.mrb[0].mxu0
        %v2818 = vpop.f32.mrb[0].mxu0
        %v2819 = vadd.f32 0.0, %v2818
        %v2820 = vpop.f32.mrb[0].mxu0
        %2821 = vmatprep.mubr.bf16.mxu0 0
        %2822 = vmatmul.mubr.bf16.gmra.mrb[0].mxu0 %v2611
        %v2823 = vpop.f32.mrb[0].mxu0
        %v2824 = vadd.f32 0.0, %v2823
        %v2825 = vpop.f32.mrb[0].mxu0
        %v2826 = vpop.f32.mrb[0].mxu0
        %v2827 = vadd.f32 0.0, %v2826
        %v2828 = vpop.f32.mrb[0].mxu0
        %2829 = vmatprep.mubr.bf16.mxu0 0
        %2830 = vmatmul.mubr.bf16.gmra.mrb[0].mxu0 %v2612
        %v2831 = vpop.f32.mrb[0].mxu0
        %v2832 = vadd.f32 0.0, %v2831
        %v2833 = vpop.f32.mrb[0].mxu0
        %v2834 = vpop.f32.mrb[0].mxu0
        %v2835 = vadd.f32 0.0, %v2834
        %v2836 = vpop.f32.mrb[0].mxu0
        %2837 = vdwg.mxu0
        %v2838 = vld [vmem:[%s8] sm:$0x1]
        %v2840 = vlaneseq
        %v2841 = vshrl.u32 %v2840, 7
        %v2842 = vsub.s32 0, %v2841
        %v2843 = vrot.slane %v2838, %v2842
        %v2845 = vmul.f32 %v2712, %v2843
        %v2846 = vmul.f32 %v2715, %v2843
        %v2847 = vmul.f32 %v2720, %v2843
        %v2848 = vmul.f32 %v2723, %v2843
        %v2849 = vmul.f32 %v2728, %v2843
        %v2850 = vmul.f32 %v2731, %v2843
        %v2851 = vmul.f32 %v2736, %v2843
        %v2852 = vmul.f32 %v2739, %v2843
        %v2853 = vmul.f32 %v2744, %v2843
        %v2854 = vmul.f32 %v2747, %v2843
        %v2855 = vmul.f32 %v2752, %v2843
        %v2856 = vmul.f32 %v2755, %v2843
        %v2857 = vmul.f32 %v2760, %v2843
        %v2858 = vmul.f32 %v2763, %v2843
        %v2859 = vmul.f32 %v2768, %v2843
        %v2860 = vmul.f32 %v2771, %v2843
        %v2861 = vmul.f32 %v2776, %v2843
        %v2862 = vmul.f32 %v2779, %v2843
        %v2863 = vmul.f32 %v2784, %v2843
        %v2864 = vmul.f32 %v2787, %v2843
        %v2865 = vmul.f32 %v2792, %v2843
        %v2866 = vmul.f32 %v2795, %v2843
        %v2867 = vmul.f32 %v2800, %v2843
        %v2868 = vmul.f32 %v2803, %v2843
        %v2869 = vmul.f32 %v2808, %v2843
        %v2870 = vmul.f32 %v2811, %v2843
        %v2871 = vmul.f32 %v2816, %v2843
        %v2872 = vmul.f32 %v2819, %v2843
        %v2873 = vmul.f32 %v2824, %v2843
        %v2874 = vmul.f32 %v2827, %v2843
        %v2875 = vmul.f32 %v2832, %v2843
        %v2876 = vmul.f32 %v2835, %v2843
        %v2877 = vld [vmem:[%s9] sm:$0x1]
        %v2879 = vlaneseq
        %v2880 = vshrl.u32 %v2879, 7
        %v2881 = vsub.s32 0, %v2880
        %v2882 = vrot.slane %v2877, %v2881
        %v2884 = vadd.f32 %v2845, %v2882
        %v2885 = vadd.f32 %v2846, %v2882
        %v2886 = vadd.f32 %v2847, %v2882
        %v2887 = vadd.f32 %v2848, %v2882
        %v2888 = vadd.f32 %v2849, %v2882
        %v2889 = vadd.f32 %v2850, %v2882
        %v2890 = vadd.f32 %v2851, %v2882
        %v2891 = vadd.f32 %v2852, %v2882
        %v2892 = vadd.f32 %v2853, %v2882
        %v2893 = vadd.f32 %v2854, %v2882
        %v2894 = vadd.f32 %v2855, %v2882
        %v2895 = vadd.f32 %v2856, %v2882
        %v2896 = vadd.f32 %v2857, %v2882
        %v2897 = vadd.f32 %v2858, %v2882
        %v2898 = vadd.f32 %v2859, %v2882
        %v2899 = vadd.f32 %v2860, %v2882
        %v2900 = vadd.f32 %v2861, %v2882
        %v2901 = vadd.f32 %v2862, %v2882
        %v2902 = vadd.f32 %v2863, %v2882
        %v2903 = vadd.f32 %v2864, %v2882
        %v2904 = vadd.f32 %v2865, %v2882
        %v2905 = vadd.f32 %v2866, %v2882
        %v2906 = vadd.f32 %v2867, %v2882
        %v2907 = vadd.f32 %v2868, %v2882
        %v2908 = vadd.f32 %v2869, %v2882
        %v2909 = vadd.f32 %v2870, %v2882
        %v2910 = vadd.f32 %v2871, %v2882
        %v2911 = vadd.f32 %v2872, %v2882
        %v2912 = vadd.f32 %v2873, %v2882
        %v2913 = vadd.f32 %v2874, %v2882
        %v2914 = vadd.f32 %v2875, %v2882
        %v2915 = vadd.f32 %v2876, %v2882
        %v2916 = vadd.f32 %v2884, %v423
        %v2917 = vadd.f32 %v2885, %v424
        %v2918 = vadd.f32 %v2886, %v425
        %v2919 = vadd.f32 %v2887, %v426
        %v2920 = vadd.f32 %v2888, %v427
        %v2921 = vadd.f32 %v2889, %v428
        %v2922 = vadd.f32 %v2890, %v429
        %v2923 = vadd.f32 %v2891, %v430
        %v2924 = vadd.f32 %v2892, %v431
        %v2925 = vadd.f32 %v2893, %v432
        %v2926 = vadd.f32 %v2894, %v433
        %v2927 = vadd.f32 %v2895, %v434
        %v2928 = vadd.f32 %v2896, %v435
        %v2929 = vadd.f32 %v2897, %v436
        %v2930 = vadd.f32 %v2898, %v437
        %v2931 = vadd.f32 %v2899, %v438
        %v2932 = vadd.f32 %v2900, %v439
        %v2933 = vadd.f32 %v2901, %v440
        %v2934 = vadd.f32 %v2902, %v441
        %v2935 = vadd.f32 %v2903, %v442
        %v2936 = vadd.f32 %v2904, %v443
        %v2937 = vadd.f32 %v2905, %v444
        %v2938 = vadd.f32 %v2906, %v445
        %v2939 = vadd.f32 %v2907, %v446
        %v2940 = vadd.f32 %v2908, %v447
        %v2941 = vadd.f32 %v2909, %v448
        %v2942 = vadd.f32 %v2910, %v449
        %v2943 = vadd.f32 %v2911, %v450
        %v2944 = vadd.f32 %v2912, %v451
        %v2945 = vadd.f32 %v2913, %v452
        %v2946 = vadd.f32 %v2914, %v453
        %v2947 = vadd.f32 %v2915, %v454
        %v2948 = vmax.f32 %v2916, 0.0
        %v2949 = vmax.f32 %v2917, 0.0
        %v2950 = vmax.f32 %v2918, 0.0
        %v2951 = vmax.f32 %v2919, 0.0
        %v2952 = vmax.f32 %v2920, 0.0
        %v2953 = vmax.f32 %v2921, 0.0
        %v2954 = vmax.f32 %v2922, 0.0
        %v2955 = vmax.f32 %v2923, 0.0
        %v2956 = vmax.f32 %v2924, 0.0
        %v2957 = vmax.f32 %v2925, 0.0
        %v2958 = vmax.f32 %v2926, 0.0
        %v2959 = vmax.f32 %v2927, 0.0
        %v2960 = vmax.f32 %v2928, 0.0
        %v2961 = vmax.f32 %v2929, 0.0
        %v2962 = vmax.f32 %v2930, 0.0
        %v2963 = vmax.f32 %v2931, 0.0
        %v2964 = vmax.f32 %v2932, 0.0
        %v2965 = vmax.f32 %v2933, 0.0
        %v2966 = vmax.f32 %v2934, 0.0
        %v2967 = vmax.f32 %v2935, 0.0
        %v2968 = vmax.f32 %v2936, 0.0
        %v2969 = vmax.f32 %v2937, 0.0
        %v2970 = vmax.f32 %v2938, 0.0
        %v2971 = vmax.f32 %v2939, 0.0
        %v2972 = vmax.f32 %v2940, 0.0
        %v2973 = vmax.f32 %v2941, 0.0
        %v2974 = vmax.f32 %v2942, 0.0
        %v2975 = vmax.f32 %v2943, 0.0
        %v2976 = vmax.f32 %v2944, 0.0
        %v2977 = vmax.f32 %v2945, 0.0
        %v2978 = vmax.f32 %v2946, 0.0
        %v2979 = vmax.f32 %v2947, 0.0
        %2980 = vst [vmem:[%s421] sm:$0xff] %v2948
        %2981 = vst [vmem:[%s421 + $0x8] sm:$0xff] %v2949
        %2982 = vst [vmem:[%s421 + $0x10] sm:$0xff] %v2950
        %2983 = vst [vmem:[%s421 + $0x18] sm:$0xff] %v2951
        %2984 = vst [vmem:[%s421 + $0x20] sm:$0xff] %v2952
        %2985 = vst [vmem:[%s421 + $0x28] sm:$0xff] %v2953
        %2986 = vst [vmem:[%s421 + $0x30] sm:$0xff] %v2954
        %2987 = vst [vmem:[%s421 + $0x38] sm:$0xff] %v2955
        %2988 = vst [vmem:[%s421 + $0x40] sm:$0xff] %v2956
        %2989 = vst [vmem:[%s421 + $0x48] sm:$0xff] %v2957
        %2990 = vst [vmem:[%s421 + $0x50] sm:$0xff] %v2958
        %2991 = vst [vmem:[%s421 + $0x58] sm:$0xff] %v2959
        %2992 = vst [vmem:[%s421 + $0x60] sm:$0xff] %v2960
        %2993 = vst [vmem:[%s421 + $0x68] sm:$0xff] %v2961
        %2994 = vst [vmem:[%s421 + $0x70] sm:$0xff] %v2962
        %2995 = vst [vmem:[%s421 + $0x78] sm:$0xff] %v2963
        %2996 = vst [vmem:[%s421 + $0x80] sm:$0xff] %v2964
        %2997 = vst [vmem:[%s421 + $0x88] sm:$0xff] %v2965
        %2998 = vst [vmem:[%s421 + $0x90] sm:$0xff] %v2966
        %2999 = vst [vmem:[%s421 + $0x98] sm:$0xff] %v2967
        %3000 = vst [vmem:[%s421 + $0xa0] sm:$0xff] %v2968
        %3001 = vst [vmem:[%s421 + $0xa8] sm:$0xff] %v2969
        %3002 = vst [vmem:[%s421 + $0xb0] sm:$0xff] %v2970
        %3003 = vst [vmem:[%s421 + $0xb8] sm:$0xff] %v2971
        %3004 = vst [vmem:[%s421 + $0xc0] sm:$0xff] %v2972
        %3005 = vst [vmem:[%s421 + $0xc8] sm:$0xff] %v2973
        %3006 = vst [vmem:[%s421 + $0xd0] sm:$0xff] %v2974
        %3007 = vst [vmem:[%s421 + $0xd8] sm:$0xff] %v2975
        %3008 = vst [vmem:[%s421 + $0xe0] sm:$0xff] %v2976
        %3009 = vst [vmem:[%s421 + $0xe8] sm:$0xff] %v2977
        %3010 = vst [vmem:[%s421 + $0xf0] sm:$0xff] %v2978
        %3011 = vst [vmem:[%s421 + $0xf8] sm:$0xff] %v2979
        %s3012 = sand.u32 %s252, 1
        %s3013 = scalar_lea.sflag [#allocation4], %s3012
        %s3014 = sand.u32 %s252, 1
        %s3015 = smul.addr %s3014, 256
        %s3016 = scalar_lea.vmem [#allocation10], %s3015
        // Predicated region
        $region77: #{tpu_custom_call.1} parent=59 // pred_check
          %p3017 = pneg %p262
        $region78: #{tpu_custom_call.1} parent=59 // pred_check_branch
          %3019 = sbr.rel (%p3017) target = $region80
        $region79: #{tpu_custom_call.1} parent=59 // pred_region
          %s3021 = ssub.s32 4096, 4096
          %3022 = vsyncadd %s3013, %s3021
          %s3023 = smul.addr %s29, 32
          %s3024 = smul.addr %s3023, 128
          %s3025 = scalar_lea.hbm %s10, %s3024
          %s3026 = sshll.u32 %s3016, 4
          %s3027 = int_to_ptr.vmem [resolvable:$true] %s3026
          %3032 = dma.vmem_to_hbm [thread:$0]  %s3027, 4096, %s3025, %s3013, 128, 128, 8
        $region80: #{tpu_custom_call.1} parent=59 // pred_fallthru
          _
      $region60: #{tpu_custom_call.1} parent=5 // pred_fallthru
        _
      %p3033 = scmp.le.s32.totalorder 2, %s24
      // Predicated region
      $region81: #{tpu_custom_call.1} parent=5 // pred_check
        %p3034 = pneg %p3033
      $region82: #{tpu_custom_call.1} parent=5 // pred_check_branch
        %3036 = sbr.rel (%p3034) target = $region84
      $region83: #{tpu_custom_call.1} parent=5 // pred_region
        %s3037 = ssub.s32 %s24, 2
        // Predicated region
        $region85: #{tpu_custom_call.1} parent=83 // pred_check
          %p3038 = pneg %p268
        $region86: #{tpu_custom_call.1} parent=83 // pred_check_branch
          %3040 = sbr.rel (%p3038) target = $region88
        $region87: #{tpu_custom_call.1} parent=83 // pred_region
          %s3041 = sand.u32 %s253, 1
          %s3042 = scalar_lea.sflag [#allocation4], %s3041
          %s3043 = sand.u32 %s253, 1
          %s3044 = smul.addr %s3043, 256
          %s3045 = scalar_lea.vmem [#allocation10], %s3044
          %3046 = dma.done %s3042, 4096
        $region88: #{tpu_custom_call.1} parent=83 // pred_fallthru
          _
      $region84: #{tpu_custom_call.1} parent=5 // pred_fallthru
        _
    $region6: #{tpu_custom_call.1} parent=1 // loop_footer
      %s28 = sadd.s32 1, %s24
    $region7: #{tpu_custom_call.1} parent=1 // loop_footer_branch
      %23 = sbr.rel target = $region3
    $region8: #{tpu_custom_call.1} parent=1 // loop_exit
      _
    %3047 = vsyncpa [#allocation3], 1
    %s3048 = scalar_lea.sflag [#allocation3], 1
    %3049 = vsyncpa %s3048, 1
    %3050 = vsyncpa [#allocation6], 1
    %3051 = vsyncpa [#allocation9], 1
    %3052 = vsyncpa [#allocation4], 1
    %s3053 = scalar_lea.sflag [#allocation4], 1
    %3054 = vsyncpa %s3053, 1

</llo_original>
